<compile_context>
chip_gen: v7x
topology: tpu7x:2x2x1
jax: 0.10.0
libtpu: 0.0.40
codegen_flags: <defaults>
</compile_context>

<pallas_src>
import functools

import jax
import jax.numpy as jnp
from jax import lax
from jax.experimental import pallas as pl
from jax.experimental.pallas import tpu as pltpu

_TM_MAX = 512                       # row tile (multiple of 256: MXU friendly on v6e/v7x)
_VMEM_LIMIT_BYTES = 48 * 1024 * 1024  # safe on v5e/v6e (128 MiB) and v7x (64 MiB)


def _mosaic_params():
    return pltpu.CompilerParams(
        dimension_semantics=("parallel",),
        vmem_limit_bytes=_VMEM_LIMIT_BYTES,
    )


def _row_tile(m):
    # Full-array block for small layers (always legal), 512-row tile otherwise.
    return m if m < _TM_MAX else _TM_MAX


# ---------------------------------------------------------------------------
# Pallas kernels (all: bf16 operands -> MXU, f32 accumulate, folded-BN epilogue)
# ---------------------------------------------------------------------------
def _mm_bn_kernel(x_ref, w_ref, s_ref, b_ref, o_ref, *, relu):
    y = jnp.dot(x_ref[...], w_ref[...], preferred_element_type=jnp.float32)
    y = y * s_ref[...] + b_ref[...]
    if relu:
        y = jnp.maximum(y, 0.0)
    o_ref[...] = y.astype(o_ref.dtype)


def _mm_bn_add_relu_kernel(x_ref, w_ref, s_ref, b_ref, r_ref, o_ref):
    # conv3 + BN3 + identity residual + final ReLU, fused.
    y = jnp.dot(x_ref[...], w_ref[...], preferred_element_type=jnp.float32)
    y = y * s_ref[...] + b_ref[...] + r_ref[...].astype(jnp.float32)
    o_ref[...] = jnp.maximum(y, 0.0).astype(o_ref.dtype)


def _mm2_bn_relu_kernel(x_ref, w_ref, s_ref, b_ref,
                        xs_ref, ws_ref, ss_ref, bs_ref, o_ref):
    # conv3 + BN3 + (projection-shortcut conv + BN) + final ReLU, fused.
    y = jnp.dot(x_ref[...], w_ref[...], preferred_element_type=jnp.float32)
    y = y * s_ref[...] + b_ref[...]
    ys = jnp.dot(xs_ref[...], ws_ref[...], preferred_element_type=jnp.float32)
    y = y + ys * ss_ref[...] + bs_ref[...]
    o_ref[...] = jnp.maximum(y, 0.0).astype(o_ref.dtype)


def _conv3x3_bn_relu_kernel(x_ref, w_ref, s_ref, b_ref, o_ref,
                            *, stride, ho, wo, wo_pad):
    # x_ref: (1, s, s, Hps, Wps, C) parity (space-to-depth) view of the padded
    #        activation for one sample (bf16).
    # w_ref: (9, C, Cout) bf16 (taps flattened, kh*3+kw)
    # o_ref: (1, Ho, Wo, Cout) bf16
    c = x_ref.shape[-1]
    cout = w_ref.shape[-1]
    acc = jnp.zeros((ho * wo_pad, cout), jnp.float32)
    for kh in range(3):
        for kw in range(3):
            ph, oh = kh % stride, kh // stride
            pw, ow = kw % stride, kw // stride
            # static window slice; wo_pad is a multiple of 16 so the
            # (ho, wo_pad, C) -> (ho*wo_pad, C) collapse is tile-exact for bf16
            win = x_ref[0, ph, pw, oh:oh + ho, ow:ow + wo_pad, :]
            acc = acc + jnp.dot(win.reshape(ho * wo_pad, c),
                                w_ref[kh * 3 + kw],
                                preferred_element_type=jnp.float32)
    y = acc * s_ref[...] + b_ref[...]
    y = jnp.maximum(y, 0.0)
    y = y.reshape(ho, wo_pad, cout)[:, :wo, :]     # drop lane-padding columns
    o_ref[...] = y.reshape(1, ho, wo, cout).astype(o_ref.dtype)


# ---------------------------------------------------------------------------
# pallas_call wrappers
# ---------------------------------------------------------------------------
def matmul_bn(x2d, w, scale, bias, *, relu, out_dtype):
    m, k = x2d.shape
    n = w.shape[1]
    tm = _row_tile(m)
    return pl.pallas_call(
        functools.partial(_mm_bn_kernel, relu=relu),
        out_shape=jax.ShapeDtypeStruct((m, n), out_dtype),
        grid_spec=pltpu.PrefetchScalarGridSpec(
            num_scalar_prefetch=0,
            grid=(pl.cdiv(m, tm),),
            in_specs=[
                pl.BlockSpec((tm, k), lambda i: (i, 0)),   # activations (row-tiled)
                pl.BlockSpec((k, n), lambda i: (0, 0)),    # weight (resident)
                pl.BlockSpec((1, n), lambda i: (0, 0)),    # folded BN scale
                pl.BlockSpec((1, n), lambda i: (0, 0)),    # folded BN bias
            ],
            out_specs=pl.BlockSpec((tm, n), lambda i: (i, 0)),
        ),
        compiler_params=_mosaic_params(),
    )(x2d, w, scale, bias)


def matmul_bn_add_relu(x2d, w, scale, bias, resid, *, out_dtype):
    m, k = x2d.shape
    n = w.shape[1]
    tm = _row_tile(m)
    return pl.pallas_call(
        _mm_bn_add_relu_kernel,
        out_shape=jax.ShapeDtypeStruct((m, n), out_dtype),
        grid_spec=pltpu.PrefetchScalarGridSpec(
            num_scalar_prefetch=0,
            grid=(pl.cdiv(m, tm),),
            in_specs=[
                pl.BlockSpec((tm, k), lambda i: (i, 0)),
                pl.BlockSpec((k, n), lambda i: (0, 0)),
                pl.BlockSpec((1, n), lambda i: (0, 0)),
                pl.BlockSpec((1, n), lambda i: (0, 0)),
                pl.BlockSpec((tm, n), lambda i: (i, 0)),   # identity residual
            ],
            out_specs=pl.BlockSpec((tm, n), lambda i: (i, 0)),
        ),
        compiler_params=_mosaic_params(),
    )(x2d, w, scale, bias, resid)


def matmul2_bn_relu(x2d, w, scale, bias, xs2d, ws, ss, bs, *, out_dtype):
    m, k = x2d.shape
    n = w.shape[1]
    ks = ws.shape[0]
    tm = _row_tile(m)
    return pl.pallas_call(
        _mm2_bn_relu_kernel,
        out_shape=jax.ShapeDtypeStruct((m, n), out_dtype),
        grid_spec=pltpu.PrefetchScalarGridSpec(
            num_scalar_prefetch=0,
            grid=(pl.cdiv(m, tm),),
            in_specs=[
                pl.BlockSpec((tm, k), lambda i: (i, 0)),   # a2
                pl.BlockSpec((k, n), lambda i: (0, 0)),    # w3
                pl.BlockSpec((1, n), lambda i: (0, 0)),
                pl.BlockSpec((1, n), lambda i: (0, 0)),
                pl.BlockSpec((tm, ks), lambda i: (i, 0)),  # strided x (shortcut)
                pl.BlockSpec((ks, n), lambda i: (0, 0)),   # ws
                pl.BlockSpec((1, n), lambda i: (0, 0)),
                pl.BlockSpec((1, n), lambda i: (0, 0)),
            ],
            out_specs=pl.BlockSpec((tm, n), lambda i: (i, 0)),
        ),
        compiler_params=_mosaic_params(),
    )(x2d, w, scale, bias, xs2d, ws, ss, bs)


def _prep_conv2_input(a1, stride):
    """Zero-pad (conv pad=1) and build the stride-parity (space-to-depth) view
    so the 3x3/stride conv reduces to contiguous static slices in-kernel."""
    n, h, w, c = a1.shape
    s = stride
    ho = (h + 2 - 3) // s + 1
    wo = (w + 2 - 3) // s + 1
    hp = ((h + 2 + s - 1) // s) * s
    wp = ((w + 2 + s - 1) // s) * s
    hps, wps = hp // s, wp // s
    # in-kernel window width: multiple of 16 so bf16 reshapes are tile-exact
    wo_pad = ((wo + 15) // 16) * 16
    oh_max, ow_max = 2 // s, 2 // s
    hps_f = max(hps, oh_max + ho)
    wps_f = max(wps, ow_max + wo_pad)
    xp = jnp.pad(a1, ((0, 0), (1, hp - h - 1), (1, wp - w - 1), (0, 0)))
    xr = jnp.transpose(xp.reshape(n, hps, s, wps, s, c), (0, 2, 4, 1, 3, 5))
    if hps_f > hps or wps_f > wps:
        xr = jnp.pad(xr, ((0, 0), (0, 0), (0, 0),
                          (0, hps_f - hps), (0, wps_f - wps), (0, 0)))
    return xr, ho, wo, wo_pad


def conv3x3_bn_relu(a1, w2, scale, bias, stride):
    """3x3 conv (pad=1, stride) + BN + ReLU, one sample per grid step,
    9-tap accumulation in-kernel (no HBM im2col)."""
    n, h, w, c = a1.shape
    cout = w2.shape[-1]
    xr, ho, wo, wo_pad = _prep_conv2_input(a1, stride)
    s = stride
    hps_f, wps_f = xr.shape[3], xr.shape[4]
    kernel = functools.partial(_conv3x3_bn_relu_kernel,
                               stride=s, ho=ho, wo=wo, wo_pad=wo_pad)
    out = pl.pallas_call(
        kernel,
        out_shape=jax.ShapeDtypeStruct((n, ho, wo, cout), jnp.bfloat16),
        grid_spec=pltpu.PrefetchScalarGridSpec(
            num_scalar_prefetch=0,
            grid=(n,),
            in_specs=[
                pl.BlockSpec((1, s, s, hps_f, wps_f, c),
                             lambda i: (i, 0, 0, 0, 0, 0)),
                pl.BlockSpec((9, c, cout), lambda i: (0, 0, 0)),
                pl.BlockSpec((1, cout), lambda i: (0, 0)),
                pl.BlockSpec((1, cout), lambda i: (0, 0)),
            ],
            out_specs=pl.BlockSpec((1, ho, wo, cout), lambda i: (i, 0, 0, 0)),
        ),
        compiler_params=_mosaic_params(),
    )(xr, w2, scale, bias)
    return out, ho, wo


# ---------------------------------------------------------------------------
# Parameters: init (PyTorch-layout) + one-time folding/casting for the hot path
# ---------------------------------------------------------------------------
def _bn_fold(bn, eps=1e-5):
    gamma, beta, mean, var = bn
    scale = gamma / jnp.sqrt(var + eps)
    bias = beta - mean * scale
    return (scale.astype(jnp.float32).reshape(1, -1),
            bias.astype(jnp.float32).reshape(1, -1))


def init_bottleneck_params(key, in_channels, out_channels, stride):
    expansion = 4
    ks = jax.random.split(key, 8)

    def conv_w(k, cout, cin, kh, kw):
        fan_in = cin * kh * kw
        return jax.random.normal(k, (cout, cin, kh, kw), jnp.float32) / jnp.sqrt(fan_in)

    def bn_p(k, c):
        k1, k2, k3, k4 = jax.random.split(k, 4)
        gamma = 1.0 + 0.1 * jax.random.normal(k1, (c,), jnp.float32)
        beta = 0.1 * jax.random.normal(k2, (c,), jnp.float32)
        mean = 0.1 * jax.random.normal(k3, (c,), jnp.float32)
        var = jax.random.uniform(k4, (c,), jnp.float32, minval=0.5, maxval=1.5)
        return (gamma, beta, mean, var)

    p = {
        "w1": conv_w(ks[0], out_channels, in_channels, 1, 1),
        "bn1": bn_p(ks[1], out_channels),
        "w2": conv_w(ks[2], out_channels, out_channels, 3, 3),
        "bn2": bn_p(ks[3], out_channels),
        "w3": conv_w(ks[4], out_channels * expansion, out_channels, 1, 1),
        "bn3": bn_p(ks[5], out_channels * expansion),
    }
    if stride != 1 or in_channels != out_channels * expansion:
        p["ws"] = conv_w(ks[6], out_channels * expansion, in_channels, 1, 1)
        p["bns"] = bn_p(ks[7], out_channels * expansion)
    return p


def prepare_bottleneck_params(p):
    """One-time (outside the hot path): fold BN, reshape weights to matmul
    layout, cast to bf16 for the MXU."""
    c = p["w1"].shape[0]
    pp = {
        "w1": p["w1"][:, :, 0, 0].T.astype(jnp.bfloat16),                               # (Cin, C)
        "w2": jnp.transpose(p["w2"], (2, 3, 1, 0)).reshape(9, c, c).astype(jnp.bfloat16),  # (9, C, C)
        "w3": p["w3"][:, :, 0, 0].T.astype(jnp.bfloat16),                               # (C, 4C)
    }
    pp["s1"], pp["b1"] = _bn_fold(p["bn1"])
    pp["s2"], pp["b2"] = _bn_fold(p["bn2"])
    pp["s3"], pp["b3"] = _bn_fold(p["bn3"])
    if "ws" in p:
        pp["ws"] = p["ws"][:, :, 0, 0].T.astype(jnp.bfloat16)                           # (Cin, 4C)
        pp["ss"], pp["bs"] = _bn_fold(p["bns"])
    return pp


# ---------------------------------------------------------------------------
# BottleNeck forward (Pallas hot path)
# ---------------------------------------------------------------------------
def bottleneck_forward_nhwc(pp, x, stride):
    n, h, w, cin = x.shape
    xb = x.astype(jnp.bfloat16)
    c = pp["w1"].shape[1]
    c4 = pp["w3"].shape[1]

    # conv1 (1x1) + BN1 + ReLU
    a1 = matmul_bn(xb.reshape(n * h * w, cin), pp["w1"], pp["s1"], pp["b1"],
                   relu=True, out_dtype=jnp.bfloat16)
    a1 = a1.reshape(n, h, w, c)

    # conv2 (3x3, stride, pad=1) + BN2 + ReLU — in-kernel 9-tap accumulation
    a2, ho, wo = conv3x3_bn_relu(a1, pp["w2"], pp["s2"], pp["b2"], stride)
    a2_2d = a2.reshape(n * ho * wo, c)

    # conv3 (1x1) + BN3 + shortcut + final ReLU (single fused kernel)
    if "ws" in pp:
        xs = xb[:, ::stride, ::stride, :].reshape(n * ho * wo, cin)
        out = matmul2_bn_relu(a2_2d, pp["w3"], pp["s3"], pp["b3"],
                              xs, pp["ws"], pp["ss"], pp["bs"],
                              out_dtype=jnp.float32)
    else:
        resid = xb.reshape(n * h * w, cin)              # identity (cin == 4C)
        out = matmul_bn_add_relu(a2_2d, pp["w3"], pp["s3"], pp["b3"], resid,
                                 out_dtype=jnp.float32)
    return out.reshape(n, ho, wo, c4)


def bottleneck_forward(prepared, x_nchw, stride):
    """PyTorch-parity entry point (NCHW in/out)."""
    x = jnp.transpose(x_nchw, (0, 2, 3, 1))
    out = bottleneck_forward_nhwc(prepared, x, stride)
    return jnp.transpose(out, (0, 3, 1, 2))


# ---------------------------------------------------------------------------
# Plain-JAX reference (lax.conv with the same bf16-operand / f32-accumulate
# quantization points as the kernels) for correctness check
# ---------------------------------------------------------------------------
def bottleneck_reference(params, x, stride):
    dn = ("NCHW", "OIHW", "NCHW")

    def bn(y, bnp, eps=1e-5):
        g, b, m, v = bnp
        s = g / jnp.sqrt(v + eps)
        return y * s[None, :, None, None] + (b - m * s)[None, :, None, None]

    def conv(a, w, strides, padding):
        return lax.conv_general_dilated(
            a.astype(jnp.bfloat16), w.astype(jnp.bfloat16), strides, padding,
            dimension_numbers=dn, preferred_element_type=jnp.float32)

    r = jnp.maximum(bn(conv(x, params["w1"], (1, 1), "VALID"), params["bn1"]),
                    0.0).astype(jnp.bfloat16)
    r = jnp.maximum(bn(conv(r, params["w2"], (stride, stride), [(1, 1), (1, 1)]),
                       params["bn2"]), 0.0).astype(jnp.bfloat16)
    r = bn(conv(r, params["w3"], (1, 1), "VALID"), params["bn3"])
    if "ws" in params:
        sct = bn(conv(x, params["ws"], (stride, stride), "VALID"), params["bns"])
    else:
        sct = x.astype(jnp.bfloat16).astype(jnp.float32)
    return jnp.maximum(r + sct, 0.0)


if __name__ == "__main__":
    key = jax.random.PRNGKey(0)
    kx, kp1, kp2 = jax.random.split(key, 3)

    fwd = jax.jit(bottleneck_forward, static_argnums=2)

    # Config 1: projection shortcut (stride=2, in_channels != out_channels*4)
    in_c, out_c, stride = 8, 4, 2
    x = jax.random.normal(kx, (2, in_c, 16, 16), jnp.float32)
    raw = init_bottleneck_params(kp1, in_c, out_c, stride)
    pp = prepare_bottleneck_params(raw)
    y = jax.block_until_ready(fwd(pp, x, stride))
    y_ref = bottleneck_reference(raw, x, stride)
    assert y.shape == (2, out_c * 4, 8, 8), y.shape
    assert jnp.allclose(y, y_ref, atol=2e-2, rtol=2e-2), "mismatch (projection)"

    # Config 2: identity shortcut (stride=1, in_channels == out_channels*4)
    in_c2, out_c2, stride2 = 16, 4, 1
    x2 = jax.random.normal(kx, (2, in_c2, 16, 16), jnp.float32)
    raw2 = init_bottleneck_params(kp2, in_c2, out_c2, stride2)
    pp2 = prepare_bottleneck_params(raw2)
    y2 = jax.block_until_ready(fwd(pp2, x2, stride2))
    y2_ref = bottleneck_reference(raw2, x2, stride2)
    assert y2.shape == (2, out_c2 * 4, 16, 16), y2.shape
    assert jnp.allclose(y2, y2_ref, atol=2e-2, rtol=2e-2), "mismatch (identity)"

    print("KERNEL_OK")
</pallas_src>

<mosaic_0001>
module attributes {stable_mosaic.version = 11 : i64} {
  func.func @_mm_bn_kernel(%arg0: i32, %arg1: memref<512x8xbf16, #tpu.memory_space<vmem>>, %arg2: memref<8x4xbf16, #tpu.memory_space<vmem>>, %arg3: memref<1x4xf32, #tpu.memory_space<vmem>>, %arg4: memref<1x4xf32, #tpu.memory_space<vmem>>, %arg5: memref<512x4xbf16, #tpu.memory_space<vmem>>) attributes {dimension_semantics = [#tpu.dimension_semantics<parallel>], iteration_bounds = array<i64: 1>, scalar_prefetch = 0 : i64, scratch_operands = 0 : i64, tpu.core_type = #tpu.core_type<tc>, window_params = [{transform_indices = @transform_0, window_bounds = array<i64: 512, 8>}, {pipeline_mode = #tpu.pipeline_mode<synchronous>, transform_indices = @transform_1, window_bounds = array<i64: 8, 4>}, {pipeline_mode = #tpu.pipeline_mode<synchronous>, transform_indices = @transform_2, window_bounds = array<i64: 1, 4>}, {pipeline_mode = #tpu.pipeline_mode<synchronous>, transform_indices = @transform_3, window_bounds = array<i64: 1, 4>}, {transform_indices = @transform_4, window_bounds = array<i64: 512, 4>}]} {
    %c0 = arith.constant 0 : index
    %c0_0 = arith.constant 0 : index
    %0 = vector.load %arg1[%c0, %c0_0] : memref<512x8xbf16, #tpu.memory_space<vmem>>, vector<512x8xbf16>
    %c0_1 = arith.constant 0 : index
    %c0_2 = arith.constant 0 : index
    %1 = vector.load %arg2[%c0_1, %c0_2] : memref<8x4xbf16, #tpu.memory_space<vmem>>, vector<8x4xbf16>
    %cst = arith.constant dense<0.000000e+00> : vector<512x4xf32>
    %2 = tpu.matmul %0, %1, %cst {dimension_numbers = #tpu.dot_dimension_numbers<[1], [0], [0], [1], [0, 0, 1, 1], [], []>} : vector<512x8xbf16>, vector<8x4xbf16>, vector<512x4xf32> -> vector<512x4xf32>
    %c0_3 = arith.constant 0 : index
    %c0_4 = arith.constant 0 : index
    %3 = vector.load %arg3[%c0_3, %c0_4] : memref<1x4xf32, #tpu.memory_space<vmem>>, vector<1x4xf32>
    %4 = vector.broadcast %3 : vector<1x4xf32> to vector<512x4xf32>
    %5 = arith.mulf %2, %4 : vector<512x4xf32>
    %c0_5 = arith.constant 0 : index
    %c0_6 = arith.constant 0 : index
    %6 = vector.load %arg4[%c0_5, %c0_6] : memref<1x4xf32, #tpu.memory_space<vmem>>, vector<1x4xf32>
    %7 = vector.broadcast %6 : vector<1x4xf32> to vector<512x4xf32>
    %8 = arith.addf %5, %7 : vector<512x4xf32>
    %cst_7 = arith.constant 0.000000e+00 : f32
    %9 = vector.broadcast %cst_7 : f32 to vector<512x4xf32>
    %10 = arith.maximumf %8, %9 : vector<512x4xf32>
    %11 = arith.truncf %10 : vector<512x4xf32> to vector<512x4xbf16>
    %c0_8 = arith.constant 0 : index
    %c0_9 = arith.constant 0 : index
    %12 = vector.load %arg5[%c0_8, %c0_9] : memref<512x4xbf16, #tpu.memory_space<vmem>>, vector<512x4xbf16>
    tpu.vector_store %arg5[%c0_8, %c0_9], %11 {strides = array<i32>} : memref<512x4xbf16, #tpu.memory_space<vmem>>, vector<512x4xbf16>,
    return
  }
  func.func @transform_0(%arg0: i32) -> (i32, i32) {
    %c0_i32 = arith.constant 0 : i32
    %c0_i32_0 = arith.constant 0 : i32
    return %arg0, %c0_i32 : i32, i32
  }
  func.func @transform_1(%arg0: i32) -> (i32, i32) {
    %c0_i32 = arith.constant 0 : i32
    %c0_i32_0 = arith.constant 0 : i32
    %c0_i32_1 = arith.constant 0 : i32
    return %c0_i32, %c0_i32_0 : i32, i32
  }
  func.func @transform_2(%arg0: i32) -> (i32, i32) {
    %c0_i32 = arith.constant 0 : i32
    %c0_i32_0 = arith.constant 0 : i32
    %c0_i32_1 = arith.constant 0 : i32
    return %c0_i32, %c0_i32_0 : i32, i32
  }
  func.func @transform_3(%arg0: i32) -> (i32, i32) {
    %c0_i32 = arith.constant 0 : i32
    %c0_i32_0 = arith.constant 0 : i32
    %c0_i32_1 = arith.constant 0 : i32
    return %c0_i32, %c0_i32_0 : i32, i32
  }
  func.func @transform_4(%arg0: i32) -> (i32, i32) {
    %c0_i32 = arith.constant 0 : i32
    %c0_i32_0 = arith.constant 0 : i32
    return %arg0, %c0_i32 : i32, i32
  }
}

module attributes {stable_mosaic.version = 11 : i64} {
  func.func @_conv3x3_bn_relu_kernel(%arg0: i32, %arg1: memref<1x2x2x9x17x4xbf16, #tpu.memory_space<vmem>>, %arg2: memref<9x4x4xbf16, #tpu.memory_space<vmem>>, %arg3: memref<1x4xf32, #tpu.memory_space<vmem>>, %arg4: memref<1x4xf32, #tpu.memory_space<vmem>>, %arg5: memref<1x8x8x4xbf16, #tpu.memory_space<vmem>>) attributes {dimension_semantics = [#tpu.dimension_semantics<parallel>], iteration_bounds = array<i64: 2>, scalar_prefetch = 0 : i64, scratch_operands = 0 : i64, tpu.core_type = #tpu.core_type<tc>, window_params = [{transform_indices = @transform_0, window_bounds = array<i64: 1, 2, 2, 9, 17, 4>}, {pipeline_mode = #tpu.pipeline_mode<synchronous>, transform_indices = @transform_1, window_bounds = array<i64: 9, 4, 4>}, {pipeline_mode = #tpu.pipeline_mode<synchronous>, transform_indices = @transform_2, window_bounds = array<i64: 1, 4>}, {pipeline_mode = #tpu.pipeline_mode<synchronous>, transform_indices = @transform_3, window_bounds = array<i64: 1, 4>}, {transform_indices = @transform_4, window_bounds = array<i64: 1, 8, 8, 4>}]} {
    %cst = arith.constant 0.000000e+00 : f32
    %0 = vector.broadcast %cst : f32 to vector<128x4xf32>
    %c0 = arith.constant 0 : index
    %c0_0 = arith.constant 0 : index
    %c0_1 = arith.constant 0 : index
    %c0_2 = arith.constant 0 : index
    %c0_3 = arith.constant 0 : index
    %c0_4 = arith.constant 0 : index
    %1 = vector.load %arg1[%c0, %c0_0, %c0_1, %c0_2, %c0_3, %c0_4] : memref<1x2x2x9x17x4xbf16, #tpu.memory_space<vmem>>, vector<1x1x1x8x16x4xbf16>
    %2 = vector.shape_cast %1 : vector<1x1x1x8x16x4xbf16> to vector<8x16x4xbf16>
    %3 = vector.shape_cast %2 : vector<8x16x4xbf16> to vector<128x4xbf16>
    %c0_5 = arith.constant 0 : index
    %c0_6 = arith.constant 0 : index
    %c0_7 = arith.constant 0 : index
    %4 = vector.load %arg2[%c0_5, %c0_6, %c0_7] : memref<9x4x4xbf16, #tpu.memory_space<vmem>>, vector<1x4x4xbf16>
    %5 = vector.shape_cast %4 : vector<1x4x4xbf16> to vector<4x4xbf16>
    %cst_8 = arith.constant dense<0.000000e+00> : vector<128x4xf32>
    %6 = tpu.matmul %3, %5, %cst_8 {dimension_numbers = #tpu.dot_dimension_numbers<[1], [0], [0], [1], [0, 0, 1, 1], [], []>} : vector<128x4xbf16>, vector<4x4xbf16>, vector<128x4xf32> -> vector<128x4xf32>
    %7 = arith.addf %0, %6 : vector<128x4xf32>
    %c0_9 = arith.constant 0 : index
    %c0_10 = arith.constant 0 : index
    %c1 = arith.constant 1 : index
    %c0_11 = arith.constant 0 : index
    %c0_12 = arith.constant 0 : index
    %c0_13 = arith.constant 0 : index
    %8 = vector.load %arg1[%c0_9, %c0_10, %c1, %c0_11, %c0_12, %c0_13] : memref<1x2x2x9x17x4xbf16, #tpu.memory_space<vmem>>, vector<1x1x1x8x16x4xbf16>
    %9 = vector.shape_cast %8 : vector<1x1x1x8x16x4xbf16> to vector<8x16x4xbf16>
    %10 = vector.shape_cast %9 : vector<8x16x4xbf16> to vector<128x4xbf16>
    %c1_14 = arith.constant 1 : index
    %c0_15 = arith.constant 0 : index
    %c0_16 = arith.constant 0 : index
    %11 = vector.load %arg2[%c1_14, %c0_15, %c0_16] : memref<9x4x4xbf16, #tpu.memory_space<vmem>>, vector<1x4x4xbf16>
    %12 = vector.shape_cast %11 : vector<1x4x4xbf16> to vector<4x4xbf16>
    %cst_17 = arith.constant dense<0.000000e+00> : vector<128x4xf32>
    %13 = tpu.matmul %10, %12, %cst_17 {dimension_numbers = #tpu.dot_dimension_numbers<[1], [0], [0], [1], [0, 0, 1, 1], [], []>} : vector<128x4xbf16>, vector<4x4xbf16>, vector<128x4xf32> -> vector<128x4xf32>
    %14 = arith.addf %7, %13 : vector<128x4xf32>
    %c0_18 = arith.constant 0 : index
    %c0_19 = arith.constant 0 : index
    %c0_20 = arith.constant 0 : index
    %c0_21 = arith.constant 0 : index
    %c1_22 = arith.constant 1 : index
    %c0_23 = arith.constant 0 : index
    %15 = vector.load %arg1[%c0_18, %c0_19, %c0_20, %c0_21, %c1_22, %c0_23] : memref<1x2x2x9x17x4xbf16, #tpu.memory_space<vmem>>, vector<1x1x1x8x16x4xbf16>
    %16 = vector.shape_cast %15 : vector<1x1x1x8x16x4xbf16> to vector<8x16x4xbf16>
    %17 = vector.shape_cast %16 : vector<8x16x4xbf16> to vector<128x4xbf16>
    %c2 = arith.constant 2 : index
    %c0_24 = arith.constant 0 : index
    %c0_25 = arith.constant 0 : index
    %18 = vector.load %arg2[%c2, %c0_24, %c0_25] : memref<9x4x4xbf16, #tpu.memory_space<vmem>>, vector<1x4x4xbf16>
    %19 = vector.shape_cast %18 : vector<1x4x4xbf16> to vector<4x4xbf16>
    %cst_26 = arith.constant dense<0.000000e+00> : vector<128x4xf32>
    %20 = tpu.matmul %17, %19, %cst_26 {dimension_numbers = #tpu.dot_dimension_numbers<[1], [0], [0], [1], [0, 0, 1, 1], [], []>} : vector<128x4xbf16>, vector<4x4xbf16>, vector<128x4xf32> -> vector<128x4xf32>
    %21 = arith.addf %14, %20 : vector<128x4xf32>
    %c0_27 = arith.constant 0 : index
    %c1_28 = arith.constant 1 : index
    %c0_29 = arith.constant 0 : index
    %c0_30 = arith.constant 0 : index
    %c0_31 = arith.constant 0 : index
    %c0_32 = arith.constant 0 : index
    %22 = vector.load %arg1[%c0_27, %c1_28, %c0_29, %c0_30, %c0_31, %c0_32] : memref<1x2x2x9x17x4xbf16, #tpu.memory_space<vmem>>, vector<1x1x1x8x16x4xbf16>
    %23 = vector.shape_cast %22 : vector<1x1x1x8x16x4xbf16> to vector<8x16x4xbf16>
    %24 = vector.shape_cast %23 : vector<8x16x4xbf16> to vector<128x4xbf16>
    %c3 = arith.constant 3 : index
    %c0_33 = arith.constant 0 : index
    %c0_34 = arith.constant 0 : index
    %25 = vector.load %arg2[%c3, %c0_33, %c0_34] : memref<9x4x4xbf16, #tpu.memory_space<vmem>>, vector<1x4x4xbf16>
    %26 = vector.shape_cast %25 : vector<1x4x4xbf16> to vector<4x4xbf16>
    %cst_35 = arith.constant dense<0.000000e+00> : vector<128x4xf32>
    %27 = tpu.matmul %24, %26, %cst_35 {dimension_numbers = #tpu.dot_dimension_numbers<[1], [0], [0], [1], [0, 0, 1, 1], [], []>} : vector<128x4xbf16>, vector<4x4xbf16>, vector<128x4xf32> -> vector<128x4xf32>
    %28 = arith.addf %21, %27 : vector<128x4xf32>
    %c0_36 = arith.constant 0 : index
    %c1_37 = arith.constant 1 : index
    %c1_38 = arith.constant 1 : index
    %c0_39 = arith.constant 0 : index
    %c0_40 = arith.constant 0 : index
    %c0_41 = arith.constant 0 : index
    %29 = vector.load %arg1[%c0_36, %c1_37, %c1_38, %c0_39, %c0_40, %c0_41] : memref<1x2x2x9x17x4xbf16, #tpu.memory_space<vmem>>, vector<1x1x1x8x16x4xbf16>
    %30 = vector.shape_cast %29 : vector<1x1x1x8x16x4xbf16> to vector<8x16x4xbf16>
    %31 = vector.shape_cast %30 : vector<8x16x4xbf16> to vector<128x4xbf16>
    %c4 = arith.constant 4 : index
    %c0_42 = arith.constant 0 : index
    %c0_43 = arith.constant 0 : index
    %32 = vector.load %arg2[%c4, %c0_42, %c0_43] : memref<9x4x4xbf16, #tpu.memory_space<vmem>>, vector<1x4x4xbf16>
    %33 = vector.shape_cast %32 : vector<1x4x4xbf16> to vector<4x4xbf16>
    %cst_44 = arith.constant dense<0.000000e+00> : vector<128x4xf32>
    %34 = tpu.matmul %31, %33, %cst_44 {dimension_numbers = #tpu.dot_dimension_numbers<[1], [0], [0], [1], [0, 0, 1, 1], [], []>} : vector<128x4xbf16>, vector<4x4xbf16>, vector<128x4xf32> -> vector<128x4xf32>
    %35 = arith.addf %28, %34 : vector<128x4xf32>
    %c0_45 = arith.constant 0 : index
    %c1_46 = arith.constant 1 : index
    %c0_47 = arith.constant 0 : index
    %c0_48 = arith.constant 0 : index
    %c1_49 = arith.constant 1 : index
    %c0_50 = arith.constant 0 : index
    %36 = vector.load %arg1[%c0_45, %c1_46, %c0_47, %c0_48, %c1_49, %c0_50] : memref<1x2x2x9x17x4xbf16, #tpu.memory_space<vmem>>, vector<1x1x1x8x16x4xbf16>
    %37 = vector.shape_cast %36 : vector<1x1x1x8x16x4xbf16> to vector<8x16x4xbf16>
    %38 = vector.shape_cast %37 : vector<8x16x4xbf16> to vector<128x4xbf16>
    %c5 = arith.constant 5 : index
    %c0_51 = arith.constant 0 : index
    %c0_52 = arith.constant 0 : index
    %39 = vector.load %arg2[%c5, %c0_51, %c0_52] : memref<9x4x4xbf16, #tpu.memory_space<vmem>>, vector<1x4x4xbf16>
    %40 = vector.shape_cast %39 : vector<1x4x4xbf16> to vector<4x4xbf16>
    %cst_53 = arith.constant dense<0.000000e+00> : vector<128x4xf32>
    %41 = tpu.matmul %38, %40, %cst_53 {dimension_numbers = #tpu.dot_dimension_numbers<[1], [0], [0], [1], [0, 0, 1, 1], [], []>} : vector<128x4xbf16>, vector<4x4xbf16>, vector<128x4xf32> -> vector<128x4xf32>
    %42 = arith.addf %35, %41 : vector<128x4xf32>
    %c0_54 = arith.constant 0 : index
    %c0_55 = arith.constant 0 : index
    %c0_56 = arith.constant 0 : index
    %c1_57 = arith.constant 1 : index
    %c0_58 = arith.constant 0 : index
    %c0_59 = arith.constant 0 : index
    %43 = vector.load %arg1[%c0_54, %c0_55, %c0_56, %c1_57, %c0_58, %c0_59] : memref<1x2x2x9x17x4xbf16, #tpu.memory_space<vmem>>, vector<1x1x1x8x16x4xbf16>
    %44 = vector.shape_cast %43 : vector<1x1x1x8x16x4xbf16> to vector<8x16x4xbf16>
    %45 = vector.shape_cast %44 : vector<8x16x4xbf16> to vector<128x4xbf16>
    %c6 = arith.constant 6 : index
    %c0_60 = arith.constant 0 : index
    %c0_61 = arith.constant 0 : index
    %46 = vector.load %arg2[%c6, %c0_60, %c0_61] : memref<9x4x4xbf16, #tpu.memory_space<vmem>>, vector<1x4x4xbf16>
    %47 = vector.shape_cast %46 : vector<1x4x4xbf16> to vector<4x4xbf16>
    %cst_62 = arith.constant dense<0.000000e+00> : vector<128x4xf32>
    %48 = tpu.matmul %45, %47, %cst_62 {dimension_numbers = #tpu.dot_dimension_numbers<[1], [0], [0], [1], [0, 0, 1, 1], [], []>} : vector<128x4xbf16>, vector<4x4xbf16>, vector<128x4xf32> -> vector<128x4xf32>
    %49 = arith.addf %42, %48 : vector<128x4xf32>
    %c0_63 = arith.constant 0 : index
    %c0_64 = arith.constant 0 : index
    %c1_65 = arith.constant 1 : index
    %c1_66 = arith.constant 1 : index
    %c0_67 = arith.constant 0 : index
    %c0_68 = arith.constant 0 : index
    %50 = vector.load %arg1[%c0_63, %c0_64, %c1_65, %c1_66, %c0_67, %c0_68] : memref<1x2x2x9x17x4xbf16, #tpu.memory_space<vmem>>, vector<1x1x1x8x16x4xbf16>
    %51 = vector.shape_cast %50 : vector<1x1x1x8x16x4xbf16> to vector<8x16x4xbf16>
    %52 = vector.shape_cast %51 : vector<8x16x4xbf16> to vector<128x4xbf16>
    %c7 = arith.constant 7 : index
    %c0_69 = arith.constant 0 : index
    %c0_70 = arith.constant 0 : index
    %53 = vector.load %arg2[%c7, %c0_69, %c0_70] : memref<9x4x4xbf16, #tpu.memory_space<vmem>>, vector<1x4x4xbf16>
    %54 = vector.shape_cast %53 : vector<1x4x4xbf16> to vector<4x4xbf16>
    %cst_71 = arith.constant dense<0.000000e+00> : vector<128x4xf32>
    %55 = tpu.matmul %52, %54, %cst_71 {dimension_numbers = #tpu.dot_dimension_numbers<[1], [0], [0], [1], [0, 0, 1, 1], [], []>} : vector<128x4xbf16>, vector<4x4xbf16>, vector<128x4xf32> -> vector<128x4xf32>
    %56 = arith.addf %49, %55 : vector<128x4xf32>
    %c0_72 = arith.constant 0 : index
    %c0_73 = arith.constant 0 : index
    %c0_74 = arith.constant 0 : index
    %c1_75 = arith.constant 1 : index
    %c1_76 = arith.constant 1 : index
    %c0_77 = arith.constant 0 : index
    %57 = vector.load %arg1[%c0_72, %c0_73, %c0_74, %c1_75, %c1_76, %c0_77] : memref<1x2x2x9x17x4xbf16, #tpu.memory_space<vmem>>, vector<1x1x1x8x16x4xbf16>
    %58 = vector.shape_cast %57 : vector<1x1x1x8x16x4xbf16> to vector<8x16x4xbf16>
    %59 = vector.shape_cast %58 : vector<8x16x4xbf16> to vector<128x4xbf16>
    %c8 = arith.constant 8 : index
    %c0_78 = arith.constant 0 : index
    %c0_79 = arith.constant 0 : index
    %60 = vector.load %arg2[%c8, %c0_78, %c0_79] : memref<9x4x4xbf16, #tpu.memory_space<vmem>>, vector<1x4x4xbf16>
    %61 = vector.shape_cast %60 : vector<1x4x4xbf16> to vector<4x4xbf16>
    %cst_80 = arith.constant dense<0.000000e+00> : vector<128x4xf32>
    %62 = tpu.matmul %59, %61, %cst_80 {dimension_numbers = #tpu.dot_dimension_numbers<[1], [0], [0], [1], [0, 0, 1, 1], [], []>} : vector<128x4xbf16>, vector<4x4xbf16>, vector<128x4xf32> -> vector<128x4xf32>
    %63 = arith.addf %56, %62 : vector<128x4xf32>
    %c0_81 = arith.constant 0 : index
    %c0_82 = arith.constant 0 : index
    %64 = vector.load %arg3[%c0_81, %c0_82] : memref<1x4xf32, #tpu.memory_space<vmem>>, vector<1x4xf32>
    %65 = vector.broadcast %64 : vector<1x4xf32> to vector<128x4xf32>
    %66 = arith.mulf %63, %65 : vector<128x4xf32>
    %c0_83 = arith.constant 0 : index
    %c0_84 = arith.constant 0 : index
    %67 = vector.load %arg4[%c0_83, %c0_84] : memref<1x4xf32, #tpu.memory_space<vmem>>, vector<1x4xf32>
    %68 = vector.broadcast %67 : vector<1x4xf32> to vector<128x4xf32>
    %69 = arith.addf %66, %68 : vector<128x4xf32>
    %cst_85 = arith.constant 0.000000e+00 : f32
    %70 = vector.broadcast %cst_85 : f32 to vector<128x4xf32>
    %71 = arith.maximumf %69, %70 : vector<128x4xf32>
    %72 = vector.shape_cast %71 : vector<128x4xf32> to vector<8x16x4xf32>
    %73 = vector.extract_strided_slice %72 {offsets = [0, 0, 0], sizes = [8, 8, 4], strides = [1, 1, 1]} : vector<8x16x4xf32> to vector<8x8x4xf32>
    %74 = vector.shape_cast %73 : vector<8x8x4xf32> to vector<1x8x8x4xf32>
    %75 = arith.truncf %74 : vector<1x8x8x4xf32> to vector<1x8x8x4xbf16>
    %c0_86 = arith.constant 0 : index
    %c0_87 = arith.constant 0 : index
    %c0_88 = arith.constant 0 : index
    %c0_89 = arith.constant 0 : index
    %76 = vector.load %arg5[%c0_86, %c0_87, %c0_88, %c0_89] : memref<1x8x8x4xbf16, #tpu.memory_space<vmem>>, vector<1x8x8x4xbf16>
    tpu.vector_store %arg5[%c0_86, %c0_87, %c0_88, %c0_89], %75 {strides = array<i32>} : memref<1x8x8x4xbf16, #tpu.memory_space<vmem>>, vector<1x8x8x4xbf16>,
    return
  }
  func.func @transform_0(%arg0: i32) -> (i32, i32, i32, i32, i32, i32) {
    %c0_i32 = arith.constant 0 : i32
    %c0_i32_0 = arith.constant 0 : i32
    %c0_i32_1 = arith.constant 0 : i32
    %c0_i32_2 = arith.constant 0 : i32
    %c0_i32_3 = arith.constant 0 : i32
    %c0_i32_4 = arith.constant 0 : i32
    return %arg0, %c0_i32, %c0_i32_0, %c0_i32_1, %c0_i32_2, %c0_i32_3 : i32, i32, i32, i32, i32, i32
  }
  func.func @transform_1(%arg0: i32) -> (i32, i32, i32) {
    %c0_i32 = arith.constant 0 : i32
    %c0_i32_0 = arith.constant 0 : i32
    %c0_i32_1 = arith.constant 0 : i32
    %c0_i32_2 = arith.constant 0 : i32
    return %c0_i32, %c0_i32_0, %c0_i32_1 : i32, i32, i32
  }
  func.func @transform_2(%arg0: i32) -> (i32, i32) {
    %c0_i32 = arith.constant 0 : i32
    %c0_i32_0 = arith.constant 0 : i32
    %c0_i32_1 = arith.constant 0 : i32
    return %c0_i32, %c0_i32_0 : i32, i32
  }
  func.func @transform_3(%arg0: i32) -> (i32, i32) {
    %c0_i32 = arith.constant 0 : i32
    %c0_i32_0 = arith.constant 0 : i32
    %c0_i32_1 = arith.constant 0 : i32
    return %c0_i32, %c0_i32_0 : i32, i32
  }
  func.func @transform_4(%arg0: i32) -> (i32, i32, i32, i32) {
    %c0_i32 = arith.constant 0 : i32
    %c0_i32_0 = arith.constant 0 : i32
    %c0_i32_1 = arith.constant 0 : i32
    %c0_i32_2 = arith.constant 0 : i32
    return %arg0, %c0_i32, %c0_i32_0, %c0_i32_1 : i32, i32, i32, i32
  }
}

module attributes {stable_mosaic.version = 11 : i64} {
  func.func @_mm2_bn_relu_kernel(%arg0: i32, %arg1: memref<128x4xbf16, #tpu.memory_space<vmem>>, %arg2: memref<4x16xbf16, #tpu.memory_space<vmem>>, %arg3: memref<1x16xf32, #tpu.memory_space<vmem>>, %arg4: memref<1x16xf32, #tpu.memory_space<vmem>>, %arg5: memref<128x8xbf16, #tpu.memory_space<vmem>>, %arg6: memref<8x16xbf16, #tpu.memory_space<vmem>>, %arg7: memref<1x16xf32, #tpu.memory_space<vmem>>, %arg8: memref<1x16xf32, #tpu.memory_space<vmem>>, %arg9: memref<128x16xf32, #tpu.memory_space<vmem>>) attributes {dimension_semantics = [#tpu.dimension_semantics<parallel>], iteration_bounds = array<i64: 1>, scalar_prefetch = 0 : i64, scratch_operands = 0 : i64, tpu.core_type = #tpu.core_type<tc>, window_params = [{transform_indices = @transform_0, window_bounds = array<i64: 128, 4>}, {pipeline_mode = #tpu.pipeline_mode<synchronous>, transform_indices = @transform_1, window_bounds = array<i64: 4, 16>}, {pipeline_mode = #tpu.pipeline_mode<synchronous>, transform_indices = @transform_2, window_bounds = array<i64: 1, 16>}, {pipeline_mode = #tpu.pipeline_mode<synchronous>, transform_indices = @transform_3, window_bounds = array<i64: 1, 16>}, {transform_indices = @transform_4, window_bounds = array<i64: 128, 8>}, {pipeline_mode = #tpu.pipeline_mode<synchronous>, transform_indices = @transform_5, window_bounds = array<i64: 8, 16>}, {pipeline_mode = #tpu.pipeline_mode<synchronous>, transform_indices = @transform_6, window_bounds = array<i64: 1, 16>}, {pipeline_mode = #tpu.pipeline_mode<synchronous>, transform_indices = @transform_7, window_bounds = array<i64: 1, 16>}, {transform_indices = @transform_8, window_bounds = array<i64: 128, 16>}]} {
    %c0 = arith.constant 0 : index
    %c0_0 = arith.constant 0 : index
    %0 = vector.load %arg1[%c0, %c0_0] : memref<128x4xbf16, #tpu.memory_space<vmem>>, vector<128x4xbf16>
    %c0_1 = arith.constant 0 : index
    %c0_2 = arith.constant 0 : index
    %1 = vector.load %arg2[%c0_1, %c0_2] : memref<4x16xbf16, #tpu.memory_space<vmem>>, vector<4x16xbf16>
    %cst = arith.constant dense<0.000000e+00> : vector<128x16xf32>
    %2 = tpu.matmul %0, %1, %cst {dimension_numbers = #tpu.dot_dimension_numbers<[1], [0], [0], [1], [0, 0, 1, 1], [], []>} : vector<128x4xbf16>, vector<4x16xbf16>, vector<128x16xf32> -> vector<128x16xf32>
    %c0_3 = arith.constant 0 : index
    %c0_4 = arith.constant 0 : index
    %3 = vector.load %arg3[%c0_3, %c0_4] : memref<1x16xf32, #tpu.memory_space<vmem>>, vector<1x16xf32>
    %4 = vector.broadcast %3 : vector<1x16xf32> to vector<128x16xf32>
    %5 = arith.mulf %2, %4 : vector<128x16xf32>
    %c0_5 = arith.constant 0 : index
    %c0_6 = arith.constant 0 : index
    %6 = vector.load %arg4[%c0_5, %c0_6] : memref<1x16xf32, #tpu.memory_space<vmem>>, vector<1x16xf32>
    %7 = vector.broadcast %6 : vector<1x16xf32> to vector<128x16xf32>
    %8 = arith.addf %5, %7 : vector<128x16xf32>
    %c0_7 = arith.constant 0 : index
    %c0_8 = arith.constant 0 : index
    %9 = vector.load %arg5[%c0_7, %c0_8] : memref<128x8xbf16, #tpu.memory_space<vmem>>, vector<128x8xbf16>
    %c0_9 = arith.constant 0 : index
    %c0_10 = arith.constant 0 : index
    %10 = vector.load %arg6[%c0_9, %c0_10] : memref<8x16xbf16, #tpu.memory_space<vmem>>, vector<8x16xbf16>
    %cst_11 = arith.constant dense<0.000000e+00> : vector<128x16xf32>
    %11 = tpu.matmul %9, %10, %cst_11 {dimension_numbers = #tpu.dot_dimension_numbers<[1], [0], [0], [1], [0, 0, 1, 1], [], []>} : vector<128x8xbf16>, vector<8x16xbf16>, vector<128x16xf32> -> vector<128x16xf32>
    %c0_12 = arith.constant 0 : index
    %c0_13 = arith.constant 0 : index
    %12 = vector.load %arg7[%c0_12, %c0_13] : memref<1x16xf32, #tpu.memory_space<vmem>>, vector<1x16xf32>
    %13 = vector.broadcast %12 : vector<1x16xf32> to vector<128x16xf32>
    %14 = arith.mulf %11, %13 : vector<128x16xf32>
    %15 = arith.addf %8, %14 : vector<128x16xf32>
    %c0_14 = arith.constant 0 : index
    %c0_15 = arith.constant 0 : index
    %16 = vector.load %arg8[%c0_14, %c0_15] : memref<1x16xf32, #tpu.memory_space<vmem>>, vector<1x16xf32>
    %17 = vector.broadcast %16 : vector<1x16xf32> to vector<128x16xf32>
    %18 = arith.addf %15, %17 : vector<128x16xf32>
    %cst_16 = arith.constant 0.000000e+00 : f32
    %19 = vector.broadcast %cst_16 : f32 to vector<128x16xf32>
    %20 = arith.maximumf %18, %19 : vector<128x16xf32>
    %c0_17 = arith.constant 0 : index
    %c0_18 = arith.constant 0 : index
    %21 = vector.load %arg9[%c0_17, %c0_18] : memref<128x16xf32, #tpu.memory_space<vmem>>, vector<128x16xf32>
    tpu.vector_store %arg9[%c0_17, %c0_18], %20 {strides = array<i32>} : memref<128x16xf32, #tpu.memory_space<vmem>>, vector<128x16xf32>,
    return
  }
  func.func @transform_0(%arg0: i32) -> (i32, i32) {
    %c0_i32 = arith.constant 0 : i32
    %c0_i32_0 = arith.constant 0 : i32
    return %arg0, %c0_i32 : i32, i32
  }
  func.func @transform_1(%arg0: i32) -> (i32, i32) {
    %c0_i32 = arith.constant 0 : i32
    %c0_i32_0 = arith.constant 0 : i32
    %c0_i32_1 = arith.constant 0 : i32
    return %c0_i32, %c0_i32_0 : i32, i32
  }
  func.func @transform_2(%arg0: i32) -> (i32, i32) {
    %c0_i32 = arith.constant 0 : i32
    %c0_i32_0 = arith.constant 0 : i32
    %c0_i32_1 = arith.constant 0 : i32
    return %c0_i32, %c0_i32_0 : i32, i32
  }
  func.func @transform_3(%arg0: i32) -> (i32, i32) {
    %c0_i32 = arith.constant 0 : i32
    %c0_i32_0 = arith.constant 0 : i32
    %c0_i32_1 = arith.constant 0 : i32
    return %c0_i32, %c0_i32_0 : i32, i32
  }
  func.func @transform_4(%arg0: i32) -> (i32, i32) {
    %c0_i32 = arith.constant 0 : i32
    %c0_i32_0 = arith.constant 0 : i32
    return %arg0, %c0_i32 : i32, i32
  }
  func.func @transform_5(%arg0: i32) -> (i32, i32) {
    %c0_i32 = arith.constant 0 : i32
    %c0_i32_0 = arith.constant 0 : i32
    %c0_i32_1 = arith.constant 0 : i32
    return %c0_i32, %c0_i32_0 : i32, i32
  }
  func.func @transform_6(%arg0: i32) -> (i32, i32) {
    %c0_i32 = arith.constant 0 : i32
    %c0_i32_0 = arith.constant 0 : i32
    %c0_i32_1 = arith.constant 0 : i32
    return %c0_i32, %c0_i32_0 : i32, i32
  }
  func.func @transform_7(%arg0: i32) -> (i32, i32) {
    %c0_i32 = arith.constant 0 : i32
    %c0_i32_0 = arith.constant 0 : i32
    %c0_i32_1 = arith.constant 0 : i32
    return %c0_i32, %c0_i32_0 : i32, i32
  }
  func.func @transform_8(%arg0: i32) -> (i32, i32) {
    %c0_i32 = arith.constant 0 : i32
    %c0_i32_0 = arith.constant 0 : i32
    return %arg0, %c0_i32 : i32, i32
  }
}

</mosaic_0001>

<llo_original>
// kernel: bottleneck_forward.3
$region0: #{bottleneck_forward.3}
  #allocation0 [shape = 'u32[]', space=smem, size = 0x4, offset = 0x4, fixed_abs, tag = 'smem constant byte address 0x4 - core index']
  #allocation1 [shape = 'u32[144,128]{1,0:T(1,128)}', space=vmem, size = 0x12000, scoped, tag = 'internal scratch']
  %s0 = inlined_call_operand.vmem [shape: bf16[512,8], index: 0, kind: input, shape index: {}]
  %s1 = inlined_call_operand.vmem [shape: bf16[8,4], index: 1, kind: input, shape index: {}]
  %s2 = inlined_call_operand.vmem [shape: f32[1,4], index: 2, kind: input, shape index: {}]
  %s3 = inlined_call_operand.vmem [shape: f32[1,4], index: 3, kind: input, shape index: {}]
  %s4 = inlined_call_operand.vmem [shape: bf16[512,4], index: 4, kind: output, shape index: {}]
  %s5 = sld [smem:[#allocation0]]
  $region26: #{bottleneck_forward.3} parent=0
    _
  %s7 = ssub.s32 1, %s5
  %s8 = scalar_select 0, %s7, %s5
  // Predicated region
  $region2: #{bottleneck_forward.3} parent=0 // pred_check
    _
  $region3: #{bottleneck_forward.3} parent=0 // pred_check_branch
    %10 = sbr.rel (0) target = $region5
  $region4: #{bottleneck_forward.3} parent=0 // pred_region
    _
  $region5: #{bottleneck_forward.3} parent=0 // pred_fallthru
    _
  // Predicated region
  $region6: #{bottleneck_forward.3} parent=0 // pred_check
    _
  $region7: #{bottleneck_forward.3} parent=0 // pred_check_branch
    %12 = sbr.rel (0) target = $region9
  $region8: #{bottleneck_forward.3} parent=0 // pred_region
    _
  $region9: #{bottleneck_forward.3} parent=0 // pred_fallthru
    _
  // Predicated region
  $region10: #{bottleneck_forward.3} parent=0 // pred_check
    _
  $region11: #{bottleneck_forward.3} parent=0 // pred_check_branch
    %14 = sbr.rel (0) target = $region13
  $region12: #{bottleneck_forward.3} parent=0 // pred_region
    _
  $region13: #{bottleneck_forward.3} parent=0 // pred_fallthru
    _
  // Predicated region
  $region14: #{bottleneck_forward.3} parent=0 // pred_check
    _
  $region15: #{bottleneck_forward.3} parent=0 // pred_check_branch
    %16 = sbr.rel (0) target = $region17
  $region16: #{bottleneck_forward.3} parent=0 // pred_region
    _
  $region17: #{bottleneck_forward.3} parent=0 // pred_fallthru
    _
  %v18 = vld [vmem:[%s0] sm:$0xf]
  %v19 = vld [vmem:[%s0 + $0x4] sm:$0xf]
  %v20 = vld [vmem:[%s0 + $0x8] sm:$0xf]
  %v21 = vld [vmem:[%s0 + $0xc] sm:$0xf]
  %v22 = vld [vmem:[%s0 + $0x10] sm:$0xf]
  %v23 = vld [vmem:[%s0 + $0x14] sm:$0xf]
  %v24 = vld [vmem:[%s0 + $0x18] sm:$0xf]
  %v25 = vld [vmem:[%s0 + $0x1c] sm:$0xf]
  %v26 = vld [vmem:[%s0 + $0x20] sm:$0xf]
  %v27 = vld [vmem:[%s0 + $0x24] sm:$0xf]
  %v28 = vld [vmem:[%s0 + $0x28] sm:$0xf]
  %v29 = vld [vmem:[%s0 + $0x2c] sm:$0xf]
  %v30 = vld [vmem:[%s0 + $0x30] sm:$0xf]
  %v31 = vld [vmem:[%s0 + $0x34] sm:$0xf]
  %v32 = vld [vmem:[%s0 + $0x38] sm:$0xf]
  %v33 = vld [vmem:[%s0 + $0x3c] sm:$0xf]
  %v34 = vld [vmem:[%s0 + $0x40] sm:$0xf]
  %v35 = vld [vmem:[%s0 + $0x44] sm:$0xf]
  %v36 = vld [vmem:[%s0 + $0x48] sm:$0xf]
  %v37 = vld [vmem:[%s0 + $0x4c] sm:$0xf]
  %v38 = vld [vmem:[%s0 + $0x50] sm:$0xf]
  %v39 = vld [vmem:[%s0 + $0x54] sm:$0xf]
  %v40 = vld [vmem:[%s0 + $0x58] sm:$0xf]
  %v41 = vld [vmem:[%s0 + $0x5c] sm:$0xf]
  %v42 = vld [vmem:[%s0 + $0x60] sm:$0xf]
  %v43 = vld [vmem:[%s0 + $0x64] sm:$0xf]
  %v44 = vld [vmem:[%s0 + $0x68] sm:$0xf]
  %v45 = vld [vmem:[%s0 + $0x6c] sm:$0xf]
  %v46 = vld [vmem:[%s0 + $0x70] sm:$0xf]
  %v47 = vld [vmem:[%s0 + $0x74] sm:$0xf]
  %v48 = vld [vmem:[%s0 + $0x78] sm:$0xf]
  %v49 = vld [vmem:[%s0 + $0x7c] sm:$0xf]
  %v50 = vld [vmem:[%s0 + $0x80] sm:$0xf]
  %v51 = vld [vmem:[%s0 + $0x84] sm:$0xf]
  %v52 = vld [vmem:[%s0 + $0x88] sm:$0xf]
  %v53 = vld [vmem:[%s0 + $0x8c] sm:$0xf]
  %v54 = vld [vmem:[%s0 + $0x90] sm:$0xf]
  %v55 = vld [vmem:[%s0 + $0x94] sm:$0xf]
  %v56 = vld [vmem:[%s0 + $0x98] sm:$0xf]
  %v57 = vld [vmem:[%s0 + $0x9c] sm:$0xf]
  %v58 = vld [vmem:[%s0 + $0xa0] sm:$0xf]
  %v59 = vld [vmem:[%s0 + $0xa4] sm:$0xf]
  %v60 = vld [vmem:[%s0 + $0xa8] sm:$0xf]
  %v61 = vld [vmem:[%s0 + $0xac] sm:$0xf]
  %v62 = vld [vmem:[%s0 + $0xb0] sm:$0xf]
  %v63 = vld [vmem:[%s0 + $0xb4] sm:$0xf]
  %v64 = vld [vmem:[%s0 + $0xb8] sm:$0xf]
  %v65 = vld [vmem:[%s0 + $0xbc] sm:$0xf]
  %v66 = vld [vmem:[%s0 + $0xc0] sm:$0xf]
  %v67 = vld [vmem:[%s0 + $0xc4] sm:$0xf]
  %v68 = vld [vmem:[%s0 + $0xc8] sm:$0xf]
  %v69 = vld [vmem:[%s0 + $0xcc] sm:$0xf]
  %v70 = vld [vmem:[%s0 + $0xd0] sm:$0xf]
  %v71 = vld [vmem:[%s0 + $0xd4] sm:$0xf]
  %v72 = vld [vmem:[%s0 + $0xd8] sm:$0xf]
  %v73 = vld [vmem:[%s0 + $0xdc] sm:$0xf]
  %v74 = vld [vmem:[%s0 + $0xe0] sm:$0xf]
  %v75 = vld [vmem:[%s0 + $0xe4] sm:$0xf]
  %v76 = vld [vmem:[%s0 + $0xe8] sm:$0xf]
  %v77 = vld [vmem:[%s0 + $0xec] sm:$0xf]
  %v78 = vld [vmem:[%s0 + $0xf0] sm:$0xf]
  %v79 = vld [vmem:[%s0 + $0xf4] sm:$0xf]
  %v80 = vld [vmem:[%s0 + $0xf8] sm:$0xf]
  %v81 = vld [vmem:[%s0 + $0xfc] sm:$0xf]
  %v82 = vld [vmem:[%s1] sm:$0xf]
  %v147 = vunpack.c.l.b16 %v18
  %v148 = vunpack.c.l.b16 %v19
  %v149 = vunpack.c.l.b16 %v20
  %v150 = vunpack.c.l.b16 %v21
  %v151 = vunpack.c.l.b16 %v22
  %v152 = vunpack.c.l.b16 %v23
  %v153 = vunpack.c.l.b16 %v24
  %v154 = vunpack.c.l.b16 %v25
  %v155 = vunpack.c.l.b16 %v26
  %v156 = vunpack.c.l.b16 %v27
  %v157 = vunpack.c.l.b16 %v28
  %v158 = vunpack.c.l.b16 %v29
  %v159 = vunpack.c.l.b16 %v30
  %v160 = vunpack.c.l.b16 %v31
  %v161 = vunpack.c.l.b16 %v32
  %v162 = vunpack.c.l.b16 %v33
  %v163 = vunpack.c.l.b16 %v34
  %v164 = vunpack.c.l.b16 %v35
  %v165 = vunpack.c.l.b16 %v36
  %v166 = vunpack.c.l.b16 %v37
  %v167 = vunpack.c.l.b16 %v38
  %v168 = vunpack.c.l.b16 %v39
  %v169 = vunpack.c.l.b16 %v40
  %v170 = vunpack.c.l.b16 %v41
  %v171 = vunpack.c.l.b16 %v42
  %v172 = vunpack.c.l.b16 %v43
  %v173 = vunpack.c.l.b16 %v44
  %v174 = vunpack.c.l.b16 %v45
  %v175 = vunpack.c.l.b16 %v46
  %v176 = vunpack.c.l.b16 %v47
  %v177 = vunpack.c.l.b16 %v48
  %v178 = vunpack.c.l.b16 %v49
  %v179 = vunpack.c.l.b16 %v50
  %v180 = vunpack.c.l.b16 %v51
  %v181 = vunpack.c.l.b16 %v52
  %v182 = vunpack.c.l.b16 %v53
  %v183 = vunpack.c.l.b16 %v54
  %v184 = vunpack.c.l.b16 %v55
  %v185 = vunpack.c.l.b16 %v56
  %v186 = vunpack.c.l.b16 %v57
  %v187 = vunpack.c.l.b16 %v58
  %v188 = vunpack.c.l.b16 %v59
  %v189 = vunpack.c.l.b16 %v60
  %v190 = vunpack.c.l.b16 %v61
  %v191 = vunpack.c.l.b16 %v62
  %v192 = vunpack.c.l.b16 %v63
  %v193 = vunpack.c.l.b16 %v64
  %v194 = vunpack.c.l.b16 %v65
  %v195 = vunpack.c.l.b16 %v66
  %v196 = vunpack.c.l.b16 %v67
  %v197 = vunpack.c.l.b16 %v68
  %v198 = vunpack.c.l.b16 %v69
  %v199 = vunpack.c.l.b16 %v70
  %v200 = vunpack.c.l.b16 %v71
  %v201 = vunpack.c.l.b16 %v72
  %v202 = vunpack.c.l.b16 %v73
  %v203 = vunpack.c.l.b16 %v74
  %v204 = vunpack.c.l.b16 %v75
  %v205 = vunpack.c.l.b16 %v76
  %v206 = vunpack.c.l.b16 %v77
  %v207 = vunpack.c.l.b16 %v78
  %v208 = vunpack.c.l.b16 %v79
  %v209 = vunpack.c.l.b16 %v80
  %v210 = vunpack.c.l.b16 %v81
  %v211 = vpack.c.b16 %v148, %v147
  %v212 = vpack.c.b16 %v150, %v149
  %v213 = vpack.c.b16 %v152, %v151
  %v214 = vpack.c.b16 %v154, %v153
  %v215 = vpack.c.b16 %v156, %v155
  %v216 = vpack.c.b16 %v158, %v157
  %v217 = vpack.c.b16 %v160, %v159
  %v218 = vpack.c.b16 %v162, %v161
  %v219 = vpack.c.b16 %v164, %v163
  %v220 = vpack.c.b16 %v166, %v165
  %v221 = vpack.c.b16 %v168, %v167
  %v222 = vpack.c.b16 %v170, %v169
  %v223 = vpack.c.b16 %v172, %v171
  %v224 = vpack.c.b16 %v174, %v173
  %v225 = vpack.c.b16 %v176, %v175
  %v226 = vpack.c.b16 %v178, %v177
  %v227 = vpack.c.b16 %v180, %v179
  %v228 = vpack.c.b16 %v182, %v181
  %v229 = vpack.c.b16 %v184, %v183
  %v230 = vpack.c.b16 %v186, %v185
  %v231 = vpack.c.b16 %v188, %v187
  %v232 = vpack.c.b16 %v190, %v189
  %v233 = vpack.c.b16 %v192, %v191
  %v234 = vpack.c.b16 %v194, %v193
  %v235 = vpack.c.b16 %v196, %v195
  %v236 = vpack.c.b16 %v198, %v197
  %v237 = vpack.c.b16 %v200, %v199
  %v238 = vpack.c.b16 %v202, %v201
  %v239 = vpack.c.b16 %v204, %v203
  %v240 = vpack.c.b16 %v206, %v205
  %v241 = vpack.c.b16 %v208, %v207
  %v242 = vpack.c.b16 %v210, %v209
  %vm243 = vcmask 64512
  %v245 = vsel %vm243, %v211, 0
  %v248 = vsel %vm243, %v212, 0
  %v251 = vsel %vm243, %v213, 0
  %v254 = vsel %vm243, %v214, 0
  %v257 = vsel %vm243, %v215, 0
  %v260 = vsel %vm243, %v216, 0
  %v263 = vsel %vm243, %v217, 0
  %v266 = vsel %vm243, %v218, 0
  %v269 = vsel %vm243, %v219, 0
  %v272 = vsel %vm243, %v220, 0
  %v275 = vsel %vm243, %v221, 0
  %v278 = vsel %vm243, %v222, 0
  %v281 = vsel %vm243, %v223, 0
  %v284 = vsel %vm243, %v224, 0
  %v287 = vsel %vm243, %v225, 0
  %v290 = vsel %vm243, %v226, 0
  %v293 = vsel %vm243, %v227, 0
  %v296 = vsel %vm243, %v228, 0
  %v299 = vsel %vm243, %v229, 0
  %v302 = vsel %vm243, %v230, 0
  %v305 = vsel %vm243, %v231, 0
  %v308 = vsel %vm243, %v232, 0
  %v311 = vsel %vm243, %v233, 0
  %v314 = vsel %vm243, %v234, 0
  %v317 = vsel %vm243, %v235, 0
  %v320 = vsel %vm243, %v236, 0
  %v323 = vsel %vm243, %v237, 0
  %v326 = vsel %vm243, %v238, 0
  %v329 = vsel %vm243, %v239, 0
  %v332 = vsel %vm243, %v240, 0
  %v335 = vsel %vm243, %v241, 0
  %v338 = vsel %vm243, %v242, 0
  %vm340 = vcmask 1043456
  %v342 = vsel %vm340, %v82, 0
  %344 = vmatprep.subr.bf16.mxu0 0
  %345 = vmatpush1.bf16.msra.mxu0 %v342
  %346 = vmatprep.subr.bf16.mxu0 0
  %347 = vmatpush1.bf16.msra.mxu0 0
  %348 = vmatprep.subr.bf16.mxu0 0
  %349 = vmatpush1.bf16.msra.mxu0 0
  %350 = vmatprep.subr.bf16.mxu0 0
  %351 = vmatpush1.bf16.msra.mxu0 0
  %352 = vmatprep.subr.bf16.mxu0 0
  %353 = vmatpush1.bf16.msra.mxu0 0
  %354 = vmatprep.subr.bf16.mxu0 0
  %355 = vmatpush1.bf16.msra.mxu0 0
  %356 = vmatprep.subr.bf16.mxu0 0
  %357 = vmatpush1.bf16.msra.mxu0 0
  %358 = vmatprep.subr.bf16.mxu0 0
  %359 = vmatpush1.bf16.msra.mxu0 0
  %360 = vmatprep.subr.bf16.mxu0 0
  %361 = vmatpush1.bf16.msra.mxu0 0
  %362 = vmatprep.subr.bf16.mxu0 0
  %363 = vmatpush1.bf16.msra.mxu0 0
  %364 = vmatprep.subr.bf16.mxu0 0
  %365 = vmatpush1.bf16.msra.mxu0 0
  %366 = vmatprep.subr.bf16.mxu0 0
  %367 = vmatpush1.bf16.msra.mxu0 0
  %368 = vmatprep.subr.bf16.mxu0 0
  %369 = vmatpush1.bf16.msra.mxu0 0
  %370 = vmatprep.subr.bf16.mxu0 0
  %371 = vmatpush1.bf16.msra.mxu0 0
  %372 = vmatprep.subr.bf16.mxu0 0
  %373 = vmatpush1.bf16.msra.mxu0 0
  %374 = vmatprep.subr.bf16.mxu0 0
  %375 = vmatpush1.bf16.msra.mxu0 0
  %376 = vmatprep.mubr.bf16.mxu0 0
  %377 = vmatmul.mubr.bf16.gmra.mrb[0].mxu0 %v245
  %v378 = vpop.f32.mrb[0].mxu0
  %v379 = vadd.f32 0.0, %v378
  %v380 = vpop.f32.mrb[0].mxu0
  %v381 = vpop.f32.mrb[0].mxu0
  %v382 = vadd.f32 0.0, %v381
  %v383 = vpop.f32.mrb[0].mxu0
  %384 = vmatprep.mubr.bf16.mxu0 0
  %385 = vmatmul.mubr.bf16.gmra.mrb[0].mxu0 %v248
  %v386 = vpop.f32.mrb[0].mxu0
  %v387 = vadd.f32 0.0, %v386
  %v388 = vpop.f32.mrb[0].mxu0
  %v389 = vpop.f32.mrb[0].mxu0
  %v390 = vadd.f32 0.0, %v389
  %v391 = vpop.f32.mrb[0].mxu0
  %392 = vmatprep.mubr.bf16.mxu0 0
  %393 = vmatmul.mubr.bf16.gmra.mrb[0].mxu0 %v251
  %v394 = vpop.f32.mrb[0].mxu0
  %v395 = vadd.f32 0.0, %v394
  %v396 = vpop.f32.mrb[0].mxu0
  %v397 = vpop.f32.mrb[0].mxu0
  %v398 = vadd.f32 0.0, %v397
  %v399 = vpop.f32.mrb[0].mxu0
  %400 = vmatprep.mubr.bf16.mxu0 0
  %401 = vmatmul.mubr.bf16.gmra.mrb[0].mxu0 %v254
  %v402 = vpop.f32.mrb[0].mxu0
  %v403 = vadd.f32 0.0, %v402
  %v404 = vpop.f32.mrb[0].mxu0
  %v405 = vpop.f32.mrb[0].mxu0
  %v406 = vadd.f32 0.0, %v405
  %v407 = vpop.f32.mrb[0].mxu0
  %408 = vmatprep.mubr.bf16.mxu0 0
  %409 = vmatmul.mubr.bf16.gmra.mrb[0].mxu0 %v257
  %v410 = vpop.f32.mrb[0].mxu0
  %v411 = vadd.f32 0.0, %v410
  %v412 = vpop.f32.mrb[0].mxu0
  %v413 = vpop.f32.mrb[0].mxu0
  %v414 = vadd.f32 0.0, %v413
  %v415 = vpop.f32.mrb[0].mxu0
  %416 = vmatprep.mubr.bf16.mxu0 0
  %417 = vmatmul.mubr.bf16.gmra.mrb[0].mxu0 %v260
  %v418 = vpop.f32.mrb[0].mxu0
  %v419 = vadd.f32 0.0, %v418
  %v420 = vpop.f32.mrb[0].mxu0
  %v421 = vpop.f32.mrb[0].mxu0
  %v422 = vadd.f32 0.0, %v421
  %v423 = vpop.f32.mrb[0].mxu0
  %424 = vmatprep.mubr.bf16.mxu0 0
  %425 = vmatmul.mubr.bf16.gmra.mrb[0].mxu0 %v263
  %v426 = vpop.f32.mrb[0].mxu0
  %v427 = vadd.f32 0.0, %v426
  %v428 = vpop.f32.mrb[0].mxu0
  %v429 = vpop.f32.mrb[0].mxu0
  %v430 = vadd.f32 0.0, %v429
  %v431 = vpop.f32.mrb[0].mxu0
  %432 = vmatprep.mubr.bf16.mxu0 0
  %433 = vmatmul.mubr.bf16.gmra.mrb[0].mxu0 %v266
  %v434 = vpop.f32.mrb[0].mxu0
  %v435 = vadd.f32 0.0, %v434
  %v436 = vpop.f32.mrb[0].mxu0
  %v437 = vpop.f32.mrb[0].mxu0
  %v438 = vadd.f32 0.0, %v437
  %v439 = vpop.f32.mrb[0].mxu0
  %440 = vmatprep.mubr.bf16.mxu0 0
  %441 = vmatmul.mubr.bf16.gmra.mrb[0].mxu0 %v269
  %v442 = vpop.f32.mrb[0].mxu0
  %v443 = vadd.f32 0.0, %v442
  %v444 = vpop.f32.mrb[0].mxu0
  %v445 = vpop.f32.mrb[0].mxu0
  %v446 = vadd.f32 0.0, %v445
  %v447 = vpop.f32.mrb[0].mxu0
  %448 = vmatprep.mubr.bf16.mxu0 0
  %449 = vmatmul.mubr.bf16.gmra.mrb[0].mxu0 %v272
  %v450 = vpop.f32.mrb[0].mxu0
  %v451 = vadd.f32 0.0, %v450
  %v452 = vpop.f32.mrb[0].mxu0
  %v453 = vpop.f32.mrb[0].mxu0
  %v454 = vadd.f32 0.0, %v453
  %v455 = vpop.f32.mrb[0].mxu0
  %456 = vmatprep.mubr.bf16.mxu0 0
  %457 = vmatmul.mubr.bf16.gmra.mrb[0].mxu0 %v275
  %v458 = vpop.f32.mrb[0].mxu0
  %v459 = vadd.f32 0.0, %v458
  %v460 = vpop.f32.mrb[0].mxu0
  %v461 = vpop.f32.mrb[0].mxu0
  %v462 = vadd.f32 0.0, %v461
  %v463 = vpop.f32.mrb[0].mxu0
  %464 = vmatprep.mubr.bf16.mxu0 0
  %465 = vmatmul.mubr.bf16.gmra.mrb[0].mxu0 %v278
  %v466 = vpop.f32.mrb[0].mxu0
  %v467 = vadd.f32 0.0, %v466
  %v468 = vpop.f32.mrb[0].mxu0
  %v469 = vpop.f32.mrb[0].mxu0
  %v470 = vadd.f32 0.0, %v469
  %v471 = vpop.f32.mrb[0].mxu0
  %472 = vmatprep.mubr.bf16.mxu0 0
  %473 = vmatmul.mubr.bf16.gmra.mrb[0].mxu0 %v281
  %v474 = vpop.f32.mrb[0].mxu0
  %v475 = vadd.f32 0.0, %v474
  %v476 = vpop.f32.mrb[0].mxu0
  %v477 = vpop.f32.mrb[0].mxu0
  %v478 = vadd.f32 0.0, %v477
  %v479 = vpop.f32.mrb[0].mxu0
  %480 = vmatprep.mubr.bf16.mxu0 0
  %481 = vmatmul.mubr.bf16.gmra.mrb[0].mxu0 %v284
  %v482 = vpop.f32.mrb[0].mxu0
  %v483 = vadd.f32 0.0, %v482
  %v484 = vpop.f32.mrb[0].mxu0
  %v485 = vpop.f32.mrb[0].mxu0
  %v486 = vadd.f32 0.0, %v485
  %v487 = vpop.f32.mrb[0].mxu0
  %488 = vmatprep.mubr.bf16.mxu0 0
  %489 = vmatmul.mubr.bf16.gmra.mrb[0].mxu0 %v287
  %v490 = vpop.f32.mrb[0].mxu0
  %v491 = vadd.f32 0.0, %v490
  %v492 = vpop.f32.mrb[0].mxu0
  %v493 = vpop.f32.mrb[0].mxu0
  %v494 = vadd.f32 0.0, %v493
  %v495 = vpop.f32.mrb[0].mxu0
  %496 = vmatprep.mubr.bf16.mxu0 0
  %497 = vmatmul.mubr.bf16.gmra.mrb[0].mxu0 %v290
  %v498 = vpop.f32.mrb[0].mxu0
  %v499 = vadd.f32 0.0, %v498
  %v500 = vpop.f32.mrb[0].mxu0
  %v501 = vpop.f32.mrb[0].mxu0
  %v502 = vadd.f32 0.0, %v501
  %v503 = vpop.f32.mrb[0].mxu0
  %504 = vmatprep.mubr.bf16.mxu0 0
  %505 = vmatmul.mubr.bf16.gmra.mrb[0].mxu0 %v293
  %v506 = vpop.f32.mrb[0].mxu0
  %v507 = vadd.f32 0.0, %v506
  %v508 = vpop.f32.mrb[0].mxu0
  %v509 = vpop.f32.mrb[0].mxu0
  %v510 = vadd.f32 0.0, %v509
  %v511 = vpop.f32.mrb[0].mxu0
  %512 = vmatprep.mubr.bf16.mxu0 0
  %513 = vmatmul.mubr.bf16.gmra.mrb[0].mxu0 %v296
  %v514 = vpop.f32.mrb[0].mxu0
  %v515 = vadd.f32 0.0, %v514
  %v516 = vpop.f32.mrb[0].mxu0
  %v517 = vpop.f32.mrb[0].mxu0
  %v518 = vadd.f32 0.0, %v517
  %v519 = vpop.f32.mrb[0].mxu0
  %520 = vmatprep.mubr.bf16.mxu0 0
  %521 = vmatmul.mubr.bf16.gmra.mrb[0].mxu0 %v299
  %v522 = vpop.f32.mrb[0].mxu0
  %v523 = vadd.f32 0.0, %v522
  %v524 = vpop.f32.mrb[0].mxu0
  %v525 = vpop.f32.mrb[0].mxu0
  %v526 = vadd.f32 0.0, %v525
  %v527 = vpop.f32.mrb[0].mxu0
  %528 = vmatprep.mubr.bf16.mxu0 0
  %529 = vmatmul.mubr.bf16.gmra.mrb[0].mxu0 %v302
  %v530 = vpop.f32.mrb[0].mxu0
  %v531 = vadd.f32 0.0, %v530
  %v532 = vpop.f32.mrb[0].mxu0
  %v533 = vpop.f32.mrb[0].mxu0
  %v534 = vadd.f32 0.0, %v533
  %v535 = vpop.f32.mrb[0].mxu0
  %536 = vmatprep.mubr.bf16.mxu0 0
  %537 = vmatmul.mubr.bf16.gmra.mrb[0].mxu0 %v305
  %v538 = vpop.f32.mrb[0].mxu0
  %v539 = vadd.f32 0.0, %v538
  %v540 = vpop.f32.mrb[0].mxu0
  %v541 = vpop.f32.mrb[0].mxu0
  %v542 = vadd.f32 0.0, %v541
  %v543 = vpop.f32.mrb[0].mxu0
  %544 = vmatprep.mubr.bf16.mxu0 0
  %545 = vmatmul.mubr.bf16.gmra.mrb[0].mxu0 %v308
  %v546 = vpop.f32.mrb[0].mxu0
  %v547 = vadd.f32 0.0, %v546
  %v548 = vpop.f32.mrb[0].mxu0
  %v549 = vpop.f32.mrb[0].mxu0
  %v550 = vadd.f32 0.0, %v549
  %v551 = vpop.f32.mrb[0].mxu0
  %552 = vmatprep.mubr.bf16.mxu0 0
  %553 = vmatmul.mubr.bf16.gmra.mrb[0].mxu0 %v311
  %v554 = vpop.f32.mrb[0].mxu0
  %v555 = vadd.f32 0.0, %v554
  %v556 = vpop.f32.mrb[0].mxu0
  %v557 = vpop.f32.mrb[0].mxu0
  %v558 = vadd.f32 0.0, %v557
  %v559 = vpop.f32.mrb[0].mxu0
  %560 = vmatprep.mubr.bf16.mxu0 0
  %561 = vmatmul.mubr.bf16.gmra.mrb[0].mxu0 %v314
  %v562 = vpop.f32.mrb[0].mxu0
  %v563 = vadd.f32 0.0, %v562
  %v564 = vpop.f32.mrb[0].mxu0
  %v565 = vpop.f32.mrb[0].mxu0
  %v566 = vadd.f32 0.0, %v565
  %v567 = vpop.f32.mrb[0].mxu0
  %568 = vmatprep.mubr.bf16.mxu0 0
  %569 = vmatmul.mubr.bf16.gmra.mrb[0].mxu0 %v317
  %v570 = vpop.f32.mrb[0].mxu0
  %v571 = vadd.f32 0.0, %v570
  %v572 = vpop.f32.mrb[0].mxu0
  %v573 = vpop.f32.mrb[0].mxu0
  %v574 = vadd.f32 0.0, %v573
  %v575 = vpop.f32.mrb[0].mxu0
  %576 = vmatprep.mubr.bf16.mxu0 0
  %577 = vmatmul.mubr.bf16.gmra.mrb[0].mxu0 %v320
  %v578 = vpop.f32.mrb[0].mxu0
  %v579 = vadd.f32 0.0, %v578
  %v580 = vpop.f32.mrb[0].mxu0
  %v581 = vpop.f32.mrb[0].mxu0
  %v582 = vadd.f32 0.0, %v581
  %v583 = vpop.f32.mrb[0].mxu0
  %584 = vmatprep.mubr.bf16.mxu0 0
  %585 = vmatmul.mubr.bf16.gmra.mrb[0].mxu0 %v323
  %v586 = vpop.f32.mrb[0].mxu0
  %v587 = vadd.f32 0.0, %v586
  %v588 = vpop.f32.mrb[0].mxu0
  %v589 = vpop.f32.mrb[0].mxu0
  %v590 = vadd.f32 0.0, %v589
  %v591 = vpop.f32.mrb[0].mxu0
  %592 = vmatprep.mubr.bf16.mxu0 0
  %593 = vmatmul.mubr.bf16.gmra.mrb[0].mxu0 %v326
  %v594 = vpop.f32.mrb[0].mxu0
  %v595 = vadd.f32 0.0, %v594
  %v596 = vpop.f32.mrb[0].mxu0
  %v597 = vpop.f32.mrb[0].mxu0
  %v598 = vadd.f32 0.0, %v597
  %v599 = vpop.f32.mrb[0].mxu0
  %600 = vmatprep.mubr.bf16.mxu0 0
  %601 = vmatmul.mubr.bf16.gmra.mrb[0].mxu0 %v329
  %v602 = vpop.f32.mrb[0].mxu0
  %v603 = vadd.f32 0.0, %v602
  %v604 = vpop.f32.mrb[0].mxu0
  %v605 = vpop.f32.mrb[0].mxu0
  %v606 = vadd.f32 0.0, %v605
  %v607 = vpop.f32.mrb[0].mxu0
  %608 = vmatprep.mubr.bf16.mxu0 0
  %609 = vmatmul.mubr.bf16.gmra.mrb[0].mxu0 %v332
  %v610 = vpop.f32.mrb[0].mxu0
  %v611 = vadd.f32 0.0, %v610
  %v612 = vpop.f32.mrb[0].mxu0
  %v613 = vpop.f32.mrb[0].mxu0
  %v614 = vadd.f32 0.0, %v613
  %v615 = vpop.f32.mrb[0].mxu0
  %616 = vmatprep.mubr.bf16.mxu0 0
  %617 = vmatmul.mubr.bf16.gmra.mrb[0].mxu0 %v335
  %v618 = vpop.f32.mrb[0].mxu0
  %v619 = vadd.f32 0.0, %v618
  %v620 = vpop.f32.mrb[0].mxu0
  %v621 = vpop.f32.mrb[0].mxu0
  %v622 = vadd.f32 0.0, %v621
  %v623 = vpop.f32.mrb[0].mxu0
  %624 = vmatprep.mubr.bf16.mxu0 0
  %625 = vmatmul.mubr.bf16.gmra.mrb[0].mxu0 %v338
  %v626 = vpop.f32.mrb[0].mxu0
  %v627 = vadd.f32 0.0, %v626
  %v628 = vpop.f32.mrb[0].mxu0
  %v629 = vpop.f32.mrb[0].mxu0
  %v630 = vadd.f32 0.0, %v629
  %v631 = vpop.f32.mrb[0].mxu0
  %632 = vdwg.mxu0
  %v633 = vld [vmem:[%s2] sm:$0x1]
  %v635 = vlaneseq
  %v636 = vshrl.u32 %v635, 7
  %v637 = vsub.s32 0, %v636
  %v638 = vrot.slane %v633, %v637
  %v640 = vmul.f32 %v379, %v638
  %v641 = vmul.f32 %v382, %v638
  %v642 = vmul.f32 %v387, %v638
  %v643 = vmul.f32 %v390, %v638
  %v644 = vmul.f32 %v395, %v638
  %v645 = vmul.f32 %v398, %v638
  %v646 = vmul.f32 %v403, %v638
  %v647 = vmul.f32 %v406, %v638
  %v648 = vmul.f32 %v411, %v638
  %v649 = vmul.f32 %v414, %v638
  %v650 = vmul.f32 %v419, %v638
  %v651 = vmul.f32 %v422, %v638
  %v652 = vmul.f32 %v427, %v638
  %v653 = vmul.f32 %v430, %v638
  %v654 = vmul.f32 %v435, %v638
  %v655 = vmul.f32 %v438, %v638
  %v656 = vmul.f32 %v443, %v638
  %v657 = vmul.f32 %v446, %v638
  %v658 = vmul.f32 %v451, %v638
  %v659 = vmul.f32 %v454, %v638
  %v660 = vmul.f32 %v459, %v638
  %v661 = vmul.f32 %v462, %v638
  %v662 = vmul.f32 %v467, %v638
  %v663 = vmul.f32 %v470, %v638
  %v664 = vmul.f32 %v475, %v638
  %v665 = vmul.f32 %v478, %v638
  %v666 = vmul.f32 %v483, %v638
  %v667 = vmul.f32 %v486, %v638
  %v668 = vmul.f32 %v491, %v638
  %v669 = vmul.f32 %v494, %v638
  %v670 = vmul.f32 %v499, %v638
  %v671 = vmul.f32 %v502, %v638
  %v672 = vmul.f32 %v507, %v638
  %v673 = vmul.f32 %v510, %v638
  %v674 = vmul.f32 %v515, %v638
  %v675 = vmul.f32 %v518, %v638
  %v676 = vmul.f32 %v523, %v638
  %v677 = vmul.f32 %v526, %v638
  %v678 = vmul.f32 %v531, %v638
  %v679 = vmul.f32 %v534, %v638
  %v680 = vmul.f32 %v539, %v638
  %v681 = vmul.f32 %v542, %v638
  %v682 = vmul.f32 %v547, %v638
  %v683 = vmul.f32 %v550, %v638
  %v684 = vmul.f32 %v555, %v638
  %v685 = vmul.f32 %v558, %v638
  %v686 = vmul.f32 %v563, %v638
  %v687 = vmul.f32 %v566, %v638
  %v688 = vmul.f32 %v571, %v638
  %v689 = vmul.f32 %v574, %v638
  %v690 = vmul.f32 %v579, %v638
  %v691 = vmul.f32 %v582, %v638
  %v692 = vmul.f32 %v587, %v638
  %v693 = vmul.f32 %v590, %v638
  %v694 = vmul.f32 %v595, %v638
  %v695 = vmul.f32 %v598, %v638
  %v696 = vmul.f32 %v603, %v638
  %v697 = vmul.f32 %v606, %v638
  %v698 = vmul.f32 %v611, %v638
  %v699 = vmul.f32 %v614, %v638
  %v700 = vmul.f32 %v619, %v638
  %v701 = vmul.f32 %v622, %v638
  %v702 = vmul.f32 %v627, %v638
  %v703 = vmul.f32 %v630, %v638
  %v704 = vld [vmem:[%s3] sm:$0x1]
  %v706 = vlaneseq
  %v707 = vshrl.u32 %v706, 7
  %v708 = vsub.s32 0, %v707
  %v709 = vrot.slane %v704, %v708
  %v711 = vadd.f32 %v640, %v709
  %v712 = vadd.f32 %v641, %v709
  %v713 = vadd.f32 %v642, %v709
  %v714 = vadd.f32 %v643, %v709
  %v715 = vadd.f32 %v644, %v709
  %v716 = vadd.f32 %v645, %v709
  %v717 = vadd.f32 %v646, %v709
  %v718 = vadd.f32 %v647, %v709
  %v719 = vadd.f32 %v648, %v709
  %v720 = vadd.f32 %v649, %v709
  %v721 = vadd.f32 %v650, %v709
  %v722 = vadd.f32 %v651, %v709
  %v723 = vadd.f32 %v652, %v709
  %v724 = vadd.f32 %v653, %v709
  %v725 = vadd.f32 %v654, %v709
  %v726 = vadd.f32 %v655, %v709
  %v727 = vadd.f32 %v656, %v709
  %v728 = vadd.f32 %v657, %v709
  %v729 = vadd.f32 %v658, %v709
  %v730 = vadd.f32 %v659, %v709
  %v731 = vadd.f32 %v660, %v709
  %v732 = vadd.f32 %v661, %v709
  %v733 = vadd.f32 %v662, %v709
  %v734 = vadd.f32 %v663, %v709
  %v735 = vadd.f32 %v664, %v709
  %v736 = vadd.f32 %v665, %v709
  %v737 = vadd.f32 %v666, %v709
  %v738 = vadd.f32 %v667, %v709
  %v739 = vadd.f32 %v668, %v709
  %v740 = vadd.f32 %v669, %v709
  %v741 = vadd.f32 %v670, %v709
  %v742 = vadd.f32 %v671, %v709
  %v743 = vadd.f32 %v672, %v709
  %v744 = vadd.f32 %v673, %v709
  %v745 = vadd.f32 %v674, %v709
  %v746 = vadd.f32 %v675, %v709
  %v747 = vadd.f32 %v676, %v709
  %v748 = vadd.f32 %v677, %v709
  %v749 = vadd.f32 %v678, %v709
  %v750 = vadd.f32 %v679, %v709
  %v751 = vadd.f32 %v680, %v709
  %v752 = vadd.f32 %v681, %v709
  %v753 = vadd.f32 %v682, %v709
  %v754 = vadd.f32 %v683, %v709
  %v755 = vadd.f32 %v684, %v709
  %v756 = vadd.f32 %v685, %v709
  %v757 = vadd.f32 %v686, %v709
  %v758 = vadd.f32 %v687, %v709
  %v759 = vadd.f32 %v688, %v709
  %v760 = vadd.f32 %v689, %v709
  %v761 = vadd.f32 %v690, %v709
  %v762 = vadd.f32 %v691, %v709
  %v763 = vadd.f32 %v692, %v709
  %v764 = vadd.f32 %v693, %v709
  %v765 = vadd.f32 %v694, %v709
  %v766 = vadd.f32 %v695, %v709
  %v767 = vadd.f32 %v696, %v709
  %v768 = vadd.f32 %v697, %v709
  %v769 = vadd.f32 %v698, %v709
  %v770 = vadd.f32 %v699, %v709
  %v771 = vadd.f32 %v700, %v709
  %v772 = vadd.f32 %v701, %v709
  %v773 = vadd.f32 %v702, %v709
  %v774 = vadd.f32 %v703, %v709
  %v775 = vmax.f32 %v711, 0.0
  %v776 = vmax.f32 %v712, 0.0
  %v777 = vmax.f32 %v713, 0.0
  %v778 = vmax.f32 %v714, 0.0
  %v779 = vmax.f32 %v715, 0.0
  %v780 = vmax.f32 %v716, 0.0
  %v781 = vmax.f32 %v717, 0.0
  %v782 = vmax.f32 %v718, 0.0
  %v783 = vmax.f32 %v719, 0.0
  %v784 = vmax.f32 %v720, 0.0
  %v785 = vmax.f32 %v721, 0.0
  %v786 = vmax.f32 %v722, 0.0
  %v787 = vmax.f32 %v723, 0.0
  %v788 = vmax.f32 %v724, 0.0
  %v789 = vmax.f32 %v725, 0.0
  %v790 = vmax.f32 %v726, 0.0
  %v791 = vmax.f32 %v727, 0.0
  %v792 = vmax.f32 %v728, 0.0
  %v793 = vmax.f32 %v729, 0.0
  %v794 = vmax.f32 %v730, 0.0
  %v795 = vmax.f32 %v731, 0.0
  %v796 = vmax.f32 %v732, 0.0
  %v797 = vmax.f32 %v733, 0.0
  %v798 = vmax.f32 %v734, 0.0
  %v799 = vmax.f32 %v735, 0.0
  %v800 = vmax.f32 %v736, 0.0
  %v801 = vmax.f32 %v737, 0.0
  %v802 = vmax.f32 %v738, 0.0
  %v803 = vmax.f32 %v739, 0.0
  %v804 = vmax.f32 %v740, 0.0
  %v805 = vmax.f32 %v741, 0.0
  %v806 = vmax.f32 %v742, 0.0
  %v807 = vmax.f32 %v743, 0.0
  %v808 = vmax.f32 %v744, 0.0
  %v809 = vmax.f32 %v745, 0.0
  %v810 = vmax.f32 %v746, 0.0
  %v811 = vmax.f32 %v747, 0.0
  %v812 = vmax.f32 %v748, 0.0
  %v813 = vmax.f32 %v749, 0.0
  %v814 = vmax.f32 %v750, 0.0
  %v815 = vmax.f32 %v751, 0.0
  %v816 = vmax.f32 %v752, 0.0
  %v817 = vmax.f32 %v753, 0.0
  %v818 = vmax.f32 %v754, 0.0
  %v819 = vmax.f32 %v755, 0.0
  %v820 = vmax.f32 %v756, 0.0
  %v821 = vmax.f32 %v757, 0.0
  %v822 = vmax.f32 %v758, 0.0
  %v823 = vmax.f32 %v759, 0.0
  %v824 = vmax.f32 %v760, 0.0
  %v825 = vmax.f32 %v761, 0.0
  %v826 = vmax.f32 %v762, 0.0
  %v827 = vmax.f32 %v763, 0.0
  %v828 = vmax.f32 %v764, 0.0
  %v829 = vmax.f32 %v765, 0.0
  %v830 = vmax.f32 %v766, 0.0
  %v831 = vmax.f32 %v767, 0.0
  %v832 = vmax.f32 %v768, 0.0
  %v833 = vmax.f32 %v769, 0.0
  %v834 = vmax.f32 %v770, 0.0
  %v835 = vmax.f32 %v771, 0.0
  %v836 = vmax.f32 %v772, 0.0
  %v837 = vmax.f32 %v773, 0.0
  %v838 = vmax.f32 %v774, 0.0
  %v839 = vpack.c.bf16 %v776, %v775
  %v840 = vpack.c.bf16 %v778, %v777
  %v841 = vpack.c.bf16 %v780, %v779
  %v842 = vpack.c.bf16 %v782, %v781
  %v843 = vpack.c.bf16 %v784, %v783
  %v844 = vpack.c.bf16 %v786, %v785
  %v845 = vpack.c.bf16 %v788, %v787
  %v846 = vpack.c.bf16 %v790, %v789
  %v847 = vpack.c.bf16 %v792, %v791
  %v848 = vpack.c.bf16 %v794, %v793
  %v849 = vpack.c.bf16 %v796, %v795
  %v850 = vpack.c.bf16 %v798, %v797
  %v851 = vpack.c.bf16 %v800, %v799
  %v852 = vpack.c.bf16 %v802, %v801
  %v853 = vpack.c.bf16 %v804, %v803
  %v854 = vpack.c.bf16 %v806, %v805
  %v855 = vpack.c.bf16 %v808, %v807
  %v856 = vpack.c.bf16 %v810, %v809
  %v857 = vpack.c.bf16 %v812, %v811
  %v858 = vpack.c.bf16 %v814, %v813
  %v859 = vpack.c.bf16 %v816, %v815
  %v860 = vpack.c.bf16 %v818, %v817
  %v861 = vpack.c.bf16 %v820, %v819
  %v862 = vpack.c.bf16 %v822, %v821
  %v863 = vpack.c.bf16 %v824, %v823
  %v864 = vpack.c.bf16 %v826, %v825
  %v865 = vpack.c.bf16 %v828, %v827
  %v866 = vpack.c.bf16 %v830, %v829
  %v867 = vpack.c.bf16 %v832, %v831
  %v868 = vpack.c.bf16 %v834, %v833
  %v869 = vpack.c.bf16 %v836, %v835
  %v870 = vpack.c.bf16 %v838, %v837
  %v903 = vunpack.c.l.b16 %v839
  %v904 = vunpack.c.h.b16 %v839
  %v905 = vunpack.c.l.b16 %v840
  %v906 = vunpack.c.h.b16 %v840
  %v907 = vunpack.c.l.b16 %v841
  %v908 = vunpack.c.h.b16 %v841
  %v909 = vunpack.c.l.b16 %v842
  %v910 = vunpack.c.h.b16 %v842
  %v911 = vunpack.c.l.b16 %v843
  %v912 = vunpack.c.h.b16 %v843
  %v913 = vunpack.c.l.b16 %v844
  %v914 = vunpack.c.h.b16 %v844
  %v915 = vunpack.c.l.b16 %v845
  %v916 = vunpack.c.h.b16 %v845
  %v917 = vunpack.c.l.b16 %v846
  %v918 = vunpack.c.h.b16 %v846
  %v919 = vunpack.c.l.b16 %v847
  %v920 = vunpack.c.h.b16 %v847
  %v921 = vunpack.c.l.b16 %v848
  %v922 = vunpack.c.h.b16 %v848
  %v923 = vunpack.c.l.b16 %v849
  %v924 = vunpack.c.h.b16 %v849
  %v925 = vunpack.c.l.b16 %v850
  %v926 = vunpack.c.h.b16 %v850
  %v927 = vunpack.c.l.b16 %v851
  %v928 = vunpack.c.h.b16 %v851
  %v929 = vunpack.c.l.b16 %v852
  %v930 = vunpack.c.h.b16 %v852
  %v931 = vunpack.c.l.b16 %v853
  %v932 = vunpack.c.h.b16 %v853
  %v933 = vunpack.c.l.b16 %v854
  %v934 = vunpack.c.h.b16 %v854
  %v935 = vunpack.c.l.b16 %v855
  %v936 = vunpack.c.h.b16 %v855
  %v937 = vunpack.c.l.b16 %v856
  %v938 = vunpack.c.h.b16 %v856
  %v939 = vunpack.c.l.b16 %v857
  %v940 = vunpack.c.h.b16 %v857
  %v941 = vunpack.c.l.b16 %v858
  %v942 = vunpack.c.h.b16 %v858
  %v943 = vunpack.c.l.b16 %v859
  %v944 = vunpack.c.h.b16 %v859
  %v945 = vunpack.c.l.b16 %v860
  %v946 = vunpack.c.h.b16 %v860
  %v947 = vunpack.c.l.b16 %v861
  %v948 = vunpack.c.h.b16 %v861
  %v949 = vunpack.c.l.b16 %v862
  %v950 = vunpack.c.h.b16 %v862
  %v951 = vunpack.c.l.b16 %v863
  %v952 = vunpack.c.h.b16 %v863
  %v953 = vunpack.c.l.b16 %v864
  %v954 = vunpack.c.h.b16 %v864
  %v955 = vunpack.c.l.b16 %v865
  %v956 = vunpack.c.h.b16 %v865
  %v957 = vunpack.c.l.b16 %v866
  %v958 = vunpack.c.h.b16 %v866
  %v959 = vunpack.c.l.b16 %v867
  %v960 = vunpack.c.h.b16 %v867
  %v961 = vunpack.c.l.b16 %v868
  %v962 = vunpack.c.h.b16 %v868
  %v963 = vunpack.c.l.b16 %v869
  %v964 = vunpack.c.h.b16 %v869
  %v965 = vunpack.c.l.b16 %v870
  %v966 = vunpack.c.h.b16 %v870
  %v967 = vpack.c.b16 %v903, %v903
  %v968 = vpack.c.b16 %v904, %v904
  %v969 = vpack.c.b16 %v905, %v905
  %v970 = vpack.c.b16 %v906, %v906
  %v971 = vpack.c.b16 %v907, %v907
  %v972 = vpack.c.b16 %v908, %v908
  %v973 = vpack.c.b16 %v909, %v909
  %v974 = vpack.c.b16 %v910, %v910
  %v975 = vpack.c.b16 %v911, %v911
  %v976 = vpack.c.b16 %v912, %v912
  %v977 = vpack.c.b16 %v913, %v913
  %v978 = vpack.c.b16 %v914, %v914
  %v979 = vpack.c.b16 %v915, %v915
  %v980 = vpack.c.b16 %v916, %v916
  %v981 = vpack.c.b16 %v917, %v917
  %v982 = vpack.c.b16 %v918, %v918
  %v983 = vpack.c.b16 %v919, %v919
  %v984 = vpack.c.b16 %v920, %v920
  %v985 = vpack.c.b16 %v921, %v921
  %v986 = vpack.c.b16 %v922, %v922
  %v987 = vpack.c.b16 %v923, %v923
  %v988 = vpack.c.b16 %v924, %v924
  %v989 = vpack.c.b16 %v925, %v925
  %v990 = vpack.c.b16 %v926, %v926
  %v991 = vpack.c.b16 %v927, %v927
  %v992 = vpack.c.b16 %v928, %v928
  %v993 = vpack.c.b16 %v929, %v929
  %v994 = vpack.c.b16 %v930, %v930
  %v995 = vpack.c.b16 %v931, %v931
  %v996 = vpack.c.b16 %v932, %v932
  %v997 = vpack.c.b16 %v933, %v933
  %v998 = vpack.c.b16 %v934, %v934
  %v999 = vpack.c.b16 %v935, %v935
  %v1000 = vpack.c.b16 %v936, %v936
  %v1001 = vpack.c.b16 %v937, %v937
  %v1002 = vpack.c.b16 %v938, %v938
  %v1003 = vpack.c.b16 %v939, %v939
  %v1004 = vpack.c.b16 %v940, %v940
  %v1005 = vpack.c.b16 %v941, %v941
  %v1006 = vpack.c.b16 %v942, %v942
  %v1007 = vpack.c.b16 %v943, %v943
  %v1008 = vpack.c.b16 %v944, %v944
  %v1009 = vpack.c.b16 %v945, %v945
  %v1010 = vpack.c.b16 %v946, %v946
  %v1011 = vpack.c.b16 %v947, %v947
  %v1012 = vpack.c.b16 %v948, %v948
  %v1013 = vpack.c.b16 %v949, %v949
  %v1014 = vpack.c.b16 %v950, %v950
  %v1015 = vpack.c.b16 %v951, %v951
  %v1016 = vpack.c.b16 %v952, %v952
  %v1017 = vpack.c.b16 %v953, %v953
  %v1018 = vpack.c.b16 %v954, %v954
  %v1019 = vpack.c.b16 %v955, %v955
  %v1020 = vpack.c.b16 %v956, %v956
  %v1021 = vpack.c.b16 %v957, %v957
  %v1022 = vpack.c.b16 %v958, %v958
  %v1023 = vpack.c.b16 %v959, %v959
  %v1024 = vpack.c.b16 %v960, %v960
  %v1025 = vpack.c.b16 %v961, %v961
  %v1026 = vpack.c.b16 %v962, %v962
  %v1027 = vpack.c.b16 %v963, %v963
  %v1028 = vpack.c.b16 %v964, %v964
  %v1029 = vpack.c.b16 %v965, %v965
  %v1030 = vpack.c.b16 %v966, %v966
  %vm1095 = vcmask 27648
  %1096 = vst.msk [vmem:[%s4] sm:$0xf] %vm1095, %v967
  %1097 = vst.msk [vmem:[%s4 + $0x4] sm:$0xf] %vm1095, %v968
  %1098 = vst.msk [vmem:[%s4 + $0x8] sm:$0xf] %vm1095, %v969
  %1099 = vst.msk [vmem:[%s4 + $0xc] sm:$0xf] %vm1095, %v970
  %1100 = vst.msk [vmem:[%s4 + $0x10] sm:$0xf] %vm1095, %v971
  %1101 = vst.msk [vmem:[%s4 + $0x14] sm:$0xf] %vm1095, %v972
  %1102 = vst.msk [vmem:[%s4 + $0x18] sm:$0xf] %vm1095, %v973
  %1103 = vst.msk [vmem:[%s4 + $0x1c] sm:$0xf] %vm1095, %v974
  %1104 = vst.msk [vmem:[%s4 + $0x20] sm:$0xf] %vm1095, %v975
  %1105 = vst.msk [vmem:[%s4 + $0x24] sm:$0xf] %vm1095, %v976
  %1106 = vst.msk [vmem:[%s4 + $0x28] sm:$0xf] %vm1095, %v977
  %1107 = vst.msk [vmem:[%s4 + $0x2c] sm:$0xf] %vm1095, %v978
  %1108 = vst.msk [vmem:[%s4 + $0x30] sm:$0xf] %vm1095, %v979
  %1109 = vst.msk [vmem:[%s4 + $0x34] sm:$0xf] %vm1095, %v980
  %1110 = vst.msk [vmem:[%s4 + $0x38] sm:$0xf] %vm1095, %v981
  %1111 = vst.msk [vmem:[%s4 + $0x3c] sm:$0xf] %vm1095, %v982
  %1112 = vst.msk [vmem:[%s4 + $0x40] sm:$0xf] %vm1095, %v983
  %1113 = vst.msk [vmem:[%s4 + $0x44] sm:$0xf] %vm1095, %v984
  %1114 = vst.msk [vmem:[%s4 + $0x48] sm:$0xf] %vm1095, %v985
  %1115 = vst.msk [vmem:[%s4 + $0x4c] sm:$0xf] %vm1095, %v986
  %1116 = vst.msk [vmem:[%s4 + $0x50] sm:$0xf] %vm1095, %v987
  %1117 = vst.msk [vmem:[%s4 + $0x54] sm:$0xf] %vm1095, %v988
  %1118 = vst.msk [vmem:[%s4 + $0x58] sm:$0xf] %vm1095, %v989
  %1119 = vst.msk [vmem:[%s4 + $0x5c] sm:$0xf] %vm1095, %v990
  %1120 = vst.msk [vmem:[%s4 + $0x60] sm:$0xf] %vm1095, %v991
  %1121 = vst.msk [vmem:[%s4 + $0x64] sm:$0xf] %vm1095, %v992
  %1122 = vst.msk [vmem:[%s4 + $0x68] sm:$0xf] %vm1095, %v993
  %1123 = vst.msk [vmem:[%s4 + $0x6c] sm:$0xf] %vm1095, %v994
  %1124 = vst.msk [vmem:[%s4 + $0x70] sm:$0xf] %vm1095, %v995
  %1125 = vst.msk [vmem:[%s4 + $0x74] sm:$0xf] %vm1095, %v996
  %1126 = vst.msk [vmem:[%s4 + $0x78] sm:$0xf] %vm1095, %v997
  %1127 = vst.msk [vmem:[%s4 + $0x7c] sm:$0xf] %vm1095, %v998
  %1128 = vst.msk [vmem:[%s4 + $0x80] sm:$0xf] %vm1095, %v999
  %1129 = vst.msk [vmem:[%s4 + $0x84] sm:$0xf] %vm1095, %v1000
  %1130 = vst.msk [vmem:[%s4 + $0x88] sm:$0xf] %vm1095, %v1001
  %1131 = vst.msk [vmem:[%s4 + $0x8c] sm:$0xf] %vm1095, %v1002
  %1132 = vst.msk [vmem:[%s4 + $0x90] sm:$0xf] %vm1095, %v1003
  %1133 = vst.msk [vmem:[%s4 + $0x94] sm:$0xf] %vm1095, %v1004
  %1134 = vst.msk [vmem:[%s4 + $0x98] sm:$0xf] %vm1095, %v1005
  %1135 = vst.msk [vmem:[%s4 + $0x9c] sm:$0xf] %vm1095, %v1006
  %1136 = vst.msk [vmem:[%s4 + $0xa0] sm:$0xf] %vm1095, %v1007
  %1137 = vst.msk [vmem:[%s4 + $0xa4] sm:$0xf] %vm1095, %v1008
  %1138 = vst.msk [vmem:[%s4 + $0xa8] sm:$0xf] %vm1095, %v1009
  %1139 = vst.msk [vmem:[%s4 + $0xac] sm:$0xf] %vm1095, %v1010
  %1140 = vst.msk [vmem:[%s4 + $0xb0] sm:$0xf] %vm1095, %v1011
  %1141 = vst.msk [vmem:[%s4 + $0xb4] sm:$0xf] %vm1095, %v1012
  %1142 = vst.msk [vmem:[%s4 + $0xb8] sm:$0xf] %vm1095, %v1013
  %1143 = vst.msk [vmem:[%s4 + $0xbc] sm:$0xf] %vm1095, %v1014
  %1144 = vst.msk [vmem:[%s4 + $0xc0] sm:$0xf] %vm1095, %v1015
  %1145 = vst.msk [vmem:[%s4 + $0xc4] sm:$0xf] %vm1095, %v1016
  %1146 = vst.msk [vmem:[%s4 + $0xc8] sm:$0xf] %vm1095, %v1017
  %1147 = vst.msk [vmem:[%s4 + $0xcc] sm:$0xf] %vm1095, %v1018
  %1148 = vst.msk [vmem:[%s4 + $0xd0] sm:$0xf] %vm1095, %v1019
  %1149 = vst.msk [vmem:[%s4 + $0xd4] sm:$0xf] %vm1095, %v1020
  %1150 = vst.msk [vmem:[%s4 + $0xd8] sm:$0xf] %vm1095, %v1021
  %1151 = vst.msk [vmem:[%s4 + $0xdc] sm:$0xf] %vm1095, %v1022
  %1152 = vst.msk [vmem:[%s4 + $0xe0] sm:$0xf] %vm1095, %v1023
  %1153 = vst.msk [vmem:[%s4 + $0xe4] sm:$0xf] %vm1095, %v1024
  %1154 = vst.msk [vmem:[%s4 + $0xe8] sm:$0xf] %vm1095, %v1025
  %1155 = vst.msk [vmem:[%s4 + $0xec] sm:$0xf] %vm1095, %v1026
  %1156 = vst.msk [vmem:[%s4 + $0xf0] sm:$0xf] %vm1095, %v1027
  %1157 = vst.msk [vmem:[%s4 + $0xf4] sm:$0xf] %vm1095, %v1028
  %1158 = vst.msk [vmem:[%s4 + $0xf8] sm:$0xf] %vm1095, %v1029
  %1159 = vst.msk [vmem:[%s4 + $0xfc] sm:$0xf] %vm1095, %v1030
  // Predicated region
  $region18: #{bottleneck_forward.3} parent=0 // pred_check
    _
  $region19: #{bottleneck_forward.3} parent=0 // pred_check_branch
    %1161 = sbr.rel (0) target = $region21
  $region20: #{bottleneck_forward.3} parent=0 // pred_region
    _
  $region21: #{bottleneck_forward.3} parent=0 // pred_fallthru
    _
  // Predicated region
  $region22: #{bottleneck_forward.3} parent=0 // pred_check
    _
  $region23: #{bottleneck_forward.3} parent=0 // pred_check_branch
    %1163 = sbr.rel (0) target = $region25
  $region24: #{bottleneck_forward.3} parent=0 // pred_region
    _
  $region25: #{bottleneck_forward.3} parent=0 // pred_fallthru
    _

// kernel: bottleneck_forward.5
$region0: #{bottleneck_forward.5}
  #allocation0 [shape = 'u32[]', space=smem, size = 0x4, offset = 0x4, fixed_abs, tag = 'smem constant byte address 0x4 - core index']
  #allocation1 [shape = 'u32[144,128]{1,0:T(1,128)}', space=vmem, size = 0x12000, scoped, tag = 'internal scratch']
  %s0 = inlined_call_operand.vmem [shape: bf16[128,4], index: 0, kind: input, shape index: {}]
  %s1 = inlined_call_operand.vmem [shape: bf16[4,16], index: 1, kind: input, shape index: {}]
  %s2 = inlined_call_operand.vmem [shape: f32[1,16], index: 2, kind: input, shape index: {}]
  %s3 = inlined_call_operand.vmem [shape: f32[1,16], index: 3, kind: input, shape index: {}]
  %s4 = inlined_call_operand.vmem [shape: bf16[128,8], index: 4, kind: input, shape index: {}]
  %s5 = inlined_call_operand.vmem [shape: bf16[8,16], index: 5, kind: input, shape index: {}]
  %s6 = inlined_call_operand.vmem [shape: f32[1,16], index: 6, kind: input, shape index: {}]
  %s7 = inlined_call_operand.vmem [shape: f32[1,16], index: 7, kind: input, shape index: {}]
  %s8 = inlined_call_operand.hbm [shape: f32[128,16], index: 8, kind: output, shape index: {}]
  %s9 = sld [smem:[#allocation0]]
  $region42: #{bottleneck_forward.5} parent=0
    _
  %s11 = ssub.s32 1, %s9
  %s12 = scalar_select 0, %s11, %s9
  $region1: #{bottleneck_forward.5} parent=0
    #allocation2 [shape = 'u8[65536]{0}', space=vmem, size = 0x10000, scoped, tag = 'output window, operand 0, single buffered']
    #allocation3 [shape = 's32[1]{0}', space=sflag, size = 0x4, scoped, tag = 'scoped memory for bottleneck_forward.5']
    %13 = vsyncpa [#allocation3], 0
    // Predicated region
    $region2: #{bottleneck_forward.5} parent=1 // pred_check
      _
    $region3: #{bottleneck_forward.5} parent=1 // pred_check_branch
      %15 = sbr.rel (0) target = $region5
    $region4: #{bottleneck_forward.5} parent=1 // pred_region
      _
    $region5: #{bottleneck_forward.5} parent=1 // pred_fallthru
      _
    // Predicated region
    $region6: #{bottleneck_forward.5} parent=1 // pred_check
      _
    $region7: #{bottleneck_forward.5} parent=1 // pred_check_branch
      %17 = sbr.rel (0) target = $region9
    $region8: #{bottleneck_forward.5} parent=1 // pred_region
      _
    $region9: #{bottleneck_forward.5} parent=1 // pred_fallthru
      _
    // Predicated region
    $region10: #{bottleneck_forward.5} parent=1 // pred_check
      _
    $region11: #{bottleneck_forward.5} parent=1 // pred_check_branch
      %19 = sbr.rel (0) target = $region13
    $region12: #{bottleneck_forward.5} parent=1 // pred_region
      _
    $region13: #{bottleneck_forward.5} parent=1 // pred_fallthru
      _
    // Predicated region
    $region14: #{bottleneck_forward.5} parent=1 // pred_check
      _
    $region15: #{bottleneck_forward.5} parent=1 // pred_check_branch
      %21 = sbr.rel (0) target = $region17
    $region16: #{bottleneck_forward.5} parent=1 // pred_region
      _
    $region17: #{bottleneck_forward.5} parent=1 // pred_fallthru
      _
    // Predicated region
    $region18: #{bottleneck_forward.5} parent=1 // pred_check
      _
    $region19: #{bottleneck_forward.5} parent=1 // pred_check_branch
      %23 = sbr.rel (0) target = $region21
    $region20: #{bottleneck_forward.5} parent=1 // pred_region
      _
    $region21: #{bottleneck_forward.5} parent=1 // pred_fallthru
      _
    // Predicated region
    $region22: #{bottleneck_forward.5} parent=1 // pred_check
      _
    $region23: #{bottleneck_forward.5} parent=1 // pred_check_branch
      %25 = sbr.rel (0) target = $region25
    $region24: #{bottleneck_forward.5} parent=1 // pred_region
      _
    $region25: #{bottleneck_forward.5} parent=1 // pred_fallthru
      _
    // Predicated region
    $region26: #{bottleneck_forward.5} parent=1 // pred_check
      _
    $region27: #{bottleneck_forward.5} parent=1 // pred_check_branch
      %27 = sbr.rel (0) target = $region29
    $region28: #{bottleneck_forward.5} parent=1 // pred_region
      _
    $region29: #{bottleneck_forward.5} parent=1 // pred_fallthru
      _
    // Predicated region
    $region30: #{bottleneck_forward.5} parent=1 // pred_check
      _
    $region31: #{bottleneck_forward.5} parent=1 // pred_check_branch
      %29 = sbr.rel (0) target = $region33
    $region32: #{bottleneck_forward.5} parent=1 // pred_region
      _
    $region33: #{bottleneck_forward.5} parent=1 // pred_fallthru
      _
    %v31 = vld [vmem:[%s0] sm:$0xf]
    %v32 = vld [vmem:[%s0 + $0x4] sm:$0xf]
    %v33 = vld [vmem:[%s0 + $0x8] sm:$0xf]
    %v34 = vld [vmem:[%s0 + $0xc] sm:$0xf]
    %v35 = vld [vmem:[%s0 + $0x10] sm:$0xf]
    %v36 = vld [vmem:[%s0 + $0x14] sm:$0xf]
    %v37 = vld [vmem:[%s0 + $0x18] sm:$0xf]
    %v38 = vld [vmem:[%s0 + $0x1c] sm:$0xf]
    %v39 = vld [vmem:[%s0 + $0x20] sm:$0xf]
    %v40 = vld [vmem:[%s0 + $0x24] sm:$0xf]
    %v41 = vld [vmem:[%s0 + $0x28] sm:$0xf]
    %v42 = vld [vmem:[%s0 + $0x2c] sm:$0xf]
    %v43 = vld [vmem:[%s0 + $0x30] sm:$0xf]
    %v44 = vld [vmem:[%s0 + $0x34] sm:$0xf]
    %v45 = vld [vmem:[%s0 + $0x38] sm:$0xf]
    %v46 = vld [vmem:[%s0 + $0x3c] sm:$0xf]
    %v47 = vld [vmem:[%s1] sm:$0x3]
    %v64 = vunpack.c.l.b16 %v31
    %v65 = vunpack.c.l.b16 %v32
    %v66 = vunpack.c.l.b16 %v33
    %v67 = vunpack.c.l.b16 %v34
    %v68 = vunpack.c.l.b16 %v35
    %v69 = vunpack.c.l.b16 %v36
    %v70 = vunpack.c.l.b16 %v37
    %v71 = vunpack.c.l.b16 %v38
    %v72 = vunpack.c.l.b16 %v39
    %v73 = vunpack.c.l.b16 %v40
    %v74 = vunpack.c.l.b16 %v41
    %v75 = vunpack.c.l.b16 %v42
    %v76 = vunpack.c.l.b16 %v43
    %v77 = vunpack.c.l.b16 %v44
    %v78 = vunpack.c.l.b16 %v45
    %v79 = vunpack.c.l.b16 %v46
    %v80 = vpack.c.b16 %v65, %v64
    %v81 = vpack.c.b16 %v67, %v66
    %v82 = vpack.c.b16 %v69, %v68
    %v83 = vpack.c.b16 %v71, %v70
    %v84 = vpack.c.b16 %v73, %v72
    %v85 = vpack.c.b16 %v75, %v74
    %v86 = vpack.c.b16 %v77, %v76
    %v87 = vpack.c.b16 %v79, %v78
    %vm88 = vcmask 31744
    %v90 = vsel %vm88, %v80, 0
    %v93 = vsel %vm88, %v81, 0
    %v96 = vsel %vm88, %v82, 0
    %v99 = vsel %vm88, %v83, 0
    %v102 = vsel %vm88, %v84, 0
    %v105 = vsel %vm88, %v85, 0
    %v108 = vsel %vm88, %v86, 0
    %v111 = vsel %vm88, %v87, 0
    %vm113 = vcmask 1041408
    %v115 = vsel %vm113, %v47, 0
    %117 = vmatprep.subr.bf16.mxu0 0
    %118 = vmatpush1.bf16.msra.mxu0 %v115
    %119 = vmatprep.subr.bf16.mxu0 0
    %120 = vmatpush1.bf16.msra.mxu0 0
    %121 = vmatprep.subr.bf16.mxu0 0
    %122 = vmatpush1.bf16.msra.mxu0 0
    %123 = vmatprep.subr.bf16.mxu0 0
    %124 = vmatpush1.bf16.msra.mxu0 0
    %125 = vmatprep.subr.bf16.mxu0 0
    %126 = vmatpush1.bf16.msra.mxu0 0
    %127 = vmatprep.subr.bf16.mxu0 0
    %128 = vmatpush1.bf16.msra.mxu0 0
    %129 = vmatprep.subr.bf16.mxu0 0
    %130 = vmatpush1.bf16.msra.mxu0 0
    %131 = vmatprep.subr.bf16.mxu0 0
    %132 = vmatpush1.bf16.msra.mxu0 0
    %133 = vmatprep.subr.bf16.mxu0 0
    %134 = vmatpush1.bf16.msra.mxu0 0
    %135 = vmatprep.subr.bf16.mxu0 0
    %136 = vmatpush1.bf16.msra.mxu0 0
    %137 = vmatprep.subr.bf16.mxu0 0
    %138 = vmatpush1.bf16.msra.mxu0 0
    %139 = vmatprep.subr.bf16.mxu0 0
    %140 = vmatpush1.bf16.msra.mxu0 0
    %141 = vmatprep.subr.bf16.mxu0 0
    %142 = vmatpush1.bf16.msra.mxu0 0
    %143 = vmatprep.subr.bf16.mxu0 0
    %144 = vmatpush1.bf16.msra.mxu0 0
    %145 = vmatprep.subr.bf16.mxu0 0
    %146 = vmatpush1.bf16.msra.mxu0 0
    %147 = vmatprep.subr.bf16.mxu0 0
    %148 = vmatpush1.bf16.msra.mxu0 0
    %149 = vmatprep.mubr.bf16.mxu0 0
    %150 = vmatmul.mubr.bf16.gmra.mrb[0].mxu0 %v90
    %v151 = vpop.f32.mrb[0].mxu0
    %v152 = vadd.f32 0.0, %v151
    %v153 = vpop.f32.mrb[0].mxu0
    %v154 = vpop.f32.mrb[0].mxu0
    %v155 = vadd.f32 0.0, %v154
    %v156 = vpop.f32.mrb[0].mxu0
    %157 = vmatprep.mubr.bf16.mxu0 0
    %158 = vmatmul.mubr.bf16.gmra.mrb[0].mxu0 %v93
    %v159 = vpop.f32.mrb[0].mxu0
    %v160 = vadd.f32 0.0, %v159
    %v161 = vpop.f32.mrb[0].mxu0
    %v162 = vpop.f32.mrb[0].mxu0
    %v163 = vadd.f32 0.0, %v162
    %v164 = vpop.f32.mrb[0].mxu0
    %165 = vmatprep.mubr.bf16.mxu0 0
    %166 = vmatmul.mubr.bf16.gmra.mrb[0].mxu0 %v96
    %v167 = vpop.f32.mrb[0].mxu0
    %v168 = vadd.f32 0.0, %v167
    %v169 = vpop.f32.mrb[0].mxu0
    %v170 = vpop.f32.mrb[0].mxu0
    %v171 = vadd.f32 0.0, %v170
    %v172 = vpop.f32.mrb[0].mxu0
    %173 = vmatprep.mubr.bf16.mxu0 0
    %174 = vmatmul.mubr.bf16.gmra.mrb[0].mxu0 %v99
    %v175 = vpop.f32.mrb[0].mxu0
    %v176 = vadd.f32 0.0, %v175
    %v177 = vpop.f32.mrb[0].mxu0
    %v178 = vpop.f32.mrb[0].mxu0
    %v179 = vadd.f32 0.0, %v178
    %v180 = vpop.f32.mrb[0].mxu0
    %181 = vmatprep.mubr.bf16.mxu0 0
    %182 = vmatmul.mubr.bf16.gmra.mrb[0].mxu0 %v102
    %v183 = vpop.f32.mrb[0].mxu0
    %v184 = vadd.f32 0.0, %v183
    %v185 = vpop.f32.mrb[0].mxu0
    %v186 = vpop.f32.mrb[0].mxu0
    %v187 = vadd.f32 0.0, %v186
    %v188 = vpop.f32.mrb[0].mxu0
    %189 = vmatprep.mubr.bf16.mxu0 0
    %190 = vmatmul.mubr.bf16.gmra.mrb[0].mxu0 %v105
    %v191 = vpop.f32.mrb[0].mxu0
    %v192 = vadd.f32 0.0, %v191
    %v193 = vpop.f32.mrb[0].mxu0
    %v194 = vpop.f32.mrb[0].mxu0
    %v195 = vadd.f32 0.0, %v194
    %v196 = vpop.f32.mrb[0].mxu0
    %197 = vmatprep.mubr.bf16.mxu0 0
    %198 = vmatmul.mubr.bf16.gmra.mrb[0].mxu0 %v108
    %v199 = vpop.f32.mrb[0].mxu0
    %v200 = vadd.f32 0.0, %v199
    %v201 = vpop.f32.mrb[0].mxu0
    %v202 = vpop.f32.mrb[0].mxu0
    %v203 = vadd.f32 0.0, %v202
    %v204 = vpop.f32.mrb[0].mxu0
    %205 = vmatprep.mubr.bf16.mxu0 0
    %206 = vmatmul.mubr.bf16.gmra.mrb[0].mxu0 %v111
    %v207 = vpop.f32.mrb[0].mxu0
    %v208 = vadd.f32 0.0, %v207
    %v209 = vpop.f32.mrb[0].mxu0
    %v210 = vpop.f32.mrb[0].mxu0
    %v211 = vadd.f32 0.0, %v210
    %v212 = vpop.f32.mrb[0].mxu0
    %213 = vdwg.mxu0
    %v214 = vld [vmem:[%s2] sm:$0x1]
    %v216 = vlaneseq
    %v217 = vshrl.u32 %v216, 7
    %v218 = vsub.s32 0, %v217
    %v219 = vrot.slane %v214, %v218
    %v221 = vmul.f32 %v152, %v219
    %v222 = vmul.f32 %v155, %v219
    %v223 = vmul.f32 %v160, %v219
    %v224 = vmul.f32 %v163, %v219
    %v225 = vmul.f32 %v168, %v219
    %v226 = vmul.f32 %v171, %v219
    %v227 = vmul.f32 %v176, %v219
    %v228 = vmul.f32 %v179, %v219
    %v229 = vmul.f32 %v184, %v219
    %v230 = vmul.f32 %v187, %v219
    %v231 = vmul.f32 %v192, %v219
    %v232 = vmul.f32 %v195, %v219
    %v233 = vmul.f32 %v200, %v219
    %v234 = vmul.f32 %v203, %v219
    %v235 = vmul.f32 %v208, %v219
    %v236 = vmul.f32 %v211, %v219
    %v237 = vld [vmem:[%s3] sm:$0x1]
    %v239 = vlaneseq
    %v240 = vshrl.u32 %v239, 7
    %v241 = vsub.s32 0, %v240
    %v242 = vrot.slane %v237, %v241
    %v244 = vadd.f32 %v221, %v242
    %v245 = vadd.f32 %v222, %v242
    %v246 = vadd.f32 %v223, %v242
    %v247 = vadd.f32 %v224, %v242
    %v248 = vadd.f32 %v225, %v242
    %v249 = vadd.f32 %v226, %v242
    %v250 = vadd.f32 %v227, %v242
    %v251 = vadd.f32 %v228, %v242
    %v252 = vadd.f32 %v229, %v242
    %v253 = vadd.f32 %v230, %v242
    %v254 = vadd.f32 %v231, %v242
    %v255 = vadd.f32 %v232, %v242
    %v256 = vadd.f32 %v233, %v242
    %v257 = vadd.f32 %v234, %v242
    %v258 = vadd.f32 %v235, %v242
    %v259 = vadd.f32 %v236, %v242
    %v260 = vld [vmem:[%s4] sm:$0xf]
    %v261 = vld [vmem:[%s4 + $0x4] sm:$0xf]
    %v262 = vld [vmem:[%s4 + $0x8] sm:$0xf]
    %v263 = vld [vmem:[%s4 + $0xc] sm:$0xf]
    %v264 = vld [vmem:[%s4 + $0x10] sm:$0xf]
    %v265 = vld [vmem:[%s4 + $0x14] sm:$0xf]
    %v266 = vld [vmem:[%s4 + $0x18] sm:$0xf]
    %v267 = vld [vmem:[%s4 + $0x1c] sm:$0xf]
    %v268 = vld [vmem:[%s4 + $0x20] sm:$0xf]
    %v269 = vld [vmem:[%s4 + $0x24] sm:$0xf]
    %v270 = vld [vmem:[%s4 + $0x28] sm:$0xf]
    %v271 = vld [vmem:[%s4 + $0x2c] sm:$0xf]
    %v272 = vld [vmem:[%s4 + $0x30] sm:$0xf]
    %v273 = vld [vmem:[%s4 + $0x34] sm:$0xf]
    %v274 = vld [vmem:[%s4 + $0x38] sm:$0xf]
    %v275 = vld [vmem:[%s4 + $0x3c] sm:$0xf]
    %v276 = vld [vmem:[%s5] sm:$0xf]
    %v293 = vunpack.c.l.b16 %v260
    %v294 = vunpack.c.l.b16 %v261
    %v295 = vunpack.c.l.b16 %v262
    %v296 = vunpack.c.l.b16 %v263
    %v297 = vunpack.c.l.b16 %v264
    %v298 = vunpack.c.l.b16 %v265
    %v299 = vunpack.c.l.b16 %v266
    %v300 = vunpack.c.l.b16 %v267
    %v301 = vunpack.c.l.b16 %v268
    %v302 = vunpack.c.l.b16 %v269
    %v303 = vunpack.c.l.b16 %v270
    %v304 = vunpack.c.l.b16 %v271
    %v305 = vunpack.c.l.b16 %v272
    %v306 = vunpack.c.l.b16 %v273
    %v307 = vunpack.c.l.b16 %v274
    %v308 = vunpack.c.l.b16 %v275
    %v309 = vpack.c.b16 %v294, %v293
    %v310 = vpack.c.b16 %v296, %v295
    %v311 = vpack.c.b16 %v298, %v297
    %v312 = vpack.c.b16 %v300, %v299
    %v313 = vpack.c.b16 %v302, %v301
    %v314 = vpack.c.b16 %v304, %v303
    %v315 = vpack.c.b16 %v306, %v305
    %v316 = vpack.c.b16 %v308, %v307
    %vm317 = vcmask 64512
    %v319 = vsel %vm317, %v309, 0
    %v322 = vsel %vm317, %v310, 0
    %v325 = vsel %vm317, %v311, 0
    %v328 = vsel %vm317, %v312, 0
    %v331 = vsel %vm317, %v313, 0
    %v334 = vsel %vm317, %v314, 0
    %v337 = vsel %vm317, %v315, 0
    %v340 = vsel %vm317, %v316, 0
    %vm342 = vcmask 1043456
    %v344 = vsel %vm342, %v276, 0
    %346 = vmatprep.subr.bf16.mxu0 0
    %347 = vmatpush1.bf16.msra.mxu0 %v344
    %348 = vmatprep.subr.bf16.mxu0 0
    %349 = vmatpush1.bf16.msra.mxu0 0
    %350 = vmatprep.subr.bf16.mxu0 0
    %351 = vmatpush1.bf16.msra.mxu0 0
    %352 = vmatprep.subr.bf16.mxu0 0
    %353 = vmatpush1.bf16.msra.mxu0 0
    %354 = vmatprep.subr.bf16.mxu0 0
    %355 = vmatpush1.bf16.msra.mxu0 0
    %356 = vmatprep.subr.bf16.mxu0 0
    %357 = vmatpush1.bf16.msra.mxu0 0
    %358 = vmatprep.subr.bf16.mxu0 0
    %359 = vmatpush1.bf16.msra.mxu0 0
    %360 = vmatprep.subr.bf16.mxu0 0
    %361 = vmatpush1.bf16.msra.mxu0 0
    %362 = vmatprep.subr.bf16.mxu0 0
    %363 = vmatpush1.bf16.msra.mxu0 0
    %364 = vmatprep.subr.bf16.mxu0 0
    %365 = vmatpush1.bf16.msra.mxu0 0
    %366 = vmatprep.subr.bf16.mxu0 0
    %367 = vmatpush1.bf16.msra.mxu0 0
    %368 = vmatprep.subr.bf16.mxu0 0
    %369 = vmatpush1.bf16.msra.mxu0 0
    %370 = vmatprep.subr.bf16.mxu0 0
    %371 = vmatpush1.bf16.msra.mxu0 0
    %372 = vmatprep.subr.bf16.mxu0 0
    %373 = vmatpush1.bf16.msra.mxu0 0
    %374 = vmatprep.subr.bf16.mxu0 0
    %375 = vmatpush1.bf16.msra.mxu0 0
    %376 = vmatprep.subr.bf16.mxu0 0
    %377 = vmatpush1.bf16.msra.mxu0 0
    %378 = vmatprep.mubr.bf16.mxu0 0
    %379 = vmatmul.mubr.bf16.gmra.mrb[0].mxu0 %v319
    %v380 = vpop.f32.mrb[0].mxu0
    %v381 = vadd.f32 0.0, %v380
    %v382 = vpop.f32.mrb[0].mxu0
    %v383 = vpop.f32.mrb[0].mxu0
    %v384 = vadd.f32 0.0, %v383
    %v385 = vpop.f32.mrb[0].mxu0
    %386 = vmatprep.mubr.bf16.mxu0 0
    %387 = vmatmul.mubr.bf16.gmra.mrb[0].mxu0 %v322
    %v388 = vpop.f32.mrb[0].mxu0
    %v389 = vadd.f32 0.0, %v388
    %v390 = vpop.f32.mrb[0].mxu0
    %v391 = vpop.f32.mrb[0].mxu0
    %v392 = vadd.f32 0.0, %v391
    %v393 = vpop.f32.mrb[0].mxu0
    %394 = vmatprep.mubr.bf16.mxu0 0
    %395 = vmatmul.mubr.bf16.gmra.mrb[0].mxu0 %v325
    %v396 = vpop.f32.mrb[0].mxu0
    %v397 = vadd.f32 0.0, %v396
    %v398 = vpop.f32.mrb[0].mxu0
    %v399 = vpop.f32.mrb[0].mxu0
    %v400 = vadd.f32 0.0, %v399
    %v401 = vpop.f32.mrb[0].mxu0
    %402 = vmatprep.mubr.bf16.mxu0 0
    %403 = vmatmul.mubr.bf16.gmra.mrb[0].mxu0 %v328
    %v404 = vpop.f32.mrb[0].mxu0
    %v405 = vadd.f32 0.0, %v404
    %v406 = vpop.f32.mrb[0].mxu0
    %v407 = vpop.f32.mrb[0].mxu0
    %v408 = vadd.f32 0.0, %v407
    %v409 = vpop.f32.mrb[0].mxu0
    %410 = vmatprep.mubr.bf16.mxu0 0
    %411 = vmatmul.mubr.bf16.gmra.mrb[0].mxu0 %v331
    %v412 = vpop.f32.mrb[0].mxu0
    %v413 = vadd.f32 0.0, %v412
    %v414 = vpop.f32.mrb[0].mxu0
    %v415 = vpop.f32.mrb[0].mxu0
    %v416 = vadd.f32 0.0, %v415
    %v417 = vpop.f32.mrb[0].mxu0
    %418 = vmatprep.mubr.bf16.mxu0 0
    %419 = vmatmul.mubr.bf16.gmra.mrb[0].mxu0 %v334
    %v420 = vpop.f32.mrb[0].mxu0
    %v421 = vadd.f32 0.0, %v420
    %v422 = vpop.f32.mrb[0].mxu0
    %v423 = vpop.f32.mrb[0].mxu0
    %v424 = vadd.f32 0.0, %v423
    %v425 = vpop.f32.mrb[0].mxu0
    %426 = vmatprep.mubr.bf16.mxu0 0
    %427 = vmatmul.mubr.bf16.gmra.mrb[0].mxu0 %v337
    %v428 = vpop.f32.mrb[0].mxu0
    %v429 = vadd.f32 0.0, %v428
    %v430 = vpop.f32.mrb[0].mxu0
    %v431 = vpop.f32.mrb[0].mxu0
    %v432 = vadd.f32 0.0, %v431
    %v433 = vpop.f32.mrb[0].mxu0
    %434 = vmatprep.mubr.bf16.mxu0 0
    %435 = vmatmul.mubr.bf16.gmra.mrb[0].mxu0 %v340
    %v436 = vpop.f32.mrb[0].mxu0
    %v437 = vadd.f32 0.0, %v436
    %v438 = vpop.f32.mrb[0].mxu0
    %v439 = vpop.f32.mrb[0].mxu0
    %v440 = vadd.f32 0.0, %v439
    %v441 = vpop.f32.mrb[0].mxu0
    %442 = vdwg.mxu0
    %v443 = vld [vmem:[%s6] sm:$0x1]
    %v445 = vlaneseq
    %v446 = vshrl.u32 %v445, 7
    %v447 = vsub.s32 0, %v446
    %v448 = vrot.slane %v443, %v447
    %v450 = vmul.f32 %v381, %v448
    %v451 = vmul.f32 %v384, %v448
    %v452 = vmul.f32 %v389, %v448
    %v453 = vmul.f32 %v392, %v448
    %v454 = vmul.f32 %v397, %v448
    %v455 = vmul.f32 %v400, %v448
    %v456 = vmul.f32 %v405, %v448
    %v457 = vmul.f32 %v408, %v448
    %v458 = vmul.f32 %v413, %v448
    %v459 = vmul.f32 %v416, %v448
    %v460 = vmul.f32 %v421, %v448
    %v461 = vmul.f32 %v424, %v448
    %v462 = vmul.f32 %v429, %v448
    %v463 = vmul.f32 %v432, %v448
    %v464 = vmul.f32 %v437, %v448
    %v465 = vmul.f32 %v440, %v448
    %v466 = vadd.f32 %v244, %v450
    %v467 = vadd.f32 %v245, %v451
    %v468 = vadd.f32 %v246, %v452
    %v469 = vadd.f32 %v247, %v453
    %v470 = vadd.f32 %v248, %v454
    %v471 = vadd.f32 %v249, %v455
    %v472 = vadd.f32 %v250, %v456
    %v473 = vadd.f32 %v251, %v457
    %v474 = vadd.f32 %v252, %v458
    %v475 = vadd.f32 %v253, %v459
    %v476 = vadd.f32 %v254, %v460
    %v477 = vadd.f32 %v255, %v461
    %v478 = vadd.f32 %v256, %v462
    %v479 = vadd.f32 %v257, %v463
    %v480 = vadd.f32 %v258, %v464
    %v481 = vadd.f32 %v259, %v465
    %v482 = vld [vmem:[%s7] sm:$0x1]
    %v484 = vlaneseq
    %v485 = vshrl.u32 %v484, 7
    %v486 = vsub.s32 0, %v485
    %v487 = vrot.slane %v482, %v486
    %v489 = vadd.f32 %v466, %v487
    %v490 = vadd.f32 %v467, %v487
    %v491 = vadd.f32 %v468, %v487
    %v492 = vadd.f32 %v469, %v487
    %v493 = vadd.f32 %v470, %v487
    %v494 = vadd.f32 %v471, %v487
    %v495 = vadd.f32 %v472, %v487
    %v496 = vadd.f32 %v473, %v487
    %v497 = vadd.f32 %v474, %v487
    %v498 = vadd.f32 %v475, %v487
    %v499 = vadd.f32 %v476, %v487
    %v500 = vadd.f32 %v477, %v487
    %v501 = vadd.f32 %v478, %v487
    %v502 = vadd.f32 %v479, %v487
    %v503 = vadd.f32 %v480, %v487
    %v504 = vadd.f32 %v481, %v487
    %v505 = vmax.f32 %v489, 0.0
    %v506 = vmax.f32 %v490, 0.0
    %v507 = vmax.f32 %v491, 0.0
    %v508 = vmax.f32 %v492, 0.0
    %v509 = vmax.f32 %v493, 0.0
    %v510 = vmax.f32 %v494, 0.0
    %v511 = vmax.f32 %v495, 0.0
    %v512 = vmax.f32 %v496, 0.0
    %v513 = vmax.f32 %v497, 0.0
    %v514 = vmax.f32 %v498, 0.0
    %v515 = vmax.f32 %v499, 0.0
    %v516 = vmax.f32 %v500, 0.0
    %v517 = vmax.f32 %v501, 0.0
    %v518 = vmax.f32 %v502, 0.0
    %v519 = vmax.f32 %v503, 0.0
    %v520 = vmax.f32 %v504, 0.0
    %vm521 = vcmask 130048
    %522 = vst.msk [vmem:[#allocation2] sm:$0xff] %vm521, %v505
    %523 = vst.msk [vmem:[#allocation2 + $0x8] sm:$0xff] %vm521, %v506
    %524 = vst.msk [vmem:[#allocation2 + $0x10] sm:$0xff] %vm521, %v507
    %525 = vst.msk [vmem:[#allocation2 + $0x18] sm:$0xff] %vm521, %v508
    %526 = vst.msk [vmem:[#allocation2 + $0x20] sm:$0xff] %vm521, %v509
    %527 = vst.msk [vmem:[#allocation2 + $0x28] sm:$0xff] %vm521, %v510
    %528 = vst.msk [vmem:[#allocation2 + $0x30] sm:$0xff] %vm521, %v511
    %529 = vst.msk [vmem:[#allocation2 + $0x38] sm:$0xff] %vm521, %v512
    %530 = vst.msk [vmem:[#allocation2 + $0x40] sm:$0xff] %vm521, %v513
    %531 = vst.msk [vmem:[#allocation2 + $0x48] sm:$0xff] %vm521, %v514
    %532 = vst.msk [vmem:[#allocation2 + $0x50] sm:$0xff] %vm521, %v515
    %533 = vst.msk [vmem:[#allocation2 + $0x58] sm:$0xff] %vm521, %v516
    %534 = vst.msk [vmem:[#allocation2 + $0x60] sm:$0xff] %vm521, %v517
    %535 = vst.msk [vmem:[#allocation2 + $0x68] sm:$0xff] %vm521, %v518
    %536 = vst.msk [vmem:[#allocation2 + $0x70] sm:$0xff] %vm521, %v519
    %537 = vst.msk [vmem:[#allocation2 + $0x78] sm:$0xff] %vm521, %v520
    // Predicated region
    $region34: #{bottleneck_forward.5} parent=1 // pred_check
      _
    $region35: #{bottleneck_forward.5} parent=1 // pred_check_branch
      %539 = sbr.rel (0) target = $region37
    $region36: #{bottleneck_forward.5} parent=1 // pred_region
      %s541 = ssub.s32 2048, 2048
      %542 = vsyncadd [#allocation3], %s541
      %s543 = sshll.u32 [#allocation2], 4
      %s544 = int_to_ptr.vmem [resolvable:$true] %s543
      %549 = dma.vmem_to_hbm [thread:$0]  %s544, 2048, %s8, [#allocation3], 128, 128, 8
    $region37: #{bottleneck_forward.5} parent=1 // pred_fallthru
      _
    // Predicated region
    $region38: #{bottleneck_forward.5} parent=1 // pred_check
      _
    $region39: #{bottleneck_forward.5} parent=1 // pred_check_branch
      %551 = sbr.rel (0) target = $region41
    $region40: #{bottleneck_forward.5} parent=1 // pred_region
      %552 = dma.done [#allocation3], 2048
    $region41: #{bottleneck_forward.5} parent=1 // pred_fallthru
      _
    %553 = vsyncpa [#allocation3], 1

// kernel: bottleneck_forward.4
$region0: #{bottleneck_forward.4}
  #allocation0 [shape = 'u32[]', space=smem, size = 0x4, offset = 0x4, fixed_abs, tag = 'smem constant byte address 0x4 - core index']
  #allocation1 [shape = 'u32[144,128]{1,0:T(1,128)}', space=vmem, size = 0x12000, scoped, tag = 'internal scratch']
  %s0 = inlined_call_operand.vmem [shape: bf16[2,2,2,9,17,4], index: 0, kind: input, shape index: {}]
  %s1 = inlined_call_operand.vmem [shape: bf16[9,4,4], index: 1, kind: input, shape index: {}]
  %s2 = inlined_call_operand.vmem [shape: f32[1,4], index: 2, kind: input, shape index: {}]
  %s3 = inlined_call_operand.vmem [shape: f32[1,4], index: 3, kind: input, shape index: {}]
  %s4 = inlined_call_operand.vmem [shape: bf16[2,8,8,4], index: 4, kind: output, shape index: {}]
  %s5 = sld [smem:[#allocation0]]
  $region49: #{bottleneck_forward.4} parent=0
    _
  %s7 = ssub.s32 1, %s5
  %s8 = scalar_select 0, %s7, %s5
  loop: start=0, step=1, limit=4
  $region2: #{bottleneck_forward.4} parent=0 // loop_pre_header
    _
  $region3: #{bottleneck_forward.4} parent=0 // loop_header
    %s10 = sphi 0, %s14
    %p11 = scmp.ge.s32.totalorder %s10, 4
    %s20 = sphi 0, %s22
    %s23 = sphi 0, %s20
    %s24 = sphi 0, %s23
    %s40 = sphi 0, %s24
    %s44 = sphi 0, %s44
    %s46 = sphi 0, %s44
    %s47 = sphi 0, %s46
    %s61 = sphi 0, %s47
    %s65 = sphi 0, %s65
    %s67 = sphi 0, %s65
    %s68 = sphi 0, %s67
    %s82 = sphi 0, %s68
    %s86 = sphi 0, %s86
    %s88 = sphi 0, %s86
    %s89 = sphi 0, %s88
    %s103 = sphi 0, %s89
    %s109 = sphi 0, %s111
    %s112 = sphi 0, %s109
    %s113 = sphi 0, %s112
    %s129 = sphi 0, %s113
  $region4: #{bottleneck_forward.4} parent=0 // loop_header_branch
    %13 = sbr.rel (%p11) target = $region8
  $region5: #{bottleneck_forward.4} parent=0 // loop_body
    %s15 = ssub.s32 %s10, 1
    %s16 = ssub.s32 %s10, 2
    %s17 = sadd.s32 %s10, 1
    %s18 = ssub.s32 %s10, %s17
    %p19 = scmp.eq.s32.totalorder %s18, 0
    %s21 = sadd.s32 %s20, 1
    %s22 = scalar_select %p19, %s20, %s21
    %p25 = pneg %p19
    %p26 = scmp.eq.s32.totalorder %s10, 1
    %p27 = por %p25, %p26
    %p28 = scmp.ne.s32.totalorder %s20, %s23
    %p29 = scmp.eq.s32.totalorder %s10, 0
    %p30 = por %p28, %p29
    %p31 = scmp.ne.s32.totalorder %s20, %s23
    %p32 = scmp.eq.s32.totalorder %s15, 1
    %p33 = por %p31, %p32
    %p34 = scmp.ne.s32.totalorder %s23, %s24
    %p35 = scmp.eq.s32.totalorder %s15, 0
    %p36 = por %p34, %p35
    %p37 = scmp.ne.s32.totalorder %s23, %s24
    %p38 = scmp.eq.s32.totalorder %s16, 1
    %p39 = por %p37, %p38
    %p41 = scmp.ne.s32.totalorder %s24, %s40
    %p42 = scmp.eq.s32.totalorder %s16, 0
    %p43 = por %p41, %p42
    %s45 = sadd.s32 %s44, 1
    %p48 = scmp.eq.s32.totalorder %s10, 1
    %p49 = scmp.ne.s32.totalorder %s44, %s46
    %p50 = scmp.eq.s32.totalorder %s10, 0
    %p51 = por %p49, %p50
    %p52 = scmp.ne.s32.totalorder %s44, %s46
    %p53 = scmp.eq.s32.totalorder %s15, 1
    %p54 = por %p52, %p53
    %p55 = scmp.ne.s32.totalorder %s46, %s47
    %p56 = scmp.eq.s32.totalorder %s15, 0
    %p57 = por %p55, %p56
    %p58 = scmp.ne.s32.totalorder %s46, %s47
    %p59 = scmp.eq.s32.totalorder %s16, 1
    %p60 = por %p58, %p59
    %p62 = scmp.ne.s32.totalorder %s47, %s61
    %p63 = scmp.eq.s32.totalorder %s16, 0
    %p64 = por %p62, %p63
    %s66 = sadd.s32 %s65, 1
    %p69 = scmp.eq.s32.totalorder %s10, 1
    %p70 = scmp.ne.s32.totalorder %s65, %s67
    %p71 = scmp.eq.s32.totalorder %s10, 0
    %p72 = por %p70, %p71
    %p73 = scmp.ne.s32.totalorder %s65, %s67
    %p74 = scmp.eq.s32.totalorder %s15, 1
    %p75 = por %p73, %p74
    %p76 = scmp.ne.s32.totalorder %s67, %s68
    %p77 = scmp.eq.s32.totalorder %s15, 0
    %p78 = por %p76, %p77
    %p79 = scmp.ne.s32.totalorder %s67, %s68
    %p80 = scmp.eq.s32.totalorder %s16, 1
    %p81 = por %p79, %p80
    %p83 = scmp.ne.s32.totalorder %s68, %s82
    %p84 = scmp.eq.s32.totalorder %s16, 0
    %p85 = por %p83, %p84
    %s87 = sadd.s32 %s86, 1
    %p90 = scmp.eq.s32.totalorder %s10, 1
    %p91 = scmp.ne.s32.totalorder %s86, %s88
    %p92 = scmp.eq.s32.totalorder %s10, 0
    %p93 = por %p91, %p92
    %p94 = scmp.ne.s32.totalorder %s86, %s88
    %p95 = scmp.eq.s32.totalorder %s15, 1
    %p96 = por %p94, %p95
    %p97 = scmp.ne.s32.totalorder %s88, %s89
    %p98 = scmp.eq.s32.totalorder %s15, 0
    %p99 = por %p97, %p98
    %p100 = scmp.ne.s32.totalorder %s88, %s89
    %p101 = scmp.eq.s32.totalorder %s16, 1
    %p102 = por %p100, %p101
    %p104 = scmp.ne.s32.totalorder %s89, %s103
    %p105 = scmp.eq.s32.totalorder %s16, 0
    %p106 = por %p104, %p105
    %s107 = ssub.s32 %s10, %s17
    %p108 = scmp.eq.s32.totalorder %s107, 0
    %s110 = sadd.s32 %s109, 1
    %s111 = scalar_select %p108, %s109, %s110
    %p114 = pneg %p108
    %p115 = scmp.eq.s32.totalorder %s10, 1
    %p116 = por %p114, %p115
    %p117 = scmp.ne.s32.totalorder %s109, %s112
    %p118 = scmp.eq.s32.totalorder %s10, 0
    %p119 = por %p117, %p118
    %p120 = scmp.ne.s32.totalorder %s109, %s112
    %p121 = scmp.eq.s32.totalorder %s15, 1
    %p122 = por %p120, %p121
    %p123 = scmp.ne.s32.totalorder %s112, %s113
    %p124 = scmp.eq.s32.totalorder %s15, 0
    %p125 = por %p123, %p124
    %p126 = scmp.ne.s32.totalorder %s112, %s113
    %p127 = scmp.eq.s32.totalorder %s16, 1
    %p128 = por %p126, %p127
    %p130 = scmp.ne.s32.totalorder %s113, %s129
    %p131 = scmp.eq.s32.totalorder %s16, 0
    %p132 = por %p130, %p131
    %p133 = scmp.le.s32.totalorder 1, %s10
    %p134 = scmp.lt.s32.totalorder %s10, 3
    %p135 = pnand %p133, %p134
    %p136 = pneg %p135
    // Predicated region
    $region9: #{bottleneck_forward.4} parent=5 // pred_check
      _
    $region10: #{bottleneck_forward.4} parent=5 // pred_check_branch
      %138 = sbr.rel (%p135) target = $region12
    $region11: #{bottleneck_forward.4} parent=5 // pred_region
      %s139 = ssub.s32 %s10, 1
      // Predicated region
      $region13: #{bottleneck_forward.4} parent=11 // pred_check
        %p140 = pneg %p57
      $region14: #{bottleneck_forward.4} parent=11 // pred_check_branch
        %142 = sbr.rel (%p140) target = $region16
      $region15: #{bottleneck_forward.4} parent=11 // pred_region
        _
      $region16: #{bottleneck_forward.4} parent=11 // pred_fallthru
        _
      // Predicated region
      $region17: #{bottleneck_forward.4} parent=11 // pred_check
        %p143 = pneg %p78
      $region18: #{bottleneck_forward.4} parent=11 // pred_check_branch
        %145 = sbr.rel (%p143) target = $region20
      $region19: #{bottleneck_forward.4} parent=11 // pred_region
        _
      $region20: #{bottleneck_forward.4} parent=11 // pred_fallthru
        _
      // Predicated region
      $region21: #{bottleneck_forward.4} parent=11 // pred_check
        %p146 = pneg %p99
      $region22: #{bottleneck_forward.4} parent=11 // pred_check_branch
        %148 = sbr.rel (%p146) target = $region24
      $region23: #{bottleneck_forward.4} parent=11 // pred_region
        _
      $region24: #{bottleneck_forward.4} parent=11 // pred_fallthru
        _
    $region12: #{bottleneck_forward.4} parent=5 // pred_fallthru
      _
    %p149 = scmp.lt.s32.totalorder %s10, 2
    // Predicated region
    $region25: #{bottleneck_forward.4} parent=5 // pred_check
      %p150 = pneg %p149
    $region26: #{bottleneck_forward.4} parent=5 // pred_check_branch
      %152 = sbr.rel (%p150) target = $region28
    $region27: #{bottleneck_forward.4} parent=5 // pred_region
      // Predicated region
      $region29: #{bottleneck_forward.4} parent=27 // pred_check
        %p153 = pneg %p30
      $region30: #{bottleneck_forward.4} parent=27 // pred_check_branch
        %155 = sbr.rel (%p153) target = $region32
      $region31: #{bottleneck_forward.4} parent=27 // pred_region
        %p156 = scmp.lt.s32.totalorder %s10, 1
        %s157 = scalar_select %p156, %s10, 1
        %s158 = smul.addr %s157, 108
        %s159 = smul.addr %s158, 4
        %s160 = scalar_lea.vmem %s0, %s159
      $region32: #{bottleneck_forward.4} parent=27 // pred_fallthru
        _
    $region28: #{bottleneck_forward.4} parent=5 // pred_fallthru
      _
    %p161 = scmp.le.s32.totalorder 1, %s10
    %p162 = scmp.lt.s32.totalorder %s10, 3
    %p163 = pnand %p161, %p162
    %p164 = pneg %p163
    // Predicated region
    $region33: #{bottleneck_forward.4} parent=5 // pred_check
      _
    $region34: #{bottleneck_forward.4} parent=5 // pred_check_branch
      %166 = sbr.rel (%p163) target = $region36
    $region35: #{bottleneck_forward.4} parent=5 // pred_region
      %s167 = ssub.s32 %s10, 1
      %p168 = scmp.lt.s32.totalorder %s15, 1
      %s169 = scalar_select %p168, %s15, 1
      %s170 = smul.addr %s169, 108
      %s171 = smul.addr %s170, 4
      %s172 = scalar_lea.vmem %s0, %s171
      %p173 = pneg %p36
      %p174 = pneg %p33
      %p175 = pneg %p57
      %p176 = pneg %p54
      %p177 = pneg %p78
      %p178 = pneg %p75
      %p179 = pneg %p99
      %p180 = pneg %p96
      %p181 = pneg %p125
      %p182 = pneg %p122
      %p183 = scmp.lt.s32.totalorder %s15, 1
      %s184 = scalar_select %p183, %s15, 1
      %s185 = smul.addr %s184, 8
      %s186 = smul.addr %s185, 4
      %s187 = scalar_lea.vmem %s4, %s186
      %p188 = scmp.lt.s32.totalorder %s15, 1
      %s189 = scalar_select %p188, %s15, 1
      %s190 = smul.addr %s189, 108
      %s191 = smul.addr %s190, 4
      %s192 = scalar_lea.vmem %s0, %s191
      %p193 = scmp.lt.s32.totalorder %s15, 1
      %s194 = scalar_select %p193, %s15, 1
      %s195 = smul.addr %s194, 8
      %s196 = smul.addr %s195, 4
      %s197 = scalar_lea.vmem %s4, %s196
      %v199 = vld [vmem:[%s192] sm:$0xf]
      %v200 = vld [vmem:[%s192 + $0x4] sm:$0xf]
      %v201 = vld [vmem:[%s192 + $0xc] sm:$0xf]
      %v202 = vld [vmem:[%s192 + $0x10] sm:$0xf]
      %v203 = vld [vmem:[%s192 + $0x18] sm:$0xf]
      %v204 = vld [vmem:[%s192 + $0x1c] sm:$0xf]
      %v205 = vld [vmem:[%s192 + $0x24] sm:$0xf]
      %v206 = vld [vmem:[%s192 + $0x28] sm:$0xf]
      %v207 = vld [vmem:[%s192 + $0x30] sm:$0xf]
      %v208 = vld [vmem:[%s192 + $0x34] sm:$0xf]
      %v209 = vld [vmem:[%s192 + $0x3c] sm:$0xf]
      %v210 = vld [vmem:[%s192 + $0x40] sm:$0xf]
      %v211 = vld [vmem:[%s192 + $0x48] sm:$0xf]
      %v212 = vld [vmem:[%s192 + $0x4c] sm:$0xf]
      %v213 = vld [vmem:[%s192 + $0x54] sm:$0xf]
      %v214 = vld [vmem:[%s192 + $0x58] sm:$0xf]
      %v215 = vld [vmem:[%s1] sm:$0x3]
      %s216 = scalar_lea.vmem %s192, 108
      %v217 = vld [vmem:[%s216] sm:$0xf]
      %v218 = vld [vmem:[%s216 + $0x4] sm:$0xf]
      %v219 = vld [vmem:[%s216 + $0xc] sm:$0xf]
      %v220 = vld [vmem:[%s216 + $0x10] sm:$0xf]
      %v221 = vld [vmem:[%s216 + $0x18] sm:$0xf]
      %v222 = vld [vmem:[%s216 + $0x1c] sm:$0xf]
      %v223 = vld [vmem:[%s216 + $0x24] sm:$0xf]
      %v224 = vld [vmem:[%s216 + $0x28] sm:$0xf]
      %v225 = vld [vmem:[%s216 + $0x30] sm:$0xf]
      %v226 = vld [vmem:[%s216 + $0x34] sm:$0xf]
      %v227 = vld [vmem:[%s216 + $0x3c] sm:$0xf]
      %v228 = vld [vmem:[%s216 + $0x40] sm:$0xf]
      %v229 = vld [vmem:[%s216 + $0x48] sm:$0xf]
      %v230 = vld [vmem:[%s216 + $0x4c] sm:$0xf]
      %v231 = vld [vmem:[%s216 + $0x54] sm:$0xf]
      %v232 = vld [vmem:[%s216 + $0x58] sm:$0xf]
      %s233 = scalar_lea.vmem %s1, 2
      %v234 = vld [vmem:[%s233] sm:$0x3]
      %v251 = vunpack.c.l.b16 %v217
      %v252 = vunpack.c.l.b16 %v218
      %v253 = vunpack.c.l.b16 %v219
      %v254 = vunpack.c.l.b16 %v220
      %v255 = vunpack.c.l.b16 %v221
      %v256 = vunpack.c.l.b16 %v222
      %v257 = vunpack.c.l.b16 %v223
      %v258 = vunpack.c.l.b16 %v224
      %v259 = vunpack.c.l.b16 %v225
      %v260 = vunpack.c.l.b16 %v226
      %v261 = vunpack.c.l.b16 %v227
      %v262 = vunpack.c.l.b16 %v228
      %v263 = vunpack.c.l.b16 %v229
      %v264 = vunpack.c.l.b16 %v230
      %v265 = vunpack.c.l.b16 %v231
      %v266 = vunpack.c.l.b16 %v232
      %v267 = vpack.c.b16 %v252, %v251
      %v268 = vpack.c.b16 %v254, %v253
      %v269 = vpack.c.b16 %v256, %v255
      %v270 = vpack.c.b16 %v258, %v257
      %v271 = vpack.c.b16 %v260, %v259
      %v272 = vpack.c.b16 %v262, %v261
      %v273 = vpack.c.b16 %v264, %v263
      %v274 = vpack.c.b16 %v266, %v265
      %vm275 = vcmask 31744
      %v277 = vsel %vm275, %v267, 0
      %v280 = vsel %vm275, %v268, 0
      %v283 = vsel %vm275, %v269, 0
      %v286 = vsel %vm275, %v270, 0
      %v289 = vsel %vm275, %v271, 0
      %v292 = vsel %vm275, %v272, 0
      %v295 = vsel %vm275, %v273, 0
      %v298 = vsel %vm275, %v274, 0
      %vm300 = vcmask 1041408
      %v302 = vsel %vm300, %v234, 0
      %304 = vmatprep.subr.bf16.mxu0 0
      %305 = vmatpush1.bf16.msra.mxu0 %v302
      %306 = vmatprep.subr.bf16.mxu0 0
      %307 = vmatpush1.bf16.msra.mxu0 0
      %308 = vmatprep.subr.bf16.mxu0 0
      %309 = vmatpush1.bf16.msra.mxu0 0
      %310 = vmatprep.subr.bf16.mxu0 0
      %311 = vmatpush1.bf16.msra.mxu0 0
      %312 = vmatprep.subr.bf16.mxu0 0
      %313 = vmatpush1.bf16.msra.mxu0 0
      %314 = vmatprep.subr.bf16.mxu0 0
      %315 = vmatpush1.bf16.msra.mxu0 0
      %316 = vmatprep.subr.bf16.mxu0 0
      %317 = vmatpush1.bf16.msra.mxu0 0
      %318 = vmatprep.subr.bf16.mxu0 0
      %319 = vmatpush1.bf16.msra.mxu0 0
      %320 = vmatprep.subr.bf16.mxu0 0
      %321 = vmatpush1.bf16.msra.mxu0 0
      %322 = vmatprep.subr.bf16.mxu0 0
      %323 = vmatpush1.bf16.msra.mxu0 0
      %324 = vmatprep.subr.bf16.mxu0 0
      %325 = vmatpush1.bf16.msra.mxu0 0
      %326 = vmatprep.subr.bf16.mxu0 0
      %327 = vmatpush1.bf16.msra.mxu0 0
      %328 = vmatprep.subr.bf16.mxu0 0
      %329 = vmatpush1.bf16.msra.mxu0 0
      %330 = vmatprep.subr.bf16.mxu0 0
      %331 = vmatpush1.bf16.msra.mxu0 0
      %332 = vmatprep.subr.bf16.mxu0 0
      %333 = vmatpush1.bf16.msra.mxu0 0
      %334 = vmatprep.subr.bf16.mxu0 0
      %335 = vmatpush1.bf16.msra.mxu0 0
      %336 = vmatprep.mubr.bf16.mxu0 0
      %337 = vmatmul.mubr.bf16.gmra.mrb[0].mxu0 %v277
      %v338 = vpop.f32.mrb[0].mxu0
      %v339 = vadd.f32 0.0, %v338
      %v340 = vpop.f32.mrb[0].mxu0
      %v341 = vpop.f32.mrb[0].mxu0
      %v342 = vpop.f32.mrb[0].mxu0
      %343 = vmatprep.mubr.bf16.mxu0 0
      %344 = vmatmul.mubr.bf16.gmra.mrb[0].mxu0 %v280
      %v345 = vpop.f32.mrb[0].mxu0
      %v346 = vadd.f32 0.0, %v345
      %v347 = vpop.f32.mrb[0].mxu0
      %v348 = vpop.f32.mrb[0].mxu0
      %v349 = vpop.f32.mrb[0].mxu0
      %350 = vmatprep.mubr.bf16.mxu0 0
      %351 = vmatmul.mubr.bf16.gmra.mrb[0].mxu0 %v283
      %v352 = vpop.f32.mrb[0].mxu0
      %v353 = vadd.f32 0.0, %v352
      %v354 = vpop.f32.mrb[0].mxu0
      %v355 = vpop.f32.mrb[0].mxu0
      %v356 = vpop.f32.mrb[0].mxu0
      %357 = vmatprep.mubr.bf16.mxu0 0
      %358 = vmatmul.mubr.bf16.gmra.mrb[0].mxu0 %v286
      %v359 = vpop.f32.mrb[0].mxu0
      %v360 = vadd.f32 0.0, %v359
      %v361 = vpop.f32.mrb[0].mxu0
      %v362 = vpop.f32.mrb[0].mxu0
      %v363 = vpop.f32.mrb[0].mxu0
      %364 = vmatprep.mubr.bf16.mxu0 0
      %365 = vmatmul.mubr.bf16.gmra.mrb[0].mxu0 %v289
      %v366 = vpop.f32.mrb[0].mxu0
      %v367 = vadd.f32 0.0, %v366
      %v368 = vpop.f32.mrb[0].mxu0
      %v369 = vpop.f32.mrb[0].mxu0
      %v370 = vpop.f32.mrb[0].mxu0
      %371 = vmatprep.mubr.bf16.mxu0 0
      %372 = vmatmul.mubr.bf16.gmra.mrb[0].mxu0 %v292
      %v373 = vpop.f32.mrb[0].mxu0
      %v374 = vadd.f32 0.0, %v373
      %v375 = vpop.f32.mrb[0].mxu0
      %v376 = vpop.f32.mrb[0].mxu0
      %v377 = vpop.f32.mrb[0].mxu0
      %378 = vmatprep.mubr.bf16.mxu0 0
      %379 = vmatmul.mubr.bf16.gmra.mrb[0].mxu0 %v295
      %v380 = vpop.f32.mrb[0].mxu0
      %v381 = vadd.f32 0.0, %v380
      %v382 = vpop.f32.mrb[0].mxu0
      %v383 = vpop.f32.mrb[0].mxu0
      %v384 = vpop.f32.mrb[0].mxu0
      %385 = vmatprep.mubr.bf16.mxu0 0
      %386 = vmatmul.mubr.bf16.gmra.mrb[0].mxu0 %v298
      %v387 = vpop.f32.mrb[0].mxu0
      %v388 = vadd.f32 0.0, %v387
      %v389 = vpop.f32.mrb[0].mxu0
      %v390 = vpop.f32.mrb[0].mxu0
      %v391 = vpop.f32.mrb[0].mxu0
      %392 = vdwg.mxu0
      %v409 = vunpack.c.l.b16 %v199
      %v410 = vunpack.c.l.b16 %v200
      %v411 = vunpack.c.l.b16 %v201
      %v412 = vunpack.c.l.b16 %v202
      %v413 = vunpack.c.l.b16 %v203
      %v414 = vunpack.c.l.b16 %v204
      %v415 = vunpack.c.l.b16 %v205
      %v416 = vunpack.c.l.b16 %v206
      %v417 = vunpack.c.l.b16 %v207
      %v418 = vunpack.c.l.b16 %v208
      %v419 = vunpack.c.l.b16 %v209
      %v420 = vunpack.c.l.b16 %v210
      %v421 = vunpack.c.l.b16 %v211
      %v422 = vunpack.c.l.b16 %v212
      %v423 = vunpack.c.l.b16 %v213
      %v424 = vunpack.c.l.b16 %v214
      %v425 = vpack.c.b16 %v410, %v409
      %v426 = vpack.c.b16 %v412, %v411
      %v427 = vpack.c.b16 %v414, %v413
      %v428 = vpack.c.b16 %v416, %v415
      %v429 = vpack.c.b16 %v418, %v417
      %v430 = vpack.c.b16 %v420, %v419
      %v431 = vpack.c.b16 %v422, %v421
      %v432 = vpack.c.b16 %v424, %v423
      %v434 = vsel %vm275, %v425, 0
      %v437 = vsel %vm275, %v426, 0
      %v440 = vsel %vm275, %v427, 0
      %v443 = vsel %vm275, %v428, 0
      %v446 = vsel %vm275, %v429, 0
      %v449 = vsel %vm275, %v430, 0
      %v452 = vsel %vm275, %v431, 0
      %v455 = vsel %vm275, %v432, 0
      %v458 = vsel %vm300, %v215, 0
      %460 = vmatprep.subr.bf16.mxu0 0
      %461 = vmatpush1.bf16.msra.mxu0 %v458
      %462 = vmatprep.subr.bf16.mxu0 0
      %463 = vmatpush1.bf16.msra.mxu0 0
      %464 = vmatprep.subr.bf16.mxu0 0
      %465 = vmatpush1.bf16.msra.mxu0 0
      %466 = vmatprep.subr.bf16.mxu0 0
      %467 = vmatpush1.bf16.msra.mxu0 0
      %468 = vmatprep.subr.bf16.mxu0 0
      %469 = vmatpush1.bf16.msra.mxu0 0
      %470 = vmatprep.subr.bf16.mxu0 0
      %471 = vmatpush1.bf16.msra.mxu0 0
      %472 = vmatprep.subr.bf16.mxu0 0
      %473 = vmatpush1.bf16.msra.mxu0 0
      %474 = vmatprep.subr.bf16.mxu0 0
      %475 = vmatpush1.bf16.msra.mxu0 0
      %476 = vmatprep.subr.bf16.mxu0 0
      %477 = vmatpush1.bf16.msra.mxu0 0
      %478 = vmatprep.subr.bf16.mxu0 0
      %479 = vmatpush1.bf16.msra.mxu0 0
      %480 = vmatprep.subr.bf16.mxu0 0
      %481 = vmatpush1.bf16.msra.mxu0 0
      %482 = vmatprep.subr.bf16.mxu0 0
      %483 = vmatpush1.bf16.msra.mxu0 0
      %484 = vmatprep.subr.bf16.mxu0 0
      %485 = vmatpush1.bf16.msra.mxu0 0
      %486 = vmatprep.subr.bf16.mxu0 0
      %487 = vmatpush1.bf16.msra.mxu0 0
      %488 = vmatprep.subr.bf16.mxu0 0
      %489 = vmatpush1.bf16.msra.mxu0 0
      %490 = vmatprep.subr.bf16.mxu0 0
      %491 = vmatpush1.bf16.msra.mxu0 0
      %492 = vmatprep.mubr.bf16.mxu0 0
      %493 = vmatmul.mubr.bf16.gmra.mrb[0].mxu0 %v434
      %v494 = vpop.f32.mrb[0].mxu0
      %v495 = vadd.f32 %v339, %v494
      %v496 = vpop.f32.mrb[0].mxu0
      %v497 = vpop.f32.mrb[0].mxu0
      %v498 = vpop.f32.mrb[0].mxu0
      %499 = vmatprep.mubr.bf16.mxu0 0
      %500 = vmatmul.mubr.bf16.gmra.mrb[0].mxu0 %v437
      %v501 = vpop.f32.mrb[0].mxu0
      %v502 = vadd.f32 %v346, %v501
      %v503 = vpop.f32.mrb[0].mxu0
      %v504 = vpop.f32.mrb[0].mxu0
      %v505 = vpop.f32.mrb[0].mxu0
      %506 = vmatprep.mubr.bf16.mxu0 0
      %507 = vmatmul.mubr.bf16.gmra.mrb[0].mxu0 %v440
      %v508 = vpop.f32.mrb[0].mxu0
      %v509 = vadd.f32 %v353, %v508
      %v510 = vpop.f32.mrb[0].mxu0
      %v511 = vpop.f32.mrb[0].mxu0
      %v512 = vpop.f32.mrb[0].mxu0
      %513 = vmatprep.mubr.bf16.mxu0 0
      %514 = vmatmul.mubr.bf16.gmra.mrb[0].mxu0 %v443
      %v515 = vpop.f32.mrb[0].mxu0
      %v516 = vadd.f32 %v360, %v515
      %v517 = vpop.f32.mrb[0].mxu0
      %v518 = vpop.f32.mrb[0].mxu0
      %v519 = vpop.f32.mrb[0].mxu0
      %520 = vmatprep.mubr.bf16.mxu0 0
      %521 = vmatmul.mubr.bf16.gmra.mrb[0].mxu0 %v446
      %v522 = vpop.f32.mrb[0].mxu0
      %v523 = vadd.f32 %v367, %v522
      %v524 = vpop.f32.mrb[0].mxu0
      %v525 = vpop.f32.mrb[0].mxu0
      %v526 = vpop.f32.mrb[0].mxu0
      %527 = vmatprep.mubr.bf16.mxu0 0
      %528 = vmatmul.mubr.bf16.gmra.mrb[0].mxu0 %v449
      %v529 = vpop.f32.mrb[0].mxu0
      %v530 = vadd.f32 %v374, %v529
      %v531 = vpop.f32.mrb[0].mxu0
      %v532 = vpop.f32.mrb[0].mxu0
      %v533 = vpop.f32.mrb[0].mxu0
      %534 = vmatprep.mubr.bf16.mxu0 0
      %535 = vmatmul.mubr.bf16.gmra.mrb[0].mxu0 %v452
      %v536 = vpop.f32.mrb[0].mxu0
      %v537 = vadd.f32 %v381, %v536
      %v538 = vpop.f32.mrb[0].mxu0
      %v539 = vpop.f32.mrb[0].mxu0
      %v540 = vpop.f32.mrb[0].mxu0
      %541 = vmatprep.mubr.bf16.mxu0 0
      %542 = vmatmul.mubr.bf16.gmra.mrb[0].mxu0 %v455
      %v543 = vpop.f32.mrb[0].mxu0
      %v544 = vadd.f32 %v388, %v543
      %v545 = vpop.f32.mrb[0].mxu0
      %v546 = vpop.f32.mrb[0].mxu0
      %v547 = vpop.f32.mrb[0].mxu0
      %548 = vdwg.mxu0
      %v549 = vld [vmem:[%s192] sm:$0xf]
      %v550 = vld [vmem:[%s192 + $0x4] sm:$0xf]
      %v551 = vld [vmem:[%s192 + $0x8] sm:$0x1]
      %v552 = vld [vmem:[%s192 + $0xc] sm:$0xf]
      %v553 = vld [vmem:[%s192 + $0x10] sm:$0xf]
      %v554 = vld [vmem:[%s192 + $0x14] sm:$0x1]
      %v555 = vld [vmem:[%s192 + $0x18] sm:$0xf]
      %v556 = vld [vmem:[%s192 + $0x1c] sm:$0xf]
      %v557 = vld [vmem:[%s192 + $0x20] sm:$0x1]
      %v558 = vld [vmem:[%s192 + $0x24] sm:$0xf]
      %v559 = vld [vmem:[%s192 + $0x28] sm:$0xf]
      %v560 = vld [vmem:[%s192 + $0x2c] sm:$0x1]
      %v561 = vld [vmem:[%s192 + $0x30] sm:$0xf]
      %v562 = vld [vmem:[%s192 + $0x34] sm:$0xf]
      %v563 = vld [vmem:[%s192 + $0x38] sm:$0x1]
      %v564 = vld [vmem:[%s192 + $0x3c] sm:$0xf]
      %v565 = vld [vmem:[%s192 + $0x40] sm:$0xf]
      %v566 = vld [vmem:[%s192 + $0x44] sm:$0x1]
      %v567 = vld [vmem:[%s192 + $0x48] sm:$0xf]
      %v568 = vld [vmem:[%s192 + $0x4c] sm:$0xf]
      %v569 = vld [vmem:[%s192 + $0x50] sm:$0x1]
      %v570 = vld [vmem:[%s192 + $0x54] sm:$0xf]
      %v571 = vld [vmem:[%s192 + $0x58] sm:$0xf]
      %v572 = vld [vmem:[%s192 + $0x5c] sm:$0x1]
      %vm573 = vsmask.f32 3328
      %vm574 = vsmask.f32 7440
      %vm575 = vmor %vm573, %vm574
      %v577 = vshrl.u32 %v549, 16
      %v579 = vrot.slane %v577, 4
      %v580 = vshll.u32 %v549, 16
      %v582 = vrot.slane %v580, 5
      %v583 = vor.u32 %v579, %v582
      %v584 = vrot.slane %v583, 4
      %v586 = vshll.u32 %v550, 16
      %v588 = vrot.slane %v586, 5
      %v589 = vsel %vm575, %v584, %v588
      %v590 = vshrl.u32 %v550, 16
      %v592 = vrot.slane %v590, 4
      %v593 = vor.u32 %v592, %v588
      %v594 = vrot.slane %v593, 4
      %v596 = vshll.u32 %v551, 16
      %v598 = vrot.slane %v596, 5
      %v599 = vsel %vm575, %v594, %v598
      %v601 = vshrl.u32 %v552, 16
      %v603 = vrot.slane %v601, 4
      %v604 = vshll.u32 %v552, 16
      %v606 = vrot.slane %v604, 5
      %v607 = vor.u32 %v603, %v606
      %v608 = vrot.slane %v607, 4
      %v610 = vshll.u32 %v553, 16
      %v612 = vrot.slane %v610, 5
      %v613 = vsel %vm575, %v608, %v612
      %v614 = vshrl.u32 %v553, 16
      %v616 = vrot.slane %v614, 4
      %v617 = vor.u32 %v616, %v612
      %v618 = vrot.slane %v617, 4
      %v620 = vshll.u32 %v554, 16
      %v622 = vrot.slane %v620, 5
      %v623 = vsel %vm575, %v618, %v622
      %v625 = vshrl.u32 %v555, 16
      %v627 = vrot.slane %v625, 4
      %v628 = vshll.u32 %v555, 16
      %v630 = vrot.slane %v628, 5
      %v631 = vor.u32 %v627, %v630
      %v632 = vrot.slane %v631, 4
      %v634 = vshll.u32 %v556, 16
      %v636 = vrot.slane %v634, 5
      %v637 = vsel %vm575, %v632, %v636
      %v638 = vshrl.u32 %v556, 16
      %v640 = vrot.slane %v638, 4
      %v641 = vor.u32 %v640, %v636
      %v642 = vrot.slane %v641, 4
      %v644 = vshll.u32 %v557, 16
      %v646 = vrot.slane %v644, 5
      %v647 = vsel %vm575, %v642, %v646
      %v649 = vshrl.u32 %v558, 16
      %v651 = vrot.slane %v649, 4
      %v652 = vshll.u32 %v558, 16
      %v654 = vrot.slane %v652, 5
      %v655 = vor.u32 %v651, %v654
      %v656 = vrot.slane %v655, 4
      %v658 = vshll.u32 %v559, 16
      %v660 = vrot.slane %v658, 5
      %v661 = vsel %vm575, %v656, %v660
      %v662 = vshrl.u32 %v559, 16
      %v664 = vrot.slane %v662, 4
      %v665 = vor.u32 %v664, %v660
      %v666 = vrot.slane %v665, 4
      %v668 = vshll.u32 %v560, 16
      %v670 = vrot.slane %v668, 5
      %v671 = vsel %vm575, %v666, %v670
      %v673 = vshrl.u32 %v561, 16
      %v675 = vrot.slane %v673, 4
      %v676 = vshll.u32 %v561, 16
      %v678 = vrot.slane %v676, 5
      %v679 = vor.u32 %v675, %v678
      %v680 = vrot.slane %v679, 4
      %v682 = vshll.u32 %v562, 16
      %v684 = vrot.slane %v682, 5
      %v685 = vsel %vm575, %v680, %v684
      %v686 = vshrl.u32 %v562, 16
      %v688 = vrot.slane %v686, 4
      %v689 = vor.u32 %v688, %v684
      %v690 = vrot.slane %v689, 4
      %v692 = vshll.u32 %v563, 16
      %v694 = vrot.slane %v692, 5
      %v695 = vsel %vm575, %v690, %v694
      %v697 = vshrl.u32 %v564, 16
      %v699 = vrot.slane %v697, 4
      %v700 = vshll.u32 %v564, 16
      %v702 = vrot.slane %v700, 5
      %v703 = vor.u32 %v699, %v702
      %v704 = vrot.slane %v703, 4
      %v706 = vshll.u32 %v565, 16
      %v708 = vrot.slane %v706, 5
      %v709 = vsel %vm575, %v704, %v708
      %v710 = vshrl.u32 %v565, 16
      %v712 = vrot.slane %v710, 4
      %v713 = vor.u32 %v712, %v708
      %v714 = vrot.slane %v713, 4
      %v716 = vshll.u32 %v566, 16
      %v718 = vrot.slane %v716, 5
      %v719 = vsel %vm575, %v714, %v718
      %v721 = vshrl.u32 %v567, 16
      %v723 = vrot.slane %v721, 4
      %v724 = vshll.u32 %v567, 16
      %v726 = vrot.slane %v724, 5
      %v727 = vor.u32 %v723, %v726
      %v728 = vrot.slane %v727, 4
      %v730 = vshll.u32 %v568, 16
      %v732 = vrot.slane %v730, 5
      %v733 = vsel %vm575, %v728, %v732
      %v734 = vshrl.u32 %v568, 16
      %v736 = vrot.slane %v734, 4
      %v737 = vor.u32 %v736, %v732
      %v738 = vrot.slane %v737, 4
      %v740 = vshll.u32 %v569, 16
      %v742 = vrot.slane %v740, 5
      %v743 = vsel %vm575, %v738, %v742
      %v745 = vshrl.u32 %v570, 16
      %v747 = vrot.slane %v745, 4
      %v748 = vshll.u32 %v570, 16
      %v750 = vrot.slane %v748, 5
      %v751 = vor.u32 %v747, %v750
      %v752 = vrot.slane %v751, 4
      %v754 = vshll.u32 %v571, 16
      %v756 = vrot.slane %v754, 5
      %v757 = vsel %vm575, %v752, %v756
      %v758 = vshrl.u32 %v571, 16
      %v760 = vrot.slane %v758, 4
      %v761 = vor.u32 %v760, %v756
      %v762 = vrot.slane %v761, 4
      %v764 = vshll.u32 %v572, 16
      %v766 = vrot.slane %v764, 5
      %v767 = vsel %vm575, %v762, %v766
      %s768 = scalar_lea.vmem %s1, 4
      %v769 = vld [vmem:[%s768] sm:$0x3]
      %v770 = vunpack.c.l.b16 %v589
      %v771 = vunpack.c.l.b16 %v599
      %v772 = vunpack.c.l.b16 %v613
      %v773 = vunpack.c.l.b16 %v623
      %v774 = vunpack.c.l.b16 %v637
      %v775 = vunpack.c.l.b16 %v647
      %v776 = vunpack.c.l.b16 %v661
      %v777 = vunpack.c.l.b16 %v671
      %v778 = vunpack.c.l.b16 %v685
      %v779 = vunpack.c.l.b16 %v695
      %v780 = vunpack.c.l.b16 %v709
      %v781 = vunpack.c.l.b16 %v719
      %v782 = vunpack.c.l.b16 %v733
      %v783 = vunpack.c.l.b16 %v743
      %v784 = vunpack.c.l.b16 %v757
      %v785 = vunpack.c.l.b16 %v767
      %v786 = vpack.c.b16 %v771, %v770
      %v787 = vpack.c.b16 %v773, %v772
      %v788 = vpack.c.b16 %v775, %v774
      %v789 = vpack.c.b16 %v777, %v776
      %v790 = vpack.c.b16 %v779, %v778
      %v791 = vpack.c.b16 %v781, %v780
      %v792 = vpack.c.b16 %v783, %v782
      %v793 = vpack.c.b16 %v785, %v784
      %v795 = vsel %vm275, %v786, 0
      %v798 = vsel %vm275, %v787, 0
      %v801 = vsel %vm275, %v788, 0
      %v804 = vsel %vm275, %v789, 0
      %v807 = vsel %vm275, %v790, 0
      %v810 = vsel %vm275, %v791, 0
      %v813 = vsel %vm275, %v792, 0
      %v816 = vsel %vm275, %v793, 0
      %v819 = vsel %vm300, %v769, 0
      %821 = vmatprep.subr.bf16.mxu0 0
      %822 = vmatpush1.bf16.msra.mxu0 %v819
      %823 = vmatprep.subr.bf16.mxu0 0
      %824 = vmatpush1.bf16.msra.mxu0 0
      %825 = vmatprep.subr.bf16.mxu0 0
      %826 = vmatpush1.bf16.msra.mxu0 0
      %827 = vmatprep.subr.bf16.mxu0 0
      %828 = vmatpush1.bf16.msra.mxu0 0
      %829 = vmatprep.subr.bf16.mxu0 0
      %830 = vmatpush1.bf16.msra.mxu0 0
      %831 = vmatprep.subr.bf16.mxu0 0
      %832 = vmatpush1.bf16.msra.mxu0 0
      %833 = vmatprep.subr.bf16.mxu0 0
      %834 = vmatpush1.bf16.msra.mxu0 0
      %835 = vmatprep.subr.bf16.mxu0 0
      %836 = vmatpush1.bf16.msra.mxu0 0
      %837 = vmatprep.subr.bf16.mxu0 0
      %838 = vmatpush1.bf16.msra.mxu0 0
      %839 = vmatprep.subr.bf16.mxu0 0
      %840 = vmatpush1.bf16.msra.mxu0 0
      %841 = vmatprep.subr.bf16.mxu0 0
      %842 = vmatpush1.bf16.msra.mxu0 0
      %843 = vmatprep.subr.bf16.mxu0 0
      %844 = vmatpush1.bf16.msra.mxu0 0
      %845 = vmatprep.subr.bf16.mxu0 0
      %846 = vmatpush1.bf16.msra.mxu0 0
      %847 = vmatprep.subr.bf16.mxu0 0
      %848 = vmatpush1.bf16.msra.mxu0 0
      %849 = vmatprep.subr.bf16.mxu0 0
      %850 = vmatpush1.bf16.msra.mxu0 0
      %851 = vmatprep.subr.bf16.mxu0 0
      %852 = vmatpush1.bf16.msra.mxu0 0
      %853 = vmatprep.mubr.bf16.mxu0 0
      %854 = vmatmul.mubr.bf16.gmra.mrb[0].mxu0 %v795
      %v855 = vpop.f32.mrb[0].mxu0
      %v856 = vadd.f32 0.0, %v855
      %v857 = vpop.f32.mrb[0].mxu0
      %v858 = vpop.f32.mrb[0].mxu0
      %v859 = vpop.f32.mrb[0].mxu0
      %860 = vmatprep.mubr.bf16.mxu0 0
      %861 = vmatmul.mubr.bf16.gmra.mrb[0].mxu0 %v798
      %v862 = vpop.f32.mrb[0].mxu0
      %v863 = vadd.f32 0.0, %v862
      %v864 = vpop.f32.mrb[0].mxu0
      %v865 = vpop.f32.mrb[0].mxu0
      %v866 = vpop.f32.mrb[0].mxu0
      %867 = vmatprep.mubr.bf16.mxu0 0
      %868 = vmatmul.mubr.bf16.gmra.mrb[0].mxu0 %v801
      %v869 = vpop.f32.mrb[0].mxu0
      %v870 = vadd.f32 0.0, %v869
      %v871 = vpop.f32.mrb[0].mxu0
      %v872 = vpop.f32.mrb[0].mxu0
      %v873 = vpop.f32.mrb[0].mxu0
      %874 = vmatprep.mubr.bf16.mxu0 0
      %875 = vmatmul.mubr.bf16.gmra.mrb[0].mxu0 %v804
      %v876 = vpop.f32.mrb[0].mxu0
      %v877 = vadd.f32 0.0, %v876
      %v878 = vpop.f32.mrb[0].mxu0
      %v879 = vpop.f32.mrb[0].mxu0
      %v880 = vpop.f32.mrb[0].mxu0
      %881 = vmatprep.mubr.bf16.mxu0 0
      %882 = vmatmul.mubr.bf16.gmra.mrb[0].mxu0 %v807
      %v883 = vpop.f32.mrb[0].mxu0
      %v884 = vadd.f32 0.0, %v883
      %v885 = vpop.f32.mrb[0].mxu0
      %v886 = vpop.f32.mrb[0].mxu0
      %v887 = vpop.f32.mrb[0].mxu0
      %888 = vmatprep.mubr.bf16.mxu0 0
      %889 = vmatmul.mubr.bf16.gmra.mrb[0].mxu0 %v810
      %v890 = vpop.f32.mrb[0].mxu0
      %v891 = vadd.f32 0.0, %v890
      %v892 = vpop.f32.mrb[0].mxu0
      %v893 = vpop.f32.mrb[0].mxu0
      %v894 = vpop.f32.mrb[0].mxu0
      %895 = vmatprep.mubr.bf16.mxu0 0
      %896 = vmatmul.mubr.bf16.gmra.mrb[0].mxu0 %v813
      %v897 = vpop.f32.mrb[0].mxu0
      %v898 = vadd.f32 0.0, %v897
      %v899 = vpop.f32.mrb[0].mxu0
      %v900 = vpop.f32.mrb[0].mxu0
      %v901 = vpop.f32.mrb[0].mxu0
      %902 = vmatprep.mubr.bf16.mxu0 0
      %903 = vmatmul.mubr.bf16.gmra.mrb[0].mxu0 %v816
      %v904 = vpop.f32.mrb[0].mxu0
      %v905 = vadd.f32 0.0, %v904
      %v906 = vpop.f32.mrb[0].mxu0
      %v907 = vpop.f32.mrb[0].mxu0
      %v908 = vpop.f32.mrb[0].mxu0
      %909 = vdwg.mxu0
      %v910 = vadd.f32 %v495, %v856
      %v911 = vadd.f32 %v502, %v863
      %v912 = vadd.f32 %v509, %v870
      %v913 = vadd.f32 %v516, %v877
      %v914 = vadd.f32 %v523, %v884
      %v915 = vadd.f32 %v530, %v891
      %v916 = vadd.f32 %v537, %v898
      %v917 = vadd.f32 %v544, %v905
      %s918 = scalar_lea.vmem %s192, 216
      %v919 = vld [vmem:[%s918] sm:$0xf]
      %v920 = vld [vmem:[%s918 + $0x4] sm:$0xf]
      %v921 = vld [vmem:[%s918 + $0xc] sm:$0xf]
      %v922 = vld [vmem:[%s918 + $0x10] sm:$0xf]
      %v923 = vld [vmem:[%s918 + $0x18] sm:$0xf]
      %v924 = vld [vmem:[%s918 + $0x1c] sm:$0xf]
      %v925 = vld [vmem:[%s918 + $0x24] sm:$0xf]
      %v926 = vld [vmem:[%s918 + $0x28] sm:$0xf]
      %v927 = vld [vmem:[%s918 + $0x30] sm:$0xf]
      %v928 = vld [vmem:[%s918 + $0x34] sm:$0xf]
      %v929 = vld [vmem:[%s918 + $0x3c] sm:$0xf]
      %v930 = vld [vmem:[%s918 + $0x40] sm:$0xf]
      %v931 = vld [vmem:[%s918 + $0x48] sm:$0xf]
      %v932 = vld [vmem:[%s918 + $0x4c] sm:$0xf]
      %v933 = vld [vmem:[%s918 + $0x54] sm:$0xf]
      %v934 = vld [vmem:[%s918 + $0x58] sm:$0xf]
      %s935 = scalar_lea.vmem %s1, 6
      %v936 = vld [vmem:[%s935] sm:$0x3]
      %v953 = vunpack.c.l.b16 %v919
      %v954 = vunpack.c.l.b16 %v920
      %v955 = vunpack.c.l.b16 %v921
      %v956 = vunpack.c.l.b16 %v922
      %v957 = vunpack.c.l.b16 %v923
      %v958 = vunpack.c.l.b16 %v924
      %v959 = vunpack.c.l.b16 %v925
      %v960 = vunpack.c.l.b16 %v926
      %v961 = vunpack.c.l.b16 %v927
      %v962 = vunpack.c.l.b16 %v928
      %v963 = vunpack.c.l.b16 %v929
      %v964 = vunpack.c.l.b16 %v930
      %v965 = vunpack.c.l.b16 %v931
      %v966 = vunpack.c.l.b16 %v932
      %v967 = vunpack.c.l.b16 %v933
      %v968 = vunpack.c.l.b16 %v934
      %v969 = vpack.c.b16 %v954, %v953
      %v970 = vpack.c.b16 %v956, %v955
      %v971 = vpack.c.b16 %v958, %v957
      %v972 = vpack.c.b16 %v960, %v959
      %v973 = vpack.c.b16 %v962, %v961
      %v974 = vpack.c.b16 %v964, %v963
      %v975 = vpack.c.b16 %v966, %v965
      %v976 = vpack.c.b16 %v968, %v967
      %v978 = vsel %vm275, %v969, 0
      %v981 = vsel %vm275, %v970, 0
      %v984 = vsel %vm275, %v971, 0
      %v987 = vsel %vm275, %v972, 0
      %v990 = vsel %vm275, %v973, 0
      %v993 = vsel %vm275, %v974, 0
      %v996 = vsel %vm275, %v975, 0
      %v999 = vsel %vm275, %v976, 0
      %v1002 = vsel %vm300, %v936, 0
      %1004 = vmatprep.subr.bf16.mxu0 0
      %1005 = vmatpush1.bf16.msra.mxu0 %v1002
      %1006 = vmatprep.subr.bf16.mxu0 0
      %1007 = vmatpush1.bf16.msra.mxu0 0
      %1008 = vmatprep.subr.bf16.mxu0 0
      %1009 = vmatpush1.bf16.msra.mxu0 0
      %1010 = vmatprep.subr.bf16.mxu0 0
      %1011 = vmatpush1.bf16.msra.mxu0 0
      %1012 = vmatprep.subr.bf16.mxu0 0
      %1013 = vmatpush1.bf16.msra.mxu0 0
      %1014 = vmatprep.subr.bf16.mxu0 0
      %1015 = vmatpush1.bf16.msra.mxu0 0
      %1016 = vmatprep.subr.bf16.mxu0 0
      %1017 = vmatpush1.bf16.msra.mxu0 0
      %1018 = vmatprep.subr.bf16.mxu0 0
      %1019 = vmatpush1.bf16.msra.mxu0 0
      %1020 = vmatprep.subr.bf16.mxu0 0
      %1021 = vmatpush1.bf16.msra.mxu0 0
      %1022 = vmatprep.subr.bf16.mxu0 0
      %1023 = vmatpush1.bf16.msra.mxu0 0
      %1024 = vmatprep.subr.bf16.mxu0 0
      %1025 = vmatpush1.bf16.msra.mxu0 0
      %1026 = vmatprep.subr.bf16.mxu0 0
      %1027 = vmatpush1.bf16.msra.mxu0 0
      %1028 = vmatprep.subr.bf16.mxu0 0
      %1029 = vmatpush1.bf16.msra.mxu0 0
      %1030 = vmatprep.subr.bf16.mxu0 0
      %1031 = vmatpush1.bf16.msra.mxu0 0
      %1032 = vmatprep.subr.bf16.mxu0 0
      %1033 = vmatpush1.bf16.msra.mxu0 0
      %1034 = vmatprep.subr.bf16.mxu0 0
      %1035 = vmatpush1.bf16.msra.mxu0 0
      %1036 = vmatprep.mubr.bf16.mxu0 0
      %1037 = vmatmul.mubr.bf16.gmra.mrb[0].mxu0 %v978
      %v1038 = vpop.f32.mrb[0].mxu0
      %v1039 = vadd.f32 0.0, %v1038
      %v1040 = vpop.f32.mrb[0].mxu0
      %v1041 = vpop.f32.mrb[0].mxu0
      %v1042 = vpop.f32.mrb[0].mxu0
      %1043 = vmatprep.mubr.bf16.mxu0 0
      %1044 = vmatmul.mubr.bf16.gmra.mrb[0].mxu0 %v981
      %v1045 = vpop.f32.mrb[0].mxu0
      %v1046 = vadd.f32 0.0, %v1045
      %v1047 = vpop.f32.mrb[0].mxu0
      %v1048 = vpop.f32.mrb[0].mxu0
      %v1049 = vpop.f32.mrb[0].mxu0
      %1050 = vmatprep.mubr.bf16.mxu0 0
      %1051 = vmatmul.mubr.bf16.gmra.mrb[0].mxu0 %v984
      %v1052 = vpop.f32.mrb[0].mxu0
      %v1053 = vadd.f32 0.0, %v1052
      %v1054 = vpop.f32.mrb[0].mxu0
      %v1055 = vpop.f32.mrb[0].mxu0
      %v1056 = vpop.f32.mrb[0].mxu0
      %1057 = vmatprep.mubr.bf16.mxu0 0
      %1058 = vmatmul.mubr.bf16.gmra.mrb[0].mxu0 %v987
      %v1059 = vpop.f32.mrb[0].mxu0
      %v1060 = vadd.f32 0.0, %v1059
      %v1061 = vpop.f32.mrb[0].mxu0
      %v1062 = vpop.f32.mrb[0].mxu0
      %v1063 = vpop.f32.mrb[0].mxu0
      %1064 = vmatprep.mubr.bf16.mxu0 0
      %1065 = vmatmul.mubr.bf16.gmra.mrb[0].mxu0 %v990
      %v1066 = vpop.f32.mrb[0].mxu0
      %v1067 = vadd.f32 0.0, %v1066
      %v1068 = vpop.f32.mrb[0].mxu0
      %v1069 = vpop.f32.mrb[0].mxu0
      %v1070 = vpop.f32.mrb[0].mxu0
      %1071 = vmatprep.mubr.bf16.mxu0 0
      %1072 = vmatmul.mubr.bf16.gmra.mrb[0].mxu0 %v993
      %v1073 = vpop.f32.mrb[0].mxu0
      %v1074 = vadd.f32 0.0, %v1073
      %v1075 = vpop.f32.mrb[0].mxu0
      %v1076 = vpop.f32.mrb[0].mxu0
      %v1077 = vpop.f32.mrb[0].mxu0
      %1078 = vmatprep.mubr.bf16.mxu0 0
      %1079 = vmatmul.mubr.bf16.gmra.mrb[0].mxu0 %v996
      %v1080 = vpop.f32.mrb[0].mxu0
      %v1081 = vadd.f32 0.0, %v1080
      %v1082 = vpop.f32.mrb[0].mxu0
      %v1083 = vpop.f32.mrb[0].mxu0
      %v1084 = vpop.f32.mrb[0].mxu0
      %1085 = vmatprep.mubr.bf16.mxu0 0
      %1086 = vmatmul.mubr.bf16.gmra.mrb[0].mxu0 %v999
      %v1087 = vpop.f32.mrb[0].mxu0
      %v1088 = vadd.f32 0.0, %v1087
      %v1089 = vpop.f32.mrb[0].mxu0
      %v1090 = vpop.f32.mrb[0].mxu0
      %v1091 = vpop.f32.mrb[0].mxu0
      %1092 = vdwg.mxu0
      %v1093 = vadd.f32 %v910, %v1039
      %v1094 = vadd.f32 %v911, %v1046
      %v1095 = vadd.f32 %v912, %v1053
      %v1096 = vadd.f32 %v913, %v1060
      %v1097 = vadd.f32 %v914, %v1067
      %v1098 = vadd.f32 %v915, %v1074
      %v1099 = vadd.f32 %v916, %v1081
      %v1100 = vadd.f32 %v917, %v1088
      %s1101 = scalar_lea.vmem %s192, 324
      %v1102 = vld [vmem:[%s1101] sm:$0xf]
      %v1103 = vld [vmem:[%s1101 + $0x4] sm:$0xf]
      %v1104 = vld [vmem:[%s1101 + $0xc] sm:$0xf]
      %v1105 = vld [vmem:[%s1101 + $0x10] sm:$0xf]
      %v1106 = vld [vmem:[%s1101 + $0x18] sm:$0xf]
      %v1107 = vld [vmem:[%s1101 + $0x1c] sm:$0xf]
      %v1108 = vld [vmem:[%s1101 + $0x24] sm:$0xf]
      %v1109 = vld [vmem:[%s1101 + $0x28] sm:$0xf]
      %v1110 = vld [vmem:[%s1101 + $0x30] sm:$0xf]
      %v1111 = vld [vmem:[%s1101 + $0x34] sm:$0xf]
      %v1112 = vld [vmem:[%s1101 + $0x3c] sm:$0xf]
      %v1113 = vld [vmem:[%s1101 + $0x40] sm:$0xf]
      %v1114 = vld [vmem:[%s1101 + $0x48] sm:$0xf]
      %v1115 = vld [vmem:[%s1101 + $0x4c] sm:$0xf]
      %v1116 = vld [vmem:[%s1101 + $0x54] sm:$0xf]
      %v1117 = vld [vmem:[%s1101 + $0x58] sm:$0xf]
      %s1118 = scalar_lea.vmem %s1, 8
      %v1119 = vld [vmem:[%s1118] sm:$0x3]
      %v1136 = vunpack.c.l.b16 %v1102
      %v1137 = vunpack.c.l.b16 %v1103
      %v1138 = vunpack.c.l.b16 %v1104
      %v1139 = vunpack.c.l.b16 %v1105
      %v1140 = vunpack.c.l.b16 %v1106
      %v1141 = vunpack.c.l.b16 %v1107
      %v1142 = vunpack.c.l.b16 %v1108
      %v1143 = vunpack.c.l.b16 %v1109
      %v1144 = vunpack.c.l.b16 %v1110
      %v1145 = vunpack.c.l.b16 %v1111
      %v1146 = vunpack.c.l.b16 %v1112
      %v1147 = vunpack.c.l.b16 %v1113
      %v1148 = vunpack.c.l.b16 %v1114
      %v1149 = vunpack.c.l.b16 %v1115
      %v1150 = vunpack.c.l.b16 %v1116
      %v1151 = vunpack.c.l.b16 %v1117
      %v1152 = vpack.c.b16 %v1137, %v1136
      %v1153 = vpack.c.b16 %v1139, %v1138
      %v1154 = vpack.c.b16 %v1141, %v1140
      %v1155 = vpack.c.b16 %v1143, %v1142
      %v1156 = vpack.c.b16 %v1145, %v1144
      %v1157 = vpack.c.b16 %v1147, %v1146
      %v1158 = vpack.c.b16 %v1149, %v1148
      %v1159 = vpack.c.b16 %v1151, %v1150
      %v1161 = vsel %vm275, %v1152, 0
      %v1164 = vsel %vm275, %v1153, 0
      %v1167 = vsel %vm275, %v1154, 0
      %v1170 = vsel %vm275, %v1155, 0
      %v1173 = vsel %vm275, %v1156, 0
      %v1176 = vsel %vm275, %v1157, 0
      %v1179 = vsel %vm275, %v1158, 0
      %v1182 = vsel %vm275, %v1159, 0
      %v1185 = vsel %vm300, %v1119, 0
      %1187 = vmatprep.subr.bf16.mxu0 0
      %1188 = vmatpush1.bf16.msra.mxu0 %v1185
      %1189 = vmatprep.subr.bf16.mxu0 0
      %1190 = vmatpush1.bf16.msra.mxu0 0
      %1191 = vmatprep.subr.bf16.mxu0 0
      %1192 = vmatpush1.bf16.msra.mxu0 0
      %1193 = vmatprep.subr.bf16.mxu0 0
      %1194 = vmatpush1.bf16.msra.mxu0 0
      %1195 = vmatprep.subr.bf16.mxu0 0
      %1196 = vmatpush1.bf16.msra.mxu0 0
      %1197 = vmatprep.subr.bf16.mxu0 0
      %1198 = vmatpush1.bf16.msra.mxu0 0
      %1199 = vmatprep.subr.bf16.mxu0 0
      %1200 = vmatpush1.bf16.msra.mxu0 0
      %1201 = vmatprep.subr.bf16.mxu0 0
      %1202 = vmatpush1.bf16.msra.mxu0 0
      %1203 = vmatprep.subr.bf16.mxu0 0
      %1204 = vmatpush1.bf16.msra.mxu0 0
      %1205 = vmatprep.subr.bf16.mxu0 0
      %1206 = vmatpush1.bf16.msra.mxu0 0
      %1207 = vmatprep.subr.bf16.mxu0 0
      %1208 = vmatpush1.bf16.msra.mxu0 0
      %1209 = vmatprep.subr.bf16.mxu0 0
      %1210 = vmatpush1.bf16.msra.mxu0 0
      %1211 = vmatprep.subr.bf16.mxu0 0
      %1212 = vmatpush1.bf16.msra.mxu0 0
      %1213 = vmatprep.subr.bf16.mxu0 0
      %1214 = vmatpush1.bf16.msra.mxu0 0
      %1215 = vmatprep.subr.bf16.mxu0 0
      %1216 = vmatpush1.bf16.msra.mxu0 0
      %1217 = vmatprep.subr.bf16.mxu0 0
      %1218 = vmatpush1.bf16.msra.mxu0 0
      %1219 = vmatprep.mubr.bf16.mxu0 0
      %1220 = vmatmul.mubr.bf16.gmra.mrb[0].mxu0 %v1161
      %v1221 = vpop.f32.mrb[0].mxu0
      %v1222 = vadd.f32 0.0, %v1221
      %v1223 = vpop.f32.mrb[0].mxu0
      %v1224 = vpop.f32.mrb[0].mxu0
      %v1225 = vpop.f32.mrb[0].mxu0
      %1226 = vmatprep.mubr.bf16.mxu0 0
      %1227 = vmatmul.mubr.bf16.gmra.mrb[0].mxu0 %v1164
      %v1228 = vpop.f32.mrb[0].mxu0
      %v1229 = vadd.f32 0.0, %v1228
      %v1230 = vpop.f32.mrb[0].mxu0
      %v1231 = vpop.f32.mrb[0].mxu0
      %v1232 = vpop.f32.mrb[0].mxu0
      %1233 = vmatprep.mubr.bf16.mxu0 0
      %1234 = vmatmul.mubr.bf16.gmra.mrb[0].mxu0 %v1167
      %v1235 = vpop.f32.mrb[0].mxu0
      %v1236 = vadd.f32 0.0, %v1235
      %v1237 = vpop.f32.mrb[0].mxu0
      %v1238 = vpop.f32.mrb[0].mxu0
      %v1239 = vpop.f32.mrb[0].mxu0
      %1240 = vmatprep.mubr.bf16.mxu0 0
      %1241 = vmatmul.mubr.bf16.gmra.mrb[0].mxu0 %v1170
      %v1242 = vpop.f32.mrb[0].mxu0
      %v1243 = vadd.f32 0.0, %v1242
      %v1244 = vpop.f32.mrb[0].mxu0
      %v1245 = vpop.f32.mrb[0].mxu0
      %v1246 = vpop.f32.mrb[0].mxu0
      %1247 = vmatprep.mubr.bf16.mxu0 0
      %1248 = vmatmul.mubr.bf16.gmra.mrb[0].mxu0 %v1173
      %v1249 = vpop.f32.mrb[0].mxu0
      %v1250 = vadd.f32 0.0, %v1249
      %v1251 = vpop.f32.mrb[0].mxu0
      %v1252 = vpop.f32.mrb[0].mxu0
      %v1253 = vpop.f32.mrb[0].mxu0
      %1254 = vmatprep.mubr.bf16.mxu0 0
      %1255 = vmatmul.mubr.bf16.gmra.mrb[0].mxu0 %v1176
      %v1256 = vpop.f32.mrb[0].mxu0
      %v1257 = vadd.f32 0.0, %v1256
      %v1258 = vpop.f32.mrb[0].mxu0
      %v1259 = vpop.f32.mrb[0].mxu0
      %v1260 = vpop.f32.mrb[0].mxu0
      %1261 = vmatprep.mubr.bf16.mxu0 0
      %1262 = vmatmul.mubr.bf16.gmra.mrb[0].mxu0 %v1179
      %v1263 = vpop.f32.mrb[0].mxu0
      %v1264 = vadd.f32 0.0, %v1263
      %v1265 = vpop.f32.mrb[0].mxu0
      %v1266 = vpop.f32.mrb[0].mxu0
      %v1267 = vpop.f32.mrb[0].mxu0
      %1268 = vmatprep.mubr.bf16.mxu0 0
      %1269 = vmatmul.mubr.bf16.gmra.mrb[0].mxu0 %v1182
      %v1270 = vpop.f32.mrb[0].mxu0
      %v1271 = vadd.f32 0.0, %v1270
      %v1272 = vpop.f32.mrb[0].mxu0
      %v1273 = vpop.f32.mrb[0].mxu0
      %v1274 = vpop.f32.mrb[0].mxu0
      %1275 = vdwg.mxu0
      %v1276 = vadd.f32 %v1093, %v1222
      %v1277 = vadd.f32 %v1094, %v1229
      %v1278 = vadd.f32 %v1095, %v1236
      %v1279 = vadd.f32 %v1096, %v1243
      %v1280 = vadd.f32 %v1097, %v1250
      %v1281 = vadd.f32 %v1098, %v1257
      %v1282 = vadd.f32 %v1099, %v1264
      %v1283 = vadd.f32 %v1100, %v1271
      %v1284 = vld [vmem:[%s918] sm:$0xf]
      %v1285 = vld [vmem:[%s918 + $0x4] sm:$0xf]
      %v1286 = vld [vmem:[%s918 + $0x8] sm:$0x1]
      %v1287 = vld [vmem:[%s918 + $0xc] sm:$0xf]
      %v1288 = vld [vmem:[%s918 + $0x10] sm:$0xf]
      %v1289 = vld [vmem:[%s918 + $0x14] sm:$0x1]
      %v1290 = vld [vmem:[%s918 + $0x18] sm:$0xf]
      %v1291 = vld [vmem:[%s918 + $0x1c] sm:$0xf]
      %v1292 = vld [vmem:[%s918 + $0x20] sm:$0x1]
      %v1293 = vld [vmem:[%s918 + $0x24] sm:$0xf]
      %v1294 = vld [vmem:[%s918 + $0x28] sm:$0xf]
      %v1295 = vld [vmem:[%s918 + $0x2c] sm:$0x1]
      %v1296 = vld [vmem:[%s918 + $0x30] sm:$0xf]
      %v1297 = vld [vmem:[%s918 + $0x34] sm:$0xf]
      %v1298 = vld [vmem:[%s918 + $0x38] sm:$0x1]
      %v1299 = vld [vmem:[%s918 + $0x3c] sm:$0xf]
      %v1300 = vld [vmem:[%s918 + $0x40] sm:$0xf]
      %v1301 = vld [vmem:[%s918 + $0x44] sm:$0x1]
      %v1302 = vld [vmem:[%s918 + $0x48] sm:$0xf]
      %v1303 = vld [vmem:[%s918 + $0x4c] sm:$0xf]
      %v1304 = vld [vmem:[%s918 + $0x50] sm:$0x1]
      %v1305 = vld [vmem:[%s918 + $0x54] sm:$0xf]
      %v1306 = vld [vmem:[%s918 + $0x58] sm:$0xf]
      %v1307 = vld [vmem:[%s918 + $0x5c] sm:$0x1]
      %v1309 = vshrl.u32 %v1284, 16
      %v1311 = vrot.slane %v1309, 4
      %v1312 = vshll.u32 %v1284, 16
      %v1314 = vrot.slane %v1312, 5
      %v1315 = vor.u32 %v1311, %v1314
      %v1316 = vrot.slane %v1315, 4
      %v1318 = vshll.u32 %v1285, 16
      %v1320 = vrot.slane %v1318, 5
      %v1321 = vsel %vm575, %v1316, %v1320
      %v1322 = vshrl.u32 %v1285, 16
      %v1324 = vrot.slane %v1322, 4
      %v1325 = vor.u32 %v1324, %v1320
      %v1326 = vrot.slane %v1325, 4
      %v1328 = vshll.u32 %v1286, 16
      %v1330 = vrot.slane %v1328, 5
      %v1331 = vsel %vm575, %v1326, %v1330
      %v1333 = vshrl.u32 %v1287, 16
      %v1335 = vrot.slane %v1333, 4
      %v1336 = vshll.u32 %v1287, 16
      %v1338 = vrot.slane %v1336, 5
      %v1339 = vor.u32 %v1335, %v1338
      %v1340 = vrot.slane %v1339, 4
      %v1342 = vshll.u32 %v1288, 16
      %v1344 = vrot.slane %v1342, 5
      %v1345 = vsel %vm575, %v1340, %v1344
      %v1346 = vshrl.u32 %v1288, 16
      %v1348 = vrot.slane %v1346, 4
      %v1349 = vor.u32 %v1348, %v1344
      %v1350 = vrot.slane %v1349, 4
      %v1352 = vshll.u32 %v1289, 16
      %v1354 = vrot.slane %v1352, 5
      %v1355 = vsel %vm575, %v1350, %v1354
      %v1357 = vshrl.u32 %v1290, 16
      %v1359 = vrot.slane %v1357, 4
      %v1360 = vshll.u32 %v1290, 16
      %v1362 = vrot.slane %v1360, 5
      %v1363 = vor.u32 %v1359, %v1362
      %v1364 = vrot.slane %v1363, 4
      %v1366 = vshll.u32 %v1291, 16
      %v1368 = vrot.slane %v1366, 5
      %v1369 = vsel %vm575, %v1364, %v1368
      %v1370 = vshrl.u32 %v1291, 16
      %v1372 = vrot.slane %v1370, 4
      %v1373 = vor.u32 %v1372, %v1368
      %v1374 = vrot.slane %v1373, 4
      %v1376 = vshll.u32 %v1292, 16
      %v1378 = vrot.slane %v1376, 5
      %v1379 = vsel %vm575, %v1374, %v1378
      %v1381 = vshrl.u32 %v1293, 16
      %v1383 = vrot.slane %v1381, 4
      %v1384 = vshll.u32 %v1293, 16
      %v1386 = vrot.slane %v1384, 5
      %v1387 = vor.u32 %v1383, %v1386
      %v1388 = vrot.slane %v1387, 4
      %v1390 = vshll.u32 %v1294, 16
      %v1392 = vrot.slane %v1390, 5
      %v1393 = vsel %vm575, %v1388, %v1392
      %v1394 = vshrl.u32 %v1294, 16
      %v1396 = vrot.slane %v1394, 4
      %v1397 = vor.u32 %v1396, %v1392
      %v1398 = vrot.slane %v1397, 4
      %v1400 = vshll.u32 %v1295, 16
      %v1402 = vrot.slane %v1400, 5
      %v1403 = vsel %vm575, %v1398, %v1402
      %v1405 = vshrl.u32 %v1296, 16
      %v1407 = vrot.slane %v1405, 4
      %v1408 = vshll.u32 %v1296, 16
      %v1410 = vrot.slane %v1408, 5
      %v1411 = vor.u32 %v1407, %v1410
      %v1412 = vrot.slane %v1411, 4
      %v1414 = vshll.u32 %v1297, 16
      %v1416 = vrot.slane %v1414, 5
      %v1417 = vsel %vm575, %v1412, %v1416
      %v1418 = vshrl.u32 %v1297, 16
      %v1420 = vrot.slane %v1418, 4
      %v1421 = vor.u32 %v1420, %v1416
      %v1422 = vrot.slane %v1421, 4
      %v1424 = vshll.u32 %v1298, 16
      %v1426 = vrot.slane %v1424, 5
      %v1427 = vsel %vm575, %v1422, %v1426
      %v1429 = vshrl.u32 %v1299, 16
      %v1431 = vrot.slane %v1429, 4
      %v1432 = vshll.u32 %v1299, 16
      %v1434 = vrot.slane %v1432, 5
      %v1435 = vor.u32 %v1431, %v1434
      %v1436 = vrot.slane %v1435, 4
      %v1438 = vshll.u32 %v1300, 16
      %v1440 = vrot.slane %v1438, 5
      %v1441 = vsel %vm575, %v1436, %v1440
      %v1442 = vshrl.u32 %v1300, 16
      %v1444 = vrot.slane %v1442, 4
      %v1445 = vor.u32 %v1444, %v1440
      %v1446 = vrot.slane %v1445, 4
      %v1448 = vshll.u32 %v1301, 16
      %v1450 = vrot.slane %v1448, 5
      %v1451 = vsel %vm575, %v1446, %v1450
      %v1453 = vshrl.u32 %v1302, 16
      %v1455 = vrot.slane %v1453, 4
      %v1456 = vshll.u32 %v1302, 16
      %v1458 = vrot.slane %v1456, 5
      %v1459 = vor.u32 %v1455, %v1458
      %v1460 = vrot.slane %v1459, 4
      %v1462 = vshll.u32 %v1303, 16
      %v1464 = vrot.slane %v1462, 5
      %v1465 = vsel %vm575, %v1460, %v1464
      %v1466 = vshrl.u32 %v1303, 16
      %v1468 = vrot.slane %v1466, 4
      %v1469 = vor.u32 %v1468, %v1464
      %v1470 = vrot.slane %v1469, 4
      %v1472 = vshll.u32 %v1304, 16
      %v1474 = vrot.slane %v1472, 5
      %v1475 = vsel %vm575, %v1470, %v1474
      %v1477 = vshrl.u32 %v1305, 16
      %v1479 = vrot.slane %v1477, 4
      %v1480 = vshll.u32 %v1305, 16
      %v1482 = vrot.slane %v1480, 5
      %v1483 = vor.u32 %v1479, %v1482
      %v1484 = vrot.slane %v1483, 4
      %v1486 = vshll.u32 %v1306, 16
      %v1488 = vrot.slane %v1486, 5
      %v1489 = vsel %vm575, %v1484, %v1488
      %v1490 = vshrl.u32 %v1306, 16
      %v1492 = vrot.slane %v1490, 4
      %v1493 = vor.u32 %v1492, %v1488
      %v1494 = vrot.slane %v1493, 4
      %v1496 = vshll.u32 %v1307, 16
      %v1498 = vrot.slane %v1496, 5
      %v1499 = vsel %vm575, %v1494, %v1498
      %s1500 = scalar_lea.vmem %s1, 10
      %v1501 = vld [vmem:[%s1500] sm:$0x3]
      %v1502 = vunpack.c.l.b16 %v1321
      %v1503 = vunpack.c.l.b16 %v1331
      %v1504 = vunpack.c.l.b16 %v1345
      %v1505 = vunpack.c.l.b16 %v1355
      %v1506 = vunpack.c.l.b16 %v1369
      %v1507 = vunpack.c.l.b16 %v1379
      %v1508 = vunpack.c.l.b16 %v1393
      %v1509 = vunpack.c.l.b16 %v1403
      %v1510 = vunpack.c.l.b16 %v1417
      %v1511 = vunpack.c.l.b16 %v1427
      %v1512 = vunpack.c.l.b16 %v1441
      %v1513 = vunpack.c.l.b16 %v1451
      %v1514 = vunpack.c.l.b16 %v1465
      %v1515 = vunpack.c.l.b16 %v1475
      %v1516 = vunpack.c.l.b16 %v1489
      %v1517 = vunpack.c.l.b16 %v1499
      %v1518 = vpack.c.b16 %v1503, %v1502
      %v1519 = vpack.c.b16 %v1505, %v1504
      %v1520 = vpack.c.b16 %v1507, %v1506
      %v1521 = vpack.c.b16 %v1509, %v1508
      %v1522 = vpack.c.b16 %v1511, %v1510
      %v1523 = vpack.c.b16 %v1513, %v1512
      %v1524 = vpack.c.b16 %v1515, %v1514
      %v1525 = vpack.c.b16 %v1517, %v1516
      %v1527 = vsel %vm275, %v1518, 0
      %v1530 = vsel %vm275, %v1519, 0
      %v1533 = vsel %vm275, %v1520, 0
      %v1536 = vsel %vm275, %v1521, 0
      %v1539 = vsel %vm275, %v1522, 0
      %v1542 = vsel %vm275, %v1523, 0
      %v1545 = vsel %vm275, %v1524, 0
      %v1548 = vsel %vm275, %v1525, 0
      %v1551 = vsel %vm300, %v1501, 0
      %1553 = vmatprep.subr.bf16.mxu0 0
      %1554 = vmatpush1.bf16.msra.mxu0 %v1551
      %1555 = vmatprep.subr.bf16.mxu0 0
      %1556 = vmatpush1.bf16.msra.mxu0 0
      %1557 = vmatprep.subr.bf16.mxu0 0
      %1558 = vmatpush1.bf16.msra.mxu0 0
      %1559 = vmatprep.subr.bf16.mxu0 0
      %1560 = vmatpush1.bf16.msra.mxu0 0
      %1561 = vmatprep.subr.bf16.mxu0 0
      %1562 = vmatpush1.bf16.msra.mxu0 0
      %1563 = vmatprep.subr.bf16.mxu0 0
      %1564 = vmatpush1.bf16.msra.mxu0 0
      %1565 = vmatprep.subr.bf16.mxu0 0
      %1566 = vmatpush1.bf16.msra.mxu0 0
      %1567 = vmatprep.subr.bf16.mxu0 0
      %1568 = vmatpush1.bf16.msra.mxu0 0
      %1569 = vmatprep.subr.bf16.mxu0 0
      %1570 = vmatpush1.bf16.msra.mxu0 0
      %1571 = vmatprep.subr.bf16.mxu0 0
      %1572 = vmatpush1.bf16.msra.mxu0 0
      %1573 = vmatprep.subr.bf16.mxu0 0
      %1574 = vmatpush1.bf16.msra.mxu0 0
      %1575 = vmatprep.subr.bf16.mxu0 0
      %1576 = vmatpush1.bf16.msra.mxu0 0
      %1577 = vmatprep.subr.bf16.mxu0 0
      %1578 = vmatpush1.bf16.msra.mxu0 0
      %1579 = vmatprep.subr.bf16.mxu0 0
      %1580 = vmatpush1.bf16.msra.mxu0 0
      %1581 = vmatprep.subr.bf16.mxu0 0
      %1582 = vmatpush1.bf16.msra.mxu0 0
      %1583 = vmatprep.subr.bf16.mxu0 0
      %1584 = vmatpush1.bf16.msra.mxu0 0
      %1585 = vmatprep.mubr.bf16.mxu0 0
      %1586 = vmatmul.mubr.bf16.gmra.mrb[0].mxu0 %v1527
      %v1587 = vpop.f32.mrb[0].mxu0
      %v1588 = vadd.f32 0.0, %v1587
      %v1589 = vpop.f32.mrb[0].mxu0
      %v1590 = vpop.f32.mrb[0].mxu0
      %v1591 = vpop.f32.mrb[0].mxu0
      %1592 = vmatprep.mubr.bf16.mxu0 0
      %1593 = vmatmul.mubr.bf16.gmra.mrb[0].mxu0 %v1530
      %v1594 = vpop.f32.mrb[0].mxu0
      %v1595 = vadd.f32 0.0, %v1594
      %v1596 = vpop.f32.mrb[0].mxu0
      %v1597 = vpop.f32.mrb[0].mxu0
      %v1598 = vpop.f32.mrb[0].mxu0
      %1599 = vmatprep.mubr.bf16.mxu0 0
      %1600 = vmatmul.mubr.bf16.gmra.mrb[0].mxu0 %v1533
      %v1601 = vpop.f32.mrb[0].mxu0
      %v1602 = vadd.f32 0.0, %v1601
      %v1603 = vpop.f32.mrb[0].mxu0
      %v1604 = vpop.f32.mrb[0].mxu0
      %v1605 = vpop.f32.mrb[0].mxu0
      %1606 = vmatprep.mubr.bf16.mxu0 0
      %1607 = vmatmul.mubr.bf16.gmra.mrb[0].mxu0 %v1536
      %v1608 = vpop.f32.mrb[0].mxu0
      %v1609 = vadd.f32 0.0, %v1608
      %v1610 = vpop.f32.mrb[0].mxu0
      %v1611 = vpop.f32.mrb[0].mxu0
      %v1612 = vpop.f32.mrb[0].mxu0
      %1613 = vmatprep.mubr.bf16.mxu0 0
      %1614 = vmatmul.mubr.bf16.gmra.mrb[0].mxu0 %v1539
      %v1615 = vpop.f32.mrb[0].mxu0
      %v1616 = vadd.f32 0.0, %v1615
      %v1617 = vpop.f32.mrb[0].mxu0
      %v1618 = vpop.f32.mrb[0].mxu0
      %v1619 = vpop.f32.mrb[0].mxu0
      %1620 = vmatprep.mubr.bf16.mxu0 0
      %1621 = vmatmul.mubr.bf16.gmra.mrb[0].mxu0 %v1542
      %v1622 = vpop.f32.mrb[0].mxu0
      %v1623 = vadd.f32 0.0, %v1622
      %v1624 = vpop.f32.mrb[0].mxu0
      %v1625 = vpop.f32.mrb[0].mxu0
      %v1626 = vpop.f32.mrb[0].mxu0
      %1627 = vmatprep.mubr.bf16.mxu0 0
      %1628 = vmatmul.mubr.bf16.gmra.mrb[0].mxu0 %v1545
      %v1629 = vpop.f32.mrb[0].mxu0
      %v1630 = vadd.f32 0.0, %v1629
      %v1631 = vpop.f32.mrb[0].mxu0
      %v1632 = vpop.f32.mrb[0].mxu0
      %v1633 = vpop.f32.mrb[0].mxu0
      %1634 = vmatprep.mubr.bf16.mxu0 0
      %1635 = vmatmul.mubr.bf16.gmra.mrb[0].mxu0 %v1548
      %v1636 = vpop.f32.mrb[0].mxu0
      %v1637 = vadd.f32 0.0, %v1636
      %v1638 = vpop.f32.mrb[0].mxu0
      %v1639 = vpop.f32.mrb[0].mxu0
      %v1640 = vpop.f32.mrb[0].mxu0
      %1641 = vdwg.mxu0
      %v1642 = vadd.f32 %v1276, %v1588
      %v1643 = vadd.f32 %v1277, %v1595
      %v1644 = vadd.f32 %v1278, %v1602
      %v1645 = vadd.f32 %v1279, %v1609
      %v1646 = vadd.f32 %v1280, %v1616
      %v1647 = vadd.f32 %v1281, %v1623
      %v1648 = vadd.f32 %v1282, %v1630
      %v1649 = vadd.f32 %v1283, %v1637
      %s1650 = scalar_lea.vmem %s192, 12
      %v1651 = vld [vmem:[%s1650] sm:$0xf]
      %v1652 = vld [vmem:[%s1650 + $0x4] sm:$0xf]
      %v1653 = vld [vmem:[%s1650 + $0xc] sm:$0xf]
      %v1654 = vld [vmem:[%s1650 + $0x10] sm:$0xf]
      %v1655 = vld [vmem:[%s1650 + $0x18] sm:$0xf]
      %v1656 = vld [vmem:[%s1650 + $0x1c] sm:$0xf]
      %v1657 = vld [vmem:[%s1650 + $0x24] sm:$0xf]
      %v1658 = vld [vmem:[%s1650 + $0x28] sm:$0xf]
      %v1659 = vld [vmem:[%s1650 + $0x30] sm:$0xf]
      %v1660 = vld [vmem:[%s1650 + $0x34] sm:$0xf]
      %v1661 = vld [vmem:[%s1650 + $0x3c] sm:$0xf]
      %v1662 = vld [vmem:[%s1650 + $0x40] sm:$0xf]
      %v1663 = vld [vmem:[%s1650 + $0x48] sm:$0xf]
      %v1664 = vld [vmem:[%s1650 + $0x4c] sm:$0xf]
      %v1665 = vld [vmem:[%s1650 + $0x54] sm:$0xf]
      %v1666 = vld [vmem:[%s1650 + $0x58] sm:$0xf]
      %s1667 = scalar_lea.vmem %s1, 12
      %v1668 = vld [vmem:[%s1667] sm:$0x3]
      %v1685 = vunpack.c.l.b16 %v1651
      %v1686 = vunpack.c.l.b16 %v1652
      %v1687 = vunpack.c.l.b16 %v1653
      %v1688 = vunpack.c.l.b16 %v1654
      %v1689 = vunpack.c.l.b16 %v1655
      %v1690 = vunpack.c.l.b16 %v1656
      %v1691 = vunpack.c.l.b16 %v1657
      %v1692 = vunpack.c.l.b16 %v1658
      %v1693 = vunpack.c.l.b16 %v1659
      %v1694 = vunpack.c.l.b16 %v1660
      %v1695 = vunpack.c.l.b16 %v1661
      %v1696 = vunpack.c.l.b16 %v1662
      %v1697 = vunpack.c.l.b16 %v1663
      %v1698 = vunpack.c.l.b16 %v1664
      %v1699 = vunpack.c.l.b16 %v1665
      %v1700 = vunpack.c.l.b16 %v1666
      %v1701 = vpack.c.b16 %v1686, %v1685
      %v1702 = vpack.c.b16 %v1688, %v1687
      %v1703 = vpack.c.b16 %v1690, %v1689
      %v1704 = vpack.c.b16 %v1692, %v1691
      %v1705 = vpack.c.b16 %v1694, %v1693
      %v1706 = vpack.c.b16 %v1696, %v1695
      %v1707 = vpack.c.b16 %v1698, %v1697
      %v1708 = vpack.c.b16 %v1700, %v1699
      %v1710 = vsel %vm275, %v1701, 0
      %v1713 = vsel %vm275, %v1702, 0
      %v1716 = vsel %vm275, %v1703, 0
      %v1719 = vsel %vm275, %v1704, 0
      %v1722 = vsel %vm275, %v1705, 0
      %v1725 = vsel %vm275, %v1706, 0
      %v1728 = vsel %vm275, %v1707, 0
      %v1731 = vsel %vm275, %v1708, 0
      %v1734 = vsel %vm300, %v1668, 0
      %1736 = vmatprep.subr.bf16.mxu0 0
      %1737 = vmatpush1.bf16.msra.mxu0 %v1734
      %1738 = vmatprep.subr.bf16.mxu0 0
      %1739 = vmatpush1.bf16.msra.mxu0 0
      %1740 = vmatprep.subr.bf16.mxu0 0
      %1741 = vmatpush1.bf16.msra.mxu0 0
      %1742 = vmatprep.subr.bf16.mxu0 0
      %1743 = vmatpush1.bf16.msra.mxu0 0
      %1744 = vmatprep.subr.bf16.mxu0 0
      %1745 = vmatpush1.bf16.msra.mxu0 0
      %1746 = vmatprep.subr.bf16.mxu0 0
      %1747 = vmatpush1.bf16.msra.mxu0 0
      %1748 = vmatprep.subr.bf16.mxu0 0
      %1749 = vmatpush1.bf16.msra.mxu0 0
      %1750 = vmatprep.subr.bf16.mxu0 0
      %1751 = vmatpush1.bf16.msra.mxu0 0
      %1752 = vmatprep.subr.bf16.mxu0 0
      %1753 = vmatpush1.bf16.msra.mxu0 0
      %1754 = vmatprep.subr.bf16.mxu0 0
      %1755 = vmatpush1.bf16.msra.mxu0 0
      %1756 = vmatprep.subr.bf16.mxu0 0
      %1757 = vmatpush1.bf16.msra.mxu0 0
      %1758 = vmatprep.subr.bf16.mxu0 0
      %1759 = vmatpush1.bf16.msra.mxu0 0
      %1760 = vmatprep.subr.bf16.mxu0 0
      %1761 = vmatpush1.bf16.msra.mxu0 0
      %1762 = vmatprep.subr.bf16.mxu0 0
      %1763 = vmatpush1.bf16.msra.mxu0 0
      %1764 = vmatprep.subr.bf16.mxu0 0
      %1765 = vmatpush1.bf16.msra.mxu0 0
      %1766 = vmatprep.subr.bf16.mxu0 0
      %1767 = vmatpush1.bf16.msra.mxu0 0
      %1768 = vmatprep.mubr.bf16.mxu0 0
      %1769 = vmatmul.mubr.bf16.gmra.mrb[0].mxu0 %v1710
      %v1770 = vpop.f32.mrb[0].mxu0
      %v1771 = vadd.f32 0.0, %v1770
      %v1772 = vpop.f32.mrb[0].mxu0
      %v1773 = vpop.f32.mrb[0].mxu0
      %v1774 = vpop.f32.mrb[0].mxu0
      %1775 = vmatprep.mubr.bf16.mxu0 0
      %1776 = vmatmul.mubr.bf16.gmra.mrb[0].mxu0 %v1713
      %v1777 = vpop.f32.mrb[0].mxu0
      %v1778 = vadd.f32 0.0, %v1777
      %v1779 = vpop.f32.mrb[0].mxu0
      %v1780 = vpop.f32.mrb[0].mxu0
      %v1781 = vpop.f32.mrb[0].mxu0
      %1782 = vmatprep.mubr.bf16.mxu0 0
      %1783 = vmatmul.mubr.bf16.gmra.mrb[0].mxu0 %v1716
      %v1784 = vpop.f32.mrb[0].mxu0
      %v1785 = vadd.f32 0.0, %v1784
      %v1786 = vpop.f32.mrb[0].mxu0
      %v1787 = vpop.f32.mrb[0].mxu0
      %v1788 = vpop.f32.mrb[0].mxu0
      %1789 = vmatprep.mubr.bf16.mxu0 0
      %1790 = vmatmul.mubr.bf16.gmra.mrb[0].mxu0 %v1719
      %v1791 = vpop.f32.mrb[0].mxu0
      %v1792 = vadd.f32 0.0, %v1791
      %v1793 = vpop.f32.mrb[0].mxu0
      %v1794 = vpop.f32.mrb[0].mxu0
      %v1795 = vpop.f32.mrb[0].mxu0
      %1796 = vmatprep.mubr.bf16.mxu0 0
      %1797 = vmatmul.mubr.bf16.gmra.mrb[0].mxu0 %v1722
      %v1798 = vpop.f32.mrb[0].mxu0
      %v1799 = vadd.f32 0.0, %v1798
      %v1800 = vpop.f32.mrb[0].mxu0
      %v1801 = vpop.f32.mrb[0].mxu0
      %v1802 = vpop.f32.mrb[0].mxu0
      %1803 = vmatprep.mubr.bf16.mxu0 0
      %1804 = vmatmul.mubr.bf16.gmra.mrb[0].mxu0 %v1725
      %v1805 = vpop.f32.mrb[0].mxu0
      %v1806 = vadd.f32 0.0, %v1805
      %v1807 = vpop.f32.mrb[0].mxu0
      %v1808 = vpop.f32.mrb[0].mxu0
      %v1809 = vpop.f32.mrb[0].mxu0
      %1810 = vmatprep.mubr.bf16.mxu0 0
      %1811 = vmatmul.mubr.bf16.gmra.mrb[0].mxu0 %v1728
      %v1812 = vpop.f32.mrb[0].mxu0
      %v1813 = vadd.f32 0.0, %v1812
      %v1814 = vpop.f32.mrb[0].mxu0
      %v1815 = vpop.f32.mrb[0].mxu0
      %v1816 = vpop.f32.mrb[0].mxu0
      %1817 = vmatprep.mubr.bf16.mxu0 0
      %1818 = vmatmul.mubr.bf16.gmra.mrb[0].mxu0 %v1731
      %v1819 = vpop.f32.mrb[0].mxu0
      %v1820 = vadd.f32 0.0, %v1819
      %v1821 = vpop.f32.mrb[0].mxu0
      %v1822 = vpop.f32.mrb[0].mxu0
      %v1823 = vpop.f32.mrb[0].mxu0
      %1824 = vdwg.mxu0
      %v1825 = vadd.f32 %v1642, %v1771
      %v1826 = vadd.f32 %v1643, %v1778
      %v1827 = vadd.f32 %v1644, %v1785
      %v1828 = vadd.f32 %v1645, %v1792
      %v1829 = vadd.f32 %v1646, %v1799
      %v1830 = vadd.f32 %v1647, %v1806
      %v1831 = vadd.f32 %v1648, %v1813
      %v1832 = vadd.f32 %v1649, %v1820
      %s1833 = scalar_lea.vmem %s192, 120
      %v1834 = vld [vmem:[%s1833] sm:$0xf]
      %v1835 = vld [vmem:[%s1833 + $0x4] sm:$0xf]
      %v1836 = vld [vmem:[%s1833 + $0xc] sm:$0xf]
      %v1837 = vld [vmem:[%s1833 + $0x10] sm:$0xf]
      %v1838 = vld [vmem:[%s1833 + $0x18] sm:$0xf]
      %v1839 = vld [vmem:[%s1833 + $0x1c] sm:$0xf]
      %v1840 = vld [vmem:[%s1833 + $0x24] sm:$0xf]
      %v1841 = vld [vmem:[%s1833 + $0x28] sm:$0xf]
      %v1842 = vld [vmem:[%s1833 + $0x30] sm:$0xf]
      %v1843 = vld [vmem:[%s1833 + $0x34] sm:$0xf]
      %v1844 = vld [vmem:[%s1833 + $0x3c] sm:$0xf]
      %v1845 = vld [vmem:[%s1833 + $0x40] sm:$0xf]
      %v1846 = vld [vmem:[%s1833 + $0x48] sm:$0xf]
      %v1847 = vld [vmem:[%s1833 + $0x4c] sm:$0xf]
      %v1848 = vld [vmem:[%s1833 + $0x54] sm:$0xf]
      %v1849 = vld [vmem:[%s1833 + $0x58] sm:$0xf]
      %s1850 = scalar_lea.vmem %s1, 14
      %v1851 = vld [vmem:[%s1850] sm:$0x3]
      %v1868 = vunpack.c.l.b16 %v1834
      %v1869 = vunpack.c.l.b16 %v1835
      %v1870 = vunpack.c.l.b16 %v1836
      %v1871 = vunpack.c.l.b16 %v1837
      %v1872 = vunpack.c.l.b16 %v1838
      %v1873 = vunpack.c.l.b16 %v1839
      %v1874 = vunpack.c.l.b16 %v1840
      %v1875 = vunpack.c.l.b16 %v1841
      %v1876 = vunpack.c.l.b16 %v1842
      %v1877 = vunpack.c.l.b16 %v1843
      %v1878 = vunpack.c.l.b16 %v1844
      %v1879 = vunpack.c.l.b16 %v1845
      %v1880 = vunpack.c.l.b16 %v1846
      %v1881 = vunpack.c.l.b16 %v1847
      %v1882 = vunpack.c.l.b16 %v1848
      %v1883 = vunpack.c.l.b16 %v1849
      %v1884 = vpack.c.b16 %v1869, %v1868
      %v1885 = vpack.c.b16 %v1871, %v1870
      %v1886 = vpack.c.b16 %v1873, %v1872
      %v1887 = vpack.c.b16 %v1875, %v1874
      %v1888 = vpack.c.b16 %v1877, %v1876
      %v1889 = vpack.c.b16 %v1879, %v1878
      %v1890 = vpack.c.b16 %v1881, %v1880
      %v1891 = vpack.c.b16 %v1883, %v1882
      %v1893 = vsel %vm275, %v1884, 0
      %v1896 = vsel %vm275, %v1885, 0
      %v1899 = vsel %vm275, %v1886, 0
      %v1902 = vsel %vm275, %v1887, 0
      %v1905 = vsel %vm275, %v1888, 0
      %v1908 = vsel %vm275, %v1889, 0
      %v1911 = vsel %vm275, %v1890, 0
      %v1914 = vsel %vm275, %v1891, 0
      %v1917 = vsel %vm300, %v1851, 0
      %1919 = vmatprep.subr.bf16.mxu0 0
      %1920 = vmatpush1.bf16.msra.mxu0 %v1917
      %1921 = vmatprep.subr.bf16.mxu0 0
      %1922 = vmatpush1.bf16.msra.mxu0 0
      %1923 = vmatprep.subr.bf16.mxu0 0
      %1924 = vmatpush1.bf16.msra.mxu0 0
      %1925 = vmatprep.subr.bf16.mxu0 0
      %1926 = vmatpush1.bf16.msra.mxu0 0
      %1927 = vmatprep.subr.bf16.mxu0 0
      %1928 = vmatpush1.bf16.msra.mxu0 0
      %1929 = vmatprep.subr.bf16.mxu0 0
      %1930 = vmatpush1.bf16.msra.mxu0 0
      %1931 = vmatprep.subr.bf16.mxu0 0
      %1932 = vmatpush1.bf16.msra.mxu0 0
      %1933 = vmatprep.subr.bf16.mxu0 0
      %1934 = vmatpush1.bf16.msra.mxu0 0
      %1935 = vmatprep.subr.bf16.mxu0 0
      %1936 = vmatpush1.bf16.msra.mxu0 0
      %1937 = vmatprep.subr.bf16.mxu0 0
      %1938 = vmatpush1.bf16.msra.mxu0 0
      %1939 = vmatprep.subr.bf16.mxu0 0
      %1940 = vmatpush1.bf16.msra.mxu0 0
      %1941 = vmatprep.subr.bf16.mxu0 0
      %1942 = vmatpush1.bf16.msra.mxu0 0
      %1943 = vmatprep.subr.bf16.mxu0 0
      %1944 = vmatpush1.bf16.msra.mxu0 0
      %1945 = vmatprep.subr.bf16.mxu0 0
      %1946 = vmatpush1.bf16.msra.mxu0 0
      %1947 = vmatprep.subr.bf16.mxu0 0
      %1948 = vmatpush1.bf16.msra.mxu0 0
      %1949 = vmatprep.subr.bf16.mxu0 0
      %1950 = vmatpush1.bf16.msra.mxu0 0
      %1951 = vmatprep.mubr.bf16.mxu0 0
      %1952 = vmatmul.mubr.bf16.gmra.mrb[0].mxu0 %v1893
      %v1953 = vpop.f32.mrb[0].mxu0
      %v1954 = vadd.f32 0.0, %v1953
      %v1955 = vpop.f32.mrb[0].mxu0
      %v1956 = vpop.f32.mrb[0].mxu0
      %v1957 = vpop.f32.mrb[0].mxu0
      %1958 = vmatprep.mubr.bf16.mxu0 0
      %1959 = vmatmul.mubr.bf16.gmra.mrb[0].mxu0 %v1896
      %v1960 = vpop.f32.mrb[0].mxu0
      %v1961 = vadd.f32 0.0, %v1960
      %v1962 = vpop.f32.mrb[0].mxu0
      %v1963 = vpop.f32.mrb[0].mxu0
      %v1964 = vpop.f32.mrb[0].mxu0
      %1965 = vmatprep.mubr.bf16.mxu0 0
      %1966 = vmatmul.mubr.bf16.gmra.mrb[0].mxu0 %v1899
      %v1967 = vpop.f32.mrb[0].mxu0
      %v1968 = vadd.f32 0.0, %v1967
      %v1969 = vpop.f32.mrb[0].mxu0
      %v1970 = vpop.f32.mrb[0].mxu0
      %v1971 = vpop.f32.mrb[0].mxu0
      %1972 = vmatprep.mubr.bf16.mxu0 0
      %1973 = vmatmul.mubr.bf16.gmra.mrb[0].mxu0 %v1902
      %v1974 = vpop.f32.mrb[0].mxu0
      %v1975 = vadd.f32 0.0, %v1974
      %v1976 = vpop.f32.mrb[0].mxu0
      %v1977 = vpop.f32.mrb[0].mxu0
      %v1978 = vpop.f32.mrb[0].mxu0
      %1979 = vmatprep.mubr.bf16.mxu0 0
      %1980 = vmatmul.mubr.bf16.gmra.mrb[0].mxu0 %v1905
      %v1981 = vpop.f32.mrb[0].mxu0
      %v1982 = vadd.f32 0.0, %v1981
      %v1983 = vpop.f32.mrb[0].mxu0
      %v1984 = vpop.f32.mrb[0].mxu0
      %v1985 = vpop.f32.mrb[0].mxu0
      %1986 = vmatprep.mubr.bf16.mxu0 0
      %1987 = vmatmul.mubr.bf16.gmra.mrb[0].mxu0 %v1908
      %v1988 = vpop.f32.mrb[0].mxu0
      %v1989 = vadd.f32 0.0, %v1988
      %v1990 = vpop.f32.mrb[0].mxu0
      %v1991 = vpop.f32.mrb[0].mxu0
      %v1992 = vpop.f32.mrb[0].mxu0
      %1993 = vmatprep.mubr.bf16.mxu0 0
      %1994 = vmatmul.mubr.bf16.gmra.mrb[0].mxu0 %v1911
      %v1995 = vpop.f32.mrb[0].mxu0
      %v1996 = vadd.f32 0.0, %v1995
      %v1997 = vpop.f32.mrb[0].mxu0
      %v1998 = vpop.f32.mrb[0].mxu0
      %v1999 = vpop.f32.mrb[0].mxu0
      %2000 = vmatprep.mubr.bf16.mxu0 0
      %2001 = vmatmul.mubr.bf16.gmra.mrb[0].mxu0 %v1914
      %v2002 = vpop.f32.mrb[0].mxu0
      %v2003 = vadd.f32 0.0, %v2002
      %v2004 = vpop.f32.mrb[0].mxu0
      %v2005 = vpop.f32.mrb[0].mxu0
      %v2006 = vpop.f32.mrb[0].mxu0
      %2007 = vdwg.mxu0
      %v2008 = vadd.f32 %v1825, %v1954
      %v2009 = vadd.f32 %v1826, %v1961
      %v2010 = vadd.f32 %v1827, %v1968
      %v2011 = vadd.f32 %v1828, %v1975
      %v2012 = vadd.f32 %v1829, %v1982
      %v2013 = vadd.f32 %v1830, %v1989
      %v2014 = vadd.f32 %v1831, %v1996
      %v2015 = vadd.f32 %v1832, %v2003
      %v2016 = vld [vmem:[%s1650] sm:$0xf]
      %v2017 = vld [vmem:[%s1650 + $0x4] sm:$0xf]
      %v2018 = vld [vmem:[%s1650 + $0x8] sm:$0x1]
      %v2019 = vld [vmem:[%s1650 + $0xc] sm:$0xf]
      %v2020 = vld [vmem:[%s1650 + $0x10] sm:$0xf]
      %v2021 = vld [vmem:[%s1650 + $0x14] sm:$0x1]
      %v2022 = vld [vmem:[%s1650 + $0x18] sm:$0xf]
      %v2023 = vld [vmem:[%s1650 + $0x1c] sm:$0xf]
      %v2024 = vld [vmem:[%s1650 + $0x20] sm:$0x1]
      %v2025 = vld [vmem:[%s1650 + $0x24] sm:$0xf]
      %v2026 = vld [vmem:[%s1650 + $0x28] sm:$0xf]
      %v2027 = vld [vmem:[%s1650 + $0x2c] sm:$0x1]
      %v2028 = vld [vmem:[%s1650 + $0x30] sm:$0xf]
      %v2029 = vld [vmem:[%s1650 + $0x34] sm:$0xf]
      %v2030 = vld [vmem:[%s1650 + $0x38] sm:$0x1]
      %v2031 = vld [vmem:[%s1650 + $0x3c] sm:$0xf]
      %v2032 = vld [vmem:[%s1650 + $0x40] sm:$0xf]
      %v2033 = vld [vmem:[%s1650 + $0x44] sm:$0x1]
      %v2034 = vld [vmem:[%s1650 + $0x48] sm:$0xf]
      %v2035 = vld [vmem:[%s1650 + $0x4c] sm:$0xf]
      %v2036 = vld [vmem:[%s1650 + $0x50] sm:$0x1]
      %v2037 = vld [vmem:[%s1650 + $0x54] sm:$0xf]
      %v2038 = vld [vmem:[%s1650 + $0x58] sm:$0xf]
      %v2039 = vld [vmem:[%s1650 + $0x5c] sm:$0x1]
      %v2041 = vshrl.u32 %v2016, 16
      %v2043 = vrot.slane %v2041, 4
      %v2044 = vshll.u32 %v2016, 16
      %v2046 = vrot.slane %v2044, 5
      %v2047 = vor.u32 %v2043, %v2046
      %v2048 = vrot.slane %v2047, 4
      %v2050 = vshll.u32 %v2017, 16
      %v2052 = vrot.slane %v2050, 5
      %v2053 = vsel %vm575, %v2048, %v2052
      %v2054 = vshrl.u32 %v2017, 16
      %v2056 = vrot.slane %v2054, 4
      %v2057 = vor.u32 %v2056, %v2052
      %v2058 = vrot.slane %v2057, 4
      %v2060 = vshll.u32 %v2018, 16
      %v2062 = vrot.slane %v2060, 5
      %v2063 = vsel %vm575, %v2058, %v2062
      %v2065 = vshrl.u32 %v2019, 16
      %v2067 = vrot.slane %v2065, 4
      %v2068 = vshll.u32 %v2019, 16
      %v2070 = vrot.slane %v2068, 5
      %v2071 = vor.u32 %v2067, %v2070
      %v2072 = vrot.slane %v2071, 4
      %v2074 = vshll.u32 %v2020, 16
      %v2076 = vrot.slane %v2074, 5
      %v2077 = vsel %vm575, %v2072, %v2076
      %v2078 = vshrl.u32 %v2020, 16
      %v2080 = vrot.slane %v2078, 4
      %v2081 = vor.u32 %v2080, %v2076
      %v2082 = vrot.slane %v2081, 4
      %v2084 = vshll.u32 %v2021, 16
      %v2086 = vrot.slane %v2084, 5
      %v2087 = vsel %vm575, %v2082, %v2086
      %v2089 = vshrl.u32 %v2022, 16
      %v2091 = vrot.slane %v2089, 4
      %v2092 = vshll.u32 %v2022, 16
      %v2094 = vrot.slane %v2092, 5
      %v2095 = vor.u32 %v2091, %v2094
      %v2096 = vrot.slane %v2095, 4
      %v2098 = vshll.u32 %v2023, 16
      %v2100 = vrot.slane %v2098, 5
      %v2101 = vsel %vm575, %v2096, %v2100
      %v2102 = vshrl.u32 %v2023, 16
      %v2104 = vrot.slane %v2102, 4
      %v2105 = vor.u32 %v2104, %v2100
      %v2106 = vrot.slane %v2105, 4
      %v2108 = vshll.u32 %v2024, 16
      %v2110 = vrot.slane %v2108, 5
      %v2111 = vsel %vm575, %v2106, %v2110
      %v2113 = vshrl.u32 %v2025, 16
      %v2115 = vrot.slane %v2113, 4
      %v2116 = vshll.u32 %v2025, 16
      %v2118 = vrot.slane %v2116, 5
      %v2119 = vor.u32 %v2115, %v2118
      %v2120 = vrot.slane %v2119, 4
      %v2122 = vshll.u32 %v2026, 16
      %v2124 = vrot.slane %v2122, 5
      %v2125 = vsel %vm575, %v2120, %v2124
      %v2126 = vshrl.u32 %v2026, 16
      %v2128 = vrot.slane %v2126, 4
      %v2129 = vor.u32 %v2128, %v2124
      %v2130 = vrot.slane %v2129, 4
      %v2132 = vshll.u32 %v2027, 16
      %v2134 = vrot.slane %v2132, 5
      %v2135 = vsel %vm575, %v2130, %v2134
      %v2137 = vshrl.u32 %v2028, 16
      %v2139 = vrot.slane %v2137, 4
      %v2140 = vshll.u32 %v2028, 16
      %v2142 = vrot.slane %v2140, 5
      %v2143 = vor.u32 %v2139, %v2142
      %v2144 = vrot.slane %v2143, 4
      %v2146 = vshll.u32 %v2029, 16
      %v2148 = vrot.slane %v2146, 5
      %v2149 = vsel %vm575, %v2144, %v2148
      %v2150 = vshrl.u32 %v2029, 16
      %v2152 = vrot.slane %v2150, 4
      %v2153 = vor.u32 %v2152, %v2148
      %v2154 = vrot.slane %v2153, 4
      %v2156 = vshll.u32 %v2030, 16
      %v2158 = vrot.slane %v2156, 5
      %v2159 = vsel %vm575, %v2154, %v2158
      %v2161 = vshrl.u32 %v2031, 16
      %v2163 = vrot.slane %v2161, 4
      %v2164 = vshll.u32 %v2031, 16
      %v2166 = vrot.slane %v2164, 5
      %v2167 = vor.u32 %v2163, %v2166
      %v2168 = vrot.slane %v2167, 4
      %v2170 = vshll.u32 %v2032, 16
      %v2172 = vrot.slane %v2170, 5
      %v2173 = vsel %vm575, %v2168, %v2172
      %v2174 = vshrl.u32 %v2032, 16
      %v2176 = vrot.slane %v2174, 4
      %v2177 = vor.u32 %v2176, %v2172
      %v2178 = vrot.slane %v2177, 4
      %v2180 = vshll.u32 %v2033, 16
      %v2182 = vrot.slane %v2180, 5
      %v2183 = vsel %vm575, %v2178, %v2182
      %v2185 = vshrl.u32 %v2034, 16
      %v2187 = vrot.slane %v2185, 4
      %v2188 = vshll.u32 %v2034, 16
      %v2190 = vrot.slane %v2188, 5
      %v2191 = vor.u32 %v2187, %v2190
      %v2192 = vrot.slane %v2191, 4
      %v2194 = vshll.u32 %v2035, 16
      %v2196 = vrot.slane %v2194, 5
      %v2197 = vsel %vm575, %v2192, %v2196
      %v2198 = vshrl.u32 %v2035, 16
      %v2200 = vrot.slane %v2198, 4
      %v2201 = vor.u32 %v2200, %v2196
      %v2202 = vrot.slane %v2201, 4
      %v2204 = vshll.u32 %v2036, 16
      %v2206 = vrot.slane %v2204, 5
      %v2207 = vsel %vm575, %v2202, %v2206
      %v2209 = vshrl.u32 %v2037, 16
      %v2211 = vrot.slane %v2209, 4
      %v2212 = vshll.u32 %v2037, 16
      %v2214 = vrot.slane %v2212, 5
      %v2215 = vor.u32 %v2211, %v2214
      %v2216 = vrot.slane %v2215, 4
      %v2218 = vshll.u32 %v2038, 16
      %v2220 = vrot.slane %v2218, 5
      %v2221 = vsel %vm575, %v2216, %v2220
      %v2222 = vshrl.u32 %v2038, 16
      %v2224 = vrot.slane %v2222, 4
      %v2225 = vor.u32 %v2224, %v2220
      %v2226 = vrot.slane %v2225, 4
      %v2228 = vshll.u32 %v2039, 16
      %v2230 = vrot.slane %v2228, 5
      %v2231 = vsel %vm575, %v2226, %v2230
      %s2232 = scalar_lea.vmem %s1, 16
      %v2233 = vld [vmem:[%s2232] sm:$0x3]
      %v2234 = vunpack.c.l.b16 %v2053
      %v2235 = vunpack.c.l.b16 %v2063
      %v2236 = vunpack.c.l.b16 %v2077
      %v2237 = vunpack.c.l.b16 %v2087
      %v2238 = vunpack.c.l.b16 %v2101
      %v2239 = vunpack.c.l.b16 %v2111
      %v2240 = vunpack.c.l.b16 %v2125
      %v2241 = vunpack.c.l.b16 %v2135
      %v2242 = vunpack.c.l.b16 %v2149
      %v2243 = vunpack.c.l.b16 %v2159
      %v2244 = vunpack.c.l.b16 %v2173
      %v2245 = vunpack.c.l.b16 %v2183
      %v2246 = vunpack.c.l.b16 %v2197
      %v2247 = vunpack.c.l.b16 %v2207
      %v2248 = vunpack.c.l.b16 %v2221
      %v2249 = vunpack.c.l.b16 %v2231
      %v2250 = vpack.c.b16 %v2235, %v2234
      %v2251 = vpack.c.b16 %v2237, %v2236
      %v2252 = vpack.c.b16 %v2239, %v2238
      %v2253 = vpack.c.b16 %v2241, %v2240
      %v2254 = vpack.c.b16 %v2243, %v2242
      %v2255 = vpack.c.b16 %v2245, %v2244
      %v2256 = vpack.c.b16 %v2247, %v2246
      %v2257 = vpack.c.b16 %v2249, %v2248
      %v2259 = vsel %vm275, %v2250, 0
      %v2262 = vsel %vm275, %v2251, 0
      %v2265 = vsel %vm275, %v2252, 0
      %v2268 = vsel %vm275, %v2253, 0
      %v2271 = vsel %vm275, %v2254, 0
      %v2274 = vsel %vm275, %v2255, 0
      %v2277 = vsel %vm275, %v2256, 0
      %v2280 = vsel %vm275, %v2257, 0
      %v2283 = vsel %vm300, %v2233, 0
      %2285 = vmatprep.subr.bf16.mxu0 0
      %2286 = vmatpush1.bf16.msra.mxu0 %v2283
      %2287 = vmatprep.subr.bf16.mxu0 0
      %2288 = vmatpush1.bf16.msra.mxu0 0
      %2289 = vmatprep.subr.bf16.mxu0 0
      %2290 = vmatpush1.bf16.msra.mxu0 0
      %2291 = vmatprep.subr.bf16.mxu0 0
      %2292 = vmatpush1.bf16.msra.mxu0 0
      %2293 = vmatprep.subr.bf16.mxu0 0
      %2294 = vmatpush1.bf16.msra.mxu0 0
      %2295 = vmatprep.subr.bf16.mxu0 0
      %2296 = vmatpush1.bf16.msra.mxu0 0
      %2297 = vmatprep.subr.bf16.mxu0 0
      %2298 = vmatpush1.bf16.msra.mxu0 0
      %2299 = vmatprep.subr.bf16.mxu0 0
      %2300 = vmatpush1.bf16.msra.mxu0 0
      %2301 = vmatprep.subr.bf16.mxu0 0
      %2302 = vmatpush1.bf16.msra.mxu0 0
      %2303 = vmatprep.subr.bf16.mxu0 0
      %2304 = vmatpush1.bf16.msra.mxu0 0
      %2305 = vmatprep.subr.bf16.mxu0 0
      %2306 = vmatpush1.bf16.msra.mxu0 0
      %2307 = vmatprep.subr.bf16.mxu0 0
      %2308 = vmatpush1.bf16.msra.mxu0 0
      %2309 = vmatprep.subr.bf16.mxu0 0
      %2310 = vmatpush1.bf16.msra.mxu0 0
      %2311 = vmatprep.subr.bf16.mxu0 0
      %2312 = vmatpush1.bf16.msra.mxu0 0
      %2313 = vmatprep.subr.bf16.mxu0 0
      %2314 = vmatpush1.bf16.msra.mxu0 0
      %2315 = vmatprep.subr.bf16.mxu0 0
      %2316 = vmatpush1.bf16.msra.mxu0 0
      %2317 = vmatprep.mubr.bf16.mxu0 0
      %2318 = vmatmul.mubr.bf16.gmra.mrb[0].mxu0 %v2259
      %v2319 = vpop.f32.mrb[0].mxu0
      %v2320 = vadd.f32 0.0, %v2319
      %v2321 = vpop.f32.mrb[0].mxu0
      %v2322 = vpop.f32.mrb[0].mxu0
      %v2323 = vpop.f32.mrb[0].mxu0
      %2324 = vmatprep.mubr.bf16.mxu0 0
      %2325 = vmatmul.mubr.bf16.gmra.mrb[0].mxu0 %v2262
      %v2326 = vpop.f32.mrb[0].mxu0
      %v2327 = vadd.f32 0.0, %v2326
      %v2328 = vpop.f32.mrb[0].mxu0
      %v2329 = vpop.f32.mrb[0].mxu0
      %v2330 = vpop.f32.mrb[0].mxu0
      %2331 = vmatprep.mubr.bf16.mxu0 0
      %2332 = vmatmul.mubr.bf16.gmra.mrb[0].mxu0 %v2265
      %v2333 = vpop.f32.mrb[0].mxu0
      %v2334 = vadd.f32 0.0, %v2333
      %v2335 = vpop.f32.mrb[0].mxu0
      %v2336 = vpop.f32.mrb[0].mxu0
      %v2337 = vpop.f32.mrb[0].mxu0
      %2338 = vmatprep.mubr.bf16.mxu0 0
      %2339 = vmatmul.mubr.bf16.gmra.mrb[0].mxu0 %v2268
      %v2340 = vpop.f32.mrb[0].mxu0
      %v2341 = vadd.f32 0.0, %v2340
      %v2342 = vpop.f32.mrb[0].mxu0
      %v2343 = vpop.f32.mrb[0].mxu0
      %v2344 = vpop.f32.mrb[0].mxu0
      %2345 = vmatprep.mubr.bf16.mxu0 0
      %2346 = vmatmul.mubr.bf16.gmra.mrb[0].mxu0 %v2271
      %v2347 = vpop.f32.mrb[0].mxu0
      %v2348 = vadd.f32 0.0, %v2347
      %v2349 = vpop.f32.mrb[0].mxu0
      %v2350 = vpop.f32.mrb[0].mxu0
      %v2351 = vpop.f32.mrb[0].mxu0
      %2352 = vmatprep.mubr.bf16.mxu0 0
      %2353 = vmatmul.mubr.bf16.gmra.mrb[0].mxu0 %v2274
      %v2354 = vpop.f32.mrb[0].mxu0
      %v2355 = vadd.f32 0.0, %v2354
      %v2356 = vpop.f32.mrb[0].mxu0
      %v2357 = vpop.f32.mrb[0].mxu0
      %v2358 = vpop.f32.mrb[0].mxu0
      %2359 = vmatprep.mubr.bf16.mxu0 0
      %2360 = vmatmul.mubr.bf16.gmra.mrb[0].mxu0 %v2277
      %v2361 = vpop.f32.mrb[0].mxu0
      %v2362 = vadd.f32 0.0, %v2361
      %v2363 = vpop.f32.mrb[0].mxu0
      %v2364 = vpop.f32.mrb[0].mxu0
      %v2365 = vpop.f32.mrb[0].mxu0
      %2366 = vmatprep.mubr.bf16.mxu0 0
      %2367 = vmatmul.mubr.bf16.gmra.mrb[0].mxu0 %v2280
      %v2368 = vpop.f32.mrb[0].mxu0
      %v2369 = vadd.f32 0.0, %v2368
      %v2370 = vpop.f32.mrb[0].mxu0
      %v2371 = vpop.f32.mrb[0].mxu0
      %v2372 = vpop.f32.mrb[0].mxu0
      %2373 = vdwg.mxu0
      %v2374 = vadd.f32 %v2008, %v2320
      %v2375 = vadd.f32 %v2009, %v2327
      %v2376 = vadd.f32 %v2010, %v2334
      %v2377 = vadd.f32 %v2011, %v2341
      %v2378 = vadd.f32 %v2012, %v2348
      %v2379 = vadd.f32 %v2013, %v2355
      %v2380 = vadd.f32 %v2014, %v2362
      %v2381 = vadd.f32 %v2015, %v2369
      %v2382 = vld [vmem:[%s2] sm:$0x1]
      %v2384 = vlaneseq
      %v2385 = vshrl.u32 %v2384, 7
      %v2386 = vsub.s32 0, %v2385
      %v2387 = vrot.slane %v2382, %v2386
      %v2389 = vmul.f32 %v2374, %v2387
      %v2390 = vmul.f32 %v2375, %v2387
      %v2391 = vmul.f32 %v2376, %v2387
      %v2392 = vmul.f32 %v2377, %v2387
      %v2393 = vmul.f32 %v2378, %v2387
      %v2394 = vmul.f32 %v2379, %v2387
      %v2395 = vmul.f32 %v2380, %v2387
      %v2396 = vmul.f32 %v2381, %v2387
      %v2397 = vld [vmem:[%s3] sm:$0x1]
      %v2399 = vlaneseq
      %v2400 = vshrl.u32 %v2399, 7
      %v2401 = vsub.s32 0, %v2400
      %v2402 = vrot.slane %v2397, %v2401
      %v2404 = vadd.f32 %v2389, %v2402
      %v2405 = vadd.f32 %v2390, %v2402
      %v2406 = vadd.f32 %v2391, %v2402
      %v2407 = vadd.f32 %v2392, %v2402
      %v2408 = vadd.f32 %v2393, %v2402
      %v2409 = vadd.f32 %v2394, %v2402
      %v2410 = vadd.f32 %v2395, %v2402
      %v2411 = vadd.f32 %v2396, %v2402
      %v2412 = vmax.f32 %v2404, 0.0
      %v2413 = vmax.f32 %v2405, 0.0
      %v2414 = vmax.f32 %v2406, 0.0
      %v2415 = vmax.f32 %v2407, 0.0
      %v2416 = vmax.f32 %v2408, 0.0
      %v2417 = vmax.f32 %v2409, 0.0
      %v2418 = vmax.f32 %v2410, 0.0
      %v2419 = vmax.f32 %v2411, 0.0
      %v2420 = vpack.c.bf16 %v2412, %v2412
      %v2421 = vpack.c.bf16 %v2413, %v2413
      %v2422 = vpack.c.bf16 %v2414, %v2414
      %v2423 = vpack.c.bf16 %v2415, %v2415
      %v2424 = vpack.c.bf16 %v2416, %v2416
      %v2425 = vpack.c.bf16 %v2417, %v2417
      %v2426 = vpack.c.bf16 %v2418, %v2418
      %v2427 = vpack.c.bf16 %v2419, %v2419
      %vm2428 = vcmask 27648
      %2429 = vst.msk [vmem:[%s197] sm:$0xf] %vm2428, %v2420
      %2430 = vst.msk [vmem:[%s197 + $0x4] sm:$0xf] %vm2428, %v2421
      %2431 = vst.msk [vmem:[%s197 + $0x8] sm:$0xf] %vm2428, %v2422
      %2432 = vst.msk [vmem:[%s197 + $0xc] sm:$0xf] %vm2428, %v2423
      %2433 = vst.msk [vmem:[%s197 + $0x10] sm:$0xf] %vm2428, %v2424
      %2434 = vst.msk [vmem:[%s197 + $0x14] sm:$0xf] %vm2428, %v2425
      %2435 = vst.msk [vmem:[%s197 + $0x18] sm:$0xf] %vm2428, %v2426
      %2436 = vst.msk [vmem:[%s197 + $0x1c] sm:$0xf] %vm2428, %v2427
      %p2437 = scmp.lt.s32.totalorder %s15, 1
      %s2438 = scalar_select %p2437, %s15, 1
      %s2439 = smul.addr %s2438, 8
      %s2440 = smul.addr %s2439, 4
      %s2441 = scalar_lea.vmem %s4, %s2440
      // Predicated region
      $region37: #{bottleneck_forward.4} parent=35 // pred_check
        %p2442 = pneg %p122
      $region38: #{bottleneck_forward.4} parent=35 // pred_check_branch
        %2444 = sbr.rel (%p2442) target = $region40
      $region39: #{bottleneck_forward.4} parent=35 // pred_region
        _
      $region40: #{bottleneck_forward.4} parent=35 // pred_fallthru
        _
    $region36: #{bottleneck_forward.4} parent=5 // pred_fallthru
      _
    %p2445 = scmp.le.s32.totalorder 2, %s10
    // Predicated region
    $region41: #{bottleneck_forward.4} parent=5 // pred_check
      %p2446 = pneg %p2445
    $region42: #{bottleneck_forward.4} parent=5 // pred_check_branch
      %2448 = sbr.rel (%p2446) target = $region44
    $region43: #{bottleneck_forward.4} parent=5 // pred_region
      %s2449 = ssub.s32 %s10, 2
      // Predicated region
      $region45: #{bottleneck_forward.4} parent=43 // pred_check
        %p2450 = pneg %p128
      $region46: #{bottleneck_forward.4} parent=43 // pred_check_branch
        %2452 = sbr.rel (%p2450) target = $region48
      $region47: #{bottleneck_forward.4} parent=43 // pred_region
        %p2453 = scmp.lt.s32.totalorder %s16, 1
        %s2454 = scalar_select %p2453, %s16, 1
        %s2455 = smul.addr %s2454, 8
        %s2456 = smul.addr %s2455, 4
        %s2457 = scalar_lea.vmem %s4, %s2456
      $region48: #{bottleneck_forward.4} parent=43 // pred_fallthru
        _
    $region44: #{bottleneck_forward.4} parent=5 // pred_fallthru
      _
  $region6: #{bottleneck_forward.4} parent=0 // loop_footer
    %s14 = sadd.s32 1, %s10
  $region7: #{bottleneck_forward.4} parent=0 // loop_footer_branch
    %9 = sbr.rel target = $region3
  $region8: #{bottleneck_forward.4} parent=0 // loop_exit
    _

</llo_original>
